<compile_context>
chip_gen: v7x
topology: tpu7x:2x2x1
jax: 0.10.0
libtpu: 0.0.40
codegen_flags: <defaults>
</compile_context>

<pallas_src>
import functools

import jax
import jax.numpy as jnp
from jax import lax
from jax.experimental import pallas as pl
from jax.experimental.pallas import tpu as pltpu


# ----------------------------------------------------------------------------
# Fused Bottleneck kernel: one batch image per grid step.
# Refs: x (1,H,W,Cin) f32 | w1 (Cin,P) bf16 | w2 (9,P,P) bf16 | w3 (P,4P) bf16
#       sb1/sb2/sb3 (2,C) f32 (row0=scale, row1=bias) | out (1,H,W,4P) f32
#       scratch h1p (H+2,W+2,P) f32  (zero-padded h1 for the 3x3 taps)
# ----------------------------------------------------------------------------
def _bottleneck_kernel(x_ref, w1_ref, w2_ref, w3_ref, sb1_ref, sb2_ref,
                       sb3_ref, o_ref, h1p_ref):
    _, H, W, Cin = x_ref.shape
    P = w1_ref.shape[1]
    Cout = w3_ref.shape[1]

    x = x_ref[0]                                   # (H, W, Cin) f32
    x2d = x.reshape(H * W, Cin)                    # conv1 input / residual

    # ---- conv1 (1x1) + bn1 + relu ------------------------------------------
    a1 = jnp.dot(x2d.astype(jnp.bfloat16), w1_ref[...],
                 preferred_element_type=jnp.float32)            # (HW, P)
    h1 = jnp.maximum(a1 * sb1_ref[0:1, :] + sb1_ref[1:2, :], 0.0)

    # ---- conv2 (3x3, pad=1, stride=1): in-kernel im2col via padded scratch --
    h1p_ref[...] = jnp.zeros(h1p_ref.shape, h1p_ref.dtype)
    h1p_ref[pl.ds(1, H), pl.ds(1, W), :] = h1.reshape(H, W, P)

    acc = jnp.zeros((H * W, P), jnp.float32)
    for ki in range(3):                            # unrolled 9-tap accumulation
        for kj in range(3):
            tap = h1p_ref[pl.ds(ki, H), pl.ds(kj, W), :].reshape(H * W, P)
            acc = acc + jnp.dot(tap.astype(jnp.bfloat16),
                                w2_ref[ki * 3 + kj],
                                preferred_element_type=jnp.float32)
    h2 = jnp.maximum(acc * sb2_ref[0:1, :] + sb2_ref[1:2, :], 0.0)

    # ---- conv3 (1x1) + bn3 + residual + relu --------------------------------
    a3 = jnp.dot(h2.astype(jnp.bfloat16), w3_ref[...],
                 preferred_element_type=jnp.float32)            # (HW, 4P)
    y = a3 * sb3_ref[0:1, :] + sb3_ref[1:2, :] + x2d
    o_ref[0] = jnp.maximum(y, 0.0).reshape(H, W, Cout).astype(o_ref.dtype)


# ----------------------------------------------------------------------------
# BN folding (inference semantics; the module freezes BN params)
# ----------------------------------------------------------------------------
def fold_bn(gamma, beta, running_mean, running_var, eps=1e-5):
    scale = gamma / jnp.sqrt(running_var + eps)
    bias = beta - running_mean * scale
    return jnp.stack([scale, bias], axis=0).astype(jnp.float32)   # (2, C)


# ----------------------------------------------------------------------------
# Bottleneck forward (stride=1, downsample=None path of the module)
# ----------------------------------------------------------------------------
def bottleneck_forward(x_nchw, params, stride=1):
    # TODO(synk): stride != 1 and the external `downsample` Sequential are not
    # modeled here; this reproduces the stride=1 / downsample=None path.
    assert stride == 1, "fused kernel models the stride=1, downsample=None path"

    x = jnp.transpose(x_nchw, (0, 2, 3, 1)).astype(jnp.float32)   # NHWC
    n, h, w, cin = x.shape
    p = params["w1"].shape[1]
    cout = 4 * p
    assert cin == cout, "residual path requires inplanes == 4 * planes"

    w1 = params["w1"].astype(jnp.bfloat16)          # (Cin, P)
    w2 = params["w2"].astype(jnp.bfloat16)          # (9, P, P) = (ki*3+kj, Cin, Cout)
    w3 = params["w3"].astype(jnp.bfloat16)          # (P, 4P)
    sb1 = fold_bn(params["bn1_g"], params["bn1_b"], params["bn1_m"], params["bn1_v"])
    sb2 = fold_bn(params["bn2_g"], params["bn2_b"], params["bn2_m"], params["bn2_v"])
    sb3 = fold_bn(params["bn3_g"], params["bn3_b"], params["bn3_m"], params["bn3_v"])

    out = pl.pallas_call(
        _bottleneck_kernel,
        out_shape=jax.ShapeDtypeStruct((n, h, w, cout), jnp.float32),
        grid_spec=pltpu.PrefetchScalarGridSpec(
            num_scalar_prefetch=0,
            grid=(n,),
            in_specs=[
                pl.BlockSpec((1, h, w, cin), lambda i: (i, 0, 0, 0)),   # x
                pl.BlockSpec((cin, p), lambda i: (0, 0)),               # w1
                pl.BlockSpec((9, p, p), lambda i: (0, 0, 0)),           # w2
                pl.BlockSpec((p, cout), lambda i: (0, 0)),              # w3
                pl.BlockSpec((2, p), lambda i: (0, 0)),                 # bn1 scale/bias
                pl.BlockSpec((2, p), lambda i: (0, 0)),                 # bn2 scale/bias
                pl.BlockSpec((2, cout), lambda i: (0, 0)),              # bn3 scale/bias
            ],
            out_specs=pl.BlockSpec((1, h, w, cout), lambda i: (i, 0, 0, 0)),
            scratch_shapes=[pltpu.VMEM((h + 2, w + 2, p), jnp.float32)],
        ),
        compiler_params=pltpu.CompilerParams(
            dimension_semantics=("parallel",)),
    )(x, w1, w2, w3, sb1, sb2, sb3)

    return jnp.transpose(out, (0, 3, 1, 2))         # back to NCHW


# ----------------------------------------------------------------------------
# Deterministic parameter construction (shapes per nn.Module __init__)
# ----------------------------------------------------------------------------
def make_params(key, inplanes, planes):
    ks = jax.random.split(key, 8)
    # conv weights stored in matmul layout:
    #   w1: (inplanes, planes)        <- torch (planes, inplanes, 1, 1)
    #   w2: (9, planes, planes)       <- torch (planes, planes, 3, 3), (ki,kj,cin,cout)
    #   w3: (planes, 4*planes)        <- torch (4*planes, planes, 1, 1)
    w1 = 0.1 * jax.random.normal(ks[0], (inplanes, planes), jnp.float32)
    w2t = 0.1 * jax.random.normal(ks[1], (planes, planes, 3, 3), jnp.float32)  # OIHW
    w2 = jnp.transpose(w2t, (2, 3, 1, 0)).reshape(9, planes, planes)
    w3 = 0.1 * jax.random.normal(ks[2], (planes, 4 * planes), jnp.float32)

    def bn(kg, kb, c):
        g = 1.0 + 0.05 * jax.random.normal(kg, (c,), jnp.float32)
        b = 0.05 * jax.random.normal(kb, (c,), jnp.float32)
        m = 0.02 * jax.random.normal(jax.random.fold_in(kg, 7), (c,), jnp.float32)
        v = jnp.abs(1.0 + 0.05 * jax.random.normal(jax.random.fold_in(kb, 7), (c,), jnp.float32))
        return g, b, m, v

    bn1 = bn(ks[3], ks[4], planes)
    bn2 = bn(ks[5], ks[6], planes)
    bn3 = bn(ks[7], jax.random.fold_in(ks[7], 1), 4 * planes)

    return dict(
        w1=w1, w2=w2, w3=w3,
        bn1_g=bn1[0], bn1_b=bn1[1], bn1_m=bn1[2], bn1_v=bn1[3],
        bn2_g=bn2[0], bn2_b=bn2[1], bn2_m=bn2[2], bn2_v=bn2[3],
        bn3_g=bn3[0], bn3_b=bn3[1], bn3_m=bn3[2], bn3_v=bn3[3],
    )


# ----------------------------------------------------------------------------
# Pure-JAX reference (lax conv).  matmul_dtype=bfloat16 mirrors the kernel's
# bf16 matmul inputs (tight check); float32 is the exact PyTorch-equivalent
# math (loose check, differs only by the intentional bf16 quantization).
# ----------------------------------------------------------------------------
def reference_forward(x_nchw, params, stride=1, matmul_dtype=jnp.float32):
    eps = 1e-5
    x = x_nchw.astype(jnp.float32)
    planes = params["w1"].shape[1]

    def conv(h, w_oihw, strides, padding):
        return lax.conv_general_dilated(
            h.astype(matmul_dtype), w_oihw.astype(matmul_dtype),
            strides, padding, dimension_numbers=("NCHW", "OIHW", "NCHW"),
            preferred_element_type=jnp.float32)

    def bn(h, g, b, m, v):
        s = g / jnp.sqrt(v + eps)
        return h * s[None, :, None, None] + (b - m * s)[None, :, None, None]

    w1 = params["w1"].T[:, :, None, None]                                       # (P, Cin, 1, 1)
    w2 = jnp.transpose(params["w2"].reshape(3, 3, planes, planes), (3, 2, 0, 1))  # OIHW
    w3 = params["w3"].T[:, :, None, None]                                       # (4P, P, 1, 1)

    out = jax.nn.relu(bn(conv(x, w1, (1, 1), "VALID"),
                         params["bn1_g"], params["bn1_b"], params["bn1_m"], params["bn1_v"]))
    out = jax.nn.relu(bn(conv(out, w2, (stride, stride), ((1, 1), (1, 1))),
                         params["bn2_g"], params["bn2_b"], params["bn2_m"], params["bn2_v"]))
    out = bn(conv(out, w3, (1, 1), "VALID"),
             params["bn3_g"], params["bn3_b"], params["bn3_m"], params["bn3_v"])
    return jax.nn.relu(out + x)


if __name__ == "__main__":
    key = jax.random.PRNGKey(0)
    kx, kp = jax.random.split(key)

    planes = 4
    inplanes = 4 * planes          # downsample=None path requires inplanes == 4*planes
    batch, spatial = 2, 16

    x = jax.random.normal(kx, (batch, inplanes, spatial, spatial), jnp.float32)  # NCHW
    params = make_params(kp, inplanes, planes)

    fwd = jax.jit(functools.partial(bottleneck_forward, stride=1))
    out = jax.block_until_ready(fwd(x, params))
    assert out.shape == (batch, 4 * planes, spatial, spatial), out.shape

    # Tight check: reference mirrors the kernel's bf16 matmul inputs.
    ref_bf16 = reference_forward(x, params, stride=1, matmul_dtype=jnp.bfloat16)
    err_bf16 = float(jnp.max(jnp.abs(out - ref_bf16)))
    assert jnp.allclose(out, ref_bf16, atol=1e-2, rtol=1e-2), err_bf16

    # Loose check: full-f32 PyTorch-equivalent math (bf16 quantization only delta).
    ref_f32 = reference_forward(x, params, stride=1, matmul_dtype=jnp.float32)
    err_f32 = float(jnp.max(jnp.abs(out - ref_f32)))
    assert jnp.allclose(out, ref_f32, atol=1.5e-1, rtol=1.5e-1), err_f32

    print("KERNEL_OK")
</pallas_src>

<mosaic_0001>
module attributes {stable_mosaic.version = 11 : i64} {
  func.func @_bottleneck_kernel(%arg0: i32, %arg1: memref<1x16x16x16xf32, #tpu.memory_space<vmem>>, %arg2: memref<16x4xbf16, #tpu.memory_space<vmem>>, %arg3: memref<9x4x4xbf16, #tpu.memory_space<vmem>>, %arg4: memref<4x16xbf16, #tpu.memory_space<vmem>>, %arg5: memref<2x4xf32, #tpu.memory_space<vmem>>, %arg6: memref<2x4xf32, #tpu.memory_space<vmem>>, %arg7: memref<2x16xf32, #tpu.memory_space<vmem>>, %arg8: memref<1x16x16x16xf32, #tpu.memory_space<vmem>>, %arg9: memref<18x18x4xf32, #tpu.memory_space<vmem>>) attributes {dimension_semantics = [#tpu.dimension_semantics<parallel>], iteration_bounds = array<i64: 2>, scalar_prefetch = 0 : i64, scratch_operands = 1 : i64, tpu.core_type = #tpu.core_type<tc>, window_params = [{transform_indices = @transform_0, window_bounds = array<i64: 1, 16, 16, 16>}, {pipeline_mode = #tpu.pipeline_mode<synchronous>, transform_indices = @transform_1, window_bounds = array<i64: 16, 4>}, {pipeline_mode = #tpu.pipeline_mode<synchronous>, transform_indices = @transform_2, window_bounds = array<i64: 9, 4, 4>}, {pipeline_mode = #tpu.pipeline_mode<synchronous>, transform_indices = @transform_3, window_bounds = array<i64: 4, 16>}, {pipeline_mode = #tpu.pipeline_mode<synchronous>, transform_indices = @transform_4, window_bounds = array<i64: 2, 4>}, {pipeline_mode = #tpu.pipeline_mode<synchronous>, transform_indices = @transform_5, window_bounds = array<i64: 2, 4>}, {pipeline_mode = #tpu.pipeline_mode<synchronous>, transform_indices = @transform_6, window_bounds = array<i64: 2, 16>}, {transform_indices = @transform_7, window_bounds = array<i64: 1, 16, 16, 16>}]} {
    %c0 = arith.constant 0 : index
    %c0_0 = arith.constant 0 : index
    %c0_1 = arith.constant 0 : index
    %c0_2 = arith.constant 0 : index
    %0 = vector.load %arg1[%c0, %c0_0, %c0_1, %c0_2] : memref<1x16x16x16xf32, #tpu.memory_space<vmem>>, vector<1x16x16x16xf32>
    %1 = vector.shape_cast %0 : vector<1x16x16x16xf32> to vector<16x16x16xf32>
    %2 = vector.shape_cast %1 : vector<16x16x16xf32> to vector<256x16xf32>
    %3 = arith.truncf %2 : vector<256x16xf32> to vector<256x16xbf16>
    %c0_3 = arith.constant 0 : index
    %c0_4 = arith.constant 0 : index
    %4 = vector.load %arg2[%c0_3, %c0_4] : memref<16x4xbf16, #tpu.memory_space<vmem>>, vector<16x4xbf16>
    %cst = arith.constant dense<0.000000e+00> : vector<256x4xf32>
    %5 = tpu.matmul %3, %4, %cst {dimension_numbers = #tpu.dot_dimension_numbers<[1], [0], [0], [1], [0, 0, 1, 1], [], []>} : vector<256x16xbf16>, vector<16x4xbf16>, vector<256x4xf32> -> vector<256x4xf32>
    %c0_5 = arith.constant 0 : index
    %c0_6 = arith.constant 0 : index
    %6 = vector.load %arg5[%c0_5, %c0_6] : memref<2x4xf32, #tpu.memory_space<vmem>>, vector<1x4xf32>
    %7 = vector.broadcast %6 : vector<1x4xf32> to vector<256x4xf32>
    %8 = arith.mulf %5, %7 : vector<256x4xf32>
    %c1 = arith.constant 1 : index
    %c0_7 = arith.constant 0 : index
    %9 = vector.load %arg5[%c1, %c0_7] : memref<2x4xf32, #tpu.memory_space<vmem>>, vector<1x4xf32>
    %10 = vector.broadcast %9 : vector<1x4xf32> to vector<256x4xf32>
    %11 = arith.addf %8, %10 : vector<256x4xf32>
    %cst_8 = arith.constant 0.000000e+00 : f32
    %12 = vector.broadcast %cst_8 : f32 to vector<256x4xf32>
    %13 = arith.maximumf %11, %12 : vector<256x4xf32>
    %cst_9 = arith.constant 0.000000e+00 : f32
    %14 = vector.broadcast %cst_9 : f32 to vector<18x18x4xf32>
    %c0_10 = arith.constant 0 : index
    %c0_11 = arith.constant 0 : index
    %c0_12 = arith.constant 0 : index
    %15 = vector.load %arg9[%c0_10, %c0_11, %c0_12] : memref<18x18x4xf32, #tpu.memory_space<vmem>>, vector<18x18x4xf32>
    tpu.vector_store %arg9[%c0_10, %c0_11, %c0_12], %14 {strides = array<i32>} : memref<18x18x4xf32, #tpu.memory_space<vmem>>, vector<18x18x4xf32>,
    %16 = vector.shape_cast %13 : vector<256x4xf32> to vector<16x16x4xf32>
    %c1_13 = arith.constant 1 : index
    %c1_14 = arith.constant 1 : index
    %c0_15 = arith.constant 0 : index
    %17 = vector.load %arg9[%c1_13, %c1_14, %c0_15] : memref<18x18x4xf32, #tpu.memory_space<vmem>>, vector<16x16x4xf32>
    tpu.vector_store %arg9[%c1_13, %c1_14, %c0_15], %16 {strides = array<i32>} : memref<18x18x4xf32, #tpu.memory_space<vmem>>, vector<16x16x4xf32>,
    %cst_16 = arith.constant 0.000000e+00 : f32
    %18 = vector.broadcast %cst_16 : f32 to vector<256x4xf32>
    %c0_17 = arith.constant 0 : index
    %c0_18 = arith.constant 0 : index
    %c0_19 = arith.constant 0 : index
    %19 = vector.load %arg9[%c0_17, %c0_18, %c0_19] : memref<18x18x4xf32, #tpu.memory_space<vmem>>, vector<16x16x4xf32>
    %20 = vector.shape_cast %19 : vector<16x16x4xf32> to vector<256x4xf32>
    %21 = arith.truncf %20 : vector<256x4xf32> to vector<256x4xbf16>
    %c0_20 = arith.constant 0 : index
    %c0_21 = arith.constant 0 : index
    %c0_22 = arith.constant 0 : index
    %22 = vector.load %arg3[%c0_20, %c0_21, %c0_22] : memref<9x4x4xbf16, #tpu.memory_space<vmem>>, vector<1x4x4xbf16>
    %23 = vector.shape_cast %22 : vector<1x4x4xbf16> to vector<4x4xbf16>
    %cst_23 = arith.constant dense<0.000000e+00> : vector<256x4xf32>
    %24 = tpu.matmul %21, %23, %cst_23 {dimension_numbers = #tpu.dot_dimension_numbers<[1], [0], [0], [1], [0, 0, 1, 1], [], []>} : vector<256x4xbf16>, vector<4x4xbf16>, vector<256x4xf32> -> vector<256x4xf32>
    %25 = arith.addf %18, %24 : vector<256x4xf32>
    %c0_24 = arith.constant 0 : index
    %c1_25 = arith.constant 1 : index
    %c0_26 = arith.constant 0 : index
    %26 = vector.load %arg9[%c0_24, %c1_25, %c0_26] : memref<18x18x4xf32, #tpu.memory_space<vmem>>, vector<16x16x4xf32>
    %27 = vector.shape_cast %26 : vector<16x16x4xf32> to vector<256x4xf32>
    %28 = arith.truncf %27 : vector<256x4xf32> to vector<256x4xbf16>
    %c1_27 = arith.constant 1 : index
    %c0_28 = arith.constant 0 : index
    %c0_29 = arith.constant 0 : index
    %29 = vector.load %arg3[%c1_27, %c0_28, %c0_29] : memref<9x4x4xbf16, #tpu.memory_space<vmem>>, vector<1x4x4xbf16>
    %30 = vector.shape_cast %29 : vector<1x4x4xbf16> to vector<4x4xbf16>
    %cst_30 = arith.constant dense<0.000000e+00> : vector<256x4xf32>
    %31 = tpu.matmul %28, %30, %cst_30 {dimension_numbers = #tpu.dot_dimension_numbers<[1], [0], [0], [1], [0, 0, 1, 1], [], []>} : vector<256x4xbf16>, vector<4x4xbf16>, vector<256x4xf32> -> vector<256x4xf32>
    %32 = arith.addf %25, %31 : vector<256x4xf32>
    %c0_31 = arith.constant 0 : index
    %c2 = arith.constant 2 : index
    %c0_32 = arith.constant 0 : index
    %33 = vector.load %arg9[%c0_31, %c2, %c0_32] : memref<18x18x4xf32, #tpu.memory_space<vmem>>, vector<16x16x4xf32>
    %34 = vector.shape_cast %33 : vector<16x16x4xf32> to vector<256x4xf32>
    %35 = arith.truncf %34 : vector<256x4xf32> to vector<256x4xbf16>
    %c2_33 = arith.constant 2 : index
    %c0_34 = arith.constant 0 : index
    %c0_35 = arith.constant 0 : index
    %36 = vector.load %arg3[%c2_33, %c0_34, %c0_35] : memref<9x4x4xbf16, #tpu.memory_space<vmem>>, vector<1x4x4xbf16>
    %37 = vector.shape_cast %36 : vector<1x4x4xbf16> to vector<4x4xbf16>
    %cst_36 = arith.constant dense<0.000000e+00> : vector<256x4xf32>
    %38 = tpu.matmul %35, %37, %cst_36 {dimension_numbers = #tpu.dot_dimension_numbers<[1], [0], [0], [1], [0, 0, 1, 1], [], []>} : vector<256x4xbf16>, vector<4x4xbf16>, vector<256x4xf32> -> vector<256x4xf32>
    %39 = arith.addf %32, %38 : vector<256x4xf32>
    %c1_37 = arith.constant 1 : index
    %c0_38 = arith.constant 0 : index
    %c0_39 = arith.constant 0 : index
    %40 = vector.load %arg9[%c1_37, %c0_38, %c0_39] : memref<18x18x4xf32, #tpu.memory_space<vmem>>, vector<16x16x4xf32>
    %41 = vector.shape_cast %40 : vector<16x16x4xf32> to vector<256x4xf32>
    %42 = arith.truncf %41 : vector<256x4xf32> to vector<256x4xbf16>
    %c3 = arith.constant 3 : index
    %c0_40 = arith.constant 0 : index
    %c0_41 = arith.constant 0 : index
    %43 = vector.load %arg3[%c3, %c0_40, %c0_41] : memref<9x4x4xbf16, #tpu.memory_space<vmem>>, vector<1x4x4xbf16>
    %44 = vector.shape_cast %43 : vector<1x4x4xbf16> to vector<4x4xbf16>
    %cst_42 = arith.constant dense<0.000000e+00> : vector<256x4xf32>
    %45 = tpu.matmul %42, %44, %cst_42 {dimension_numbers = #tpu.dot_dimension_numbers<[1], [0], [0], [1], [0, 0, 1, 1], [], []>} : vector<256x4xbf16>, vector<4x4xbf16>, vector<256x4xf32> -> vector<256x4xf32>
    %46 = arith.addf %39, %45 : vector<256x4xf32>
    %c1_43 = arith.constant 1 : index
    %c1_44 = arith.constant 1 : index
    %c0_45 = arith.constant 0 : index
    %47 = vector.load %arg9[%c1_43, %c1_44, %c0_45] : memref<18x18x4xf32, #tpu.memory_space<vmem>>, vector<16x16x4xf32>
    %48 = vector.shape_cast %47 : vector<16x16x4xf32> to vector<256x4xf32>
    %49 = arith.truncf %48 : vector<256x4xf32> to vector<256x4xbf16>
    %c4 = arith.constant 4 : index
    %c0_46 = arith.constant 0 : index
    %c0_47 = arith.constant 0 : index
    %50 = vector.load %arg3[%c4, %c0_46, %c0_47] : memref<9x4x4xbf16, #tpu.memory_space<vmem>>, vector<1x4x4xbf16>
    %51 = vector.shape_cast %50 : vector<1x4x4xbf16> to vector<4x4xbf16>
    %cst_48 = arith.constant dense<0.000000e+00> : vector<256x4xf32>
    %52 = tpu.matmul %49, %51, %cst_48 {dimension_numbers = #tpu.dot_dimension_numbers<[1], [0], [0], [1], [0, 0, 1, 1], [], []>} : vector<256x4xbf16>, vector<4x4xbf16>, vector<256x4xf32> -> vector<256x4xf32>
    %53 = arith.addf %46, %52 : vector<256x4xf32>
    %c1_49 = arith.constant 1 : index
    %c2_50 = arith.constant 2 : index
    %c0_51 = arith.constant 0 : index
    %54 = vector.load %arg9[%c1_49, %c2_50, %c0_51] : memref<18x18x4xf32, #tpu.memory_space<vmem>>, vector<16x16x4xf32>
    %55 = vector.shape_cast %54 : vector<16x16x4xf32> to vector<256x4xf32>
    %56 = arith.truncf %55 : vector<256x4xf32> to vector<256x4xbf16>
    %c5 = arith.constant 5 : index
    %c0_52 = arith.constant 0 : index
    %c0_53 = arith.constant 0 : index
    %57 = vector.load %arg3[%c5, %c0_52, %c0_53] : memref<9x4x4xbf16, #tpu.memory_space<vmem>>, vector<1x4x4xbf16>
    %58 = vector.shape_cast %57 : vector<1x4x4xbf16> to vector<4x4xbf16>
    %cst_54 = arith.constant dense<0.000000e+00> : vector<256x4xf32>
    %59 = tpu.matmul %56, %58, %cst_54 {dimension_numbers = #tpu.dot_dimension_numbers<[1], [0], [0], [1], [0, 0, 1, 1], [], []>} : vector<256x4xbf16>, vector<4x4xbf16>, vector<256x4xf32> -> vector<256x4xf32>
    %60 = arith.addf %53, %59 : vector<256x4xf32>
    %c2_55 = arith.constant 2 : index
    %c0_56 = arith.constant 0 : index
    %c0_57 = arith.constant 0 : index
    %61 = vector.load %arg9[%c2_55, %c0_56, %c0_57] : memref<18x18x4xf32, #tpu.memory_space<vmem>>, vector<16x16x4xf32>
    %62 = vector.shape_cast %61 : vector<16x16x4xf32> to vector<256x4xf32>
    %63 = arith.truncf %62 : vector<256x4xf32> to vector<256x4xbf16>
    %c6 = arith.constant 6 : index
    %c0_58 = arith.constant 0 : index
    %c0_59 = arith.constant 0 : index
    %64 = vector.load %arg3[%c6, %c0_58, %c0_59] : memref<9x4x4xbf16, #tpu.memory_space<vmem>>, vector<1x4x4xbf16>
    %65 = vector.shape_cast %64 : vector<1x4x4xbf16> to vector<4x4xbf16>
    %cst_60 = arith.constant dense<0.000000e+00> : vector<256x4xf32>
    %66 = tpu.matmul %63, %65, %cst_60 {dimension_numbers = #tpu.dot_dimension_numbers<[1], [0], [0], [1], [0, 0, 1, 1], [], []>} : vector<256x4xbf16>, vector<4x4xbf16>, vector<256x4xf32> -> vector<256x4xf32>
    %67 = arith.addf %60, %66 : vector<256x4xf32>
    %c2_61 = arith.constant 2 : index
    %c1_62 = arith.constant 1 : index
    %c0_63 = arith.constant 0 : index
    %68 = vector.load %arg9[%c2_61, %c1_62, %c0_63] : memref<18x18x4xf32, #tpu.memory_space<vmem>>, vector<16x16x4xf32>
    %69 = vector.shape_cast %68 : vector<16x16x4xf32> to vector<256x4xf32>
    %70 = arith.truncf %69 : vector<256x4xf32> to vector<256x4xbf16>
    %c7 = arith.constant 7 : index
    %c0_64 = arith.constant 0 : index
    %c0_65 = arith.constant 0 : index
    %71 = vector.load %arg3[%c7, %c0_64, %c0_65] : memref<9x4x4xbf16, #tpu.memory_space<vmem>>, vector<1x4x4xbf16>
    %72 = vector.shape_cast %71 : vector<1x4x4xbf16> to vector<4x4xbf16>
    %cst_66 = arith.constant dense<0.000000e+00> : vector<256x4xf32>
    %73 = tpu.matmul %70, %72, %cst_66 {dimension_numbers = #tpu.dot_dimension_numbers<[1], [0], [0], [1], [0, 0, 1, 1], [], []>} : vector<256x4xbf16>, vector<4x4xbf16>, vector<256x4xf32> -> vector<256x4xf32>
    %74 = arith.addf %67, %73 : vector<256x4xf32>
    %c2_67 = arith.constant 2 : index
    %c2_68 = arith.constant 2 : index
    %c0_69 = arith.constant 0 : index
    %75 = vector.load %arg9[%c2_67, %c2_68, %c0_69] : memref<18x18x4xf32, #tpu.memory_space<vmem>>, vector<16x16x4xf32>
    %76 = vector.shape_cast %75 : vector<16x16x4xf32> to vector<256x4xf32>
    %77 = arith.truncf %76 : vector<256x4xf32> to vector<256x4xbf16>
    %c8 = arith.constant 8 : index
    %c0_70 = arith.constant 0 : index
    %c0_71 = arith.constant 0 : index
    %78 = vector.load %arg3[%c8, %c0_70, %c0_71] : memref<9x4x4xbf16, #tpu.memory_space<vmem>>, vector<1x4x4xbf16>
    %79 = vector.shape_cast %78 : vector<1x4x4xbf16> to vector<4x4xbf16>
    %cst_72 = arith.constant dense<0.000000e+00> : vector<256x4xf32>
    %80 = tpu.matmul %77, %79, %cst_72 {dimension_numbers = #tpu.dot_dimension_numbers<[1], [0], [0], [1], [0, 0, 1, 1], [], []>} : vector<256x4xbf16>, vector<4x4xbf16>, vector<256x4xf32> -> vector<256x4xf32>
    %81 = arith.addf %74, %80 : vector<256x4xf32>
    %c0_73 = arith.constant 0 : index
    %c0_74 = arith.constant 0 : index
    %82 = vector.load %arg6[%c0_73, %c0_74] : memref<2x4xf32, #tpu.memory_space<vmem>>, vector<1x4xf32>
    %83 = vector.broadcast %82 : vector<1x4xf32> to vector<256x4xf32>
    %84 = arith.mulf %81, %83 : vector<256x4xf32>
    %c1_75 = arith.constant 1 : index
    %c0_76 = arith.constant 0 : index
    %85 = vector.load %arg6[%c1_75, %c0_76] : memref<2x4xf32, #tpu.memory_space<vmem>>, vector<1x4xf32>
    %86 = vector.broadcast %85 : vector<1x4xf32> to vector<256x4xf32>
    %87 = arith.addf %84, %86 : vector<256x4xf32>
    %cst_77 = arith.constant 0.000000e+00 : f32
    %88 = vector.broadcast %cst_77 : f32 to vector<256x4xf32>
    %89 = arith.maximumf %87, %88 : vector<256x4xf32>
    %90 = arith.truncf %89 : vector<256x4xf32> to vector<256x4xbf16>
    %c0_78 = arith.constant 0 : index
    %c0_79 = arith.constant 0 : index
    %91 = vector.load %arg4[%c0_78, %c0_79] : memref<4x16xbf16, #tpu.memory_space<vmem>>, vector<4x16xbf16>
    %cst_80 = arith.constant dense<0.000000e+00> : vector<256x16xf32>
    %92 = tpu.matmul %90, %91, %cst_80 {dimension_numbers = #tpu.dot_dimension_numbers<[1], [0], [0], [1], [0, 0, 1, 1], [], []>} : vector<256x4xbf16>, vector<4x16xbf16>, vector<256x16xf32> -> vector<256x16xf32>
    %c0_81 = arith.constant 0 : index
    %c0_82 = arith.constant 0 : index
    %93 = vector.load %arg7[%c0_81, %c0_82] : memref<2x16xf32, #tpu.memory_space<vmem>>, vector<1x16xf32>
    %94 = vector.broadcast %93 : vector<1x16xf32> to vector<256x16xf32>
    %95 = arith.mulf %92, %94 : vector<256x16xf32>
    %c1_83 = arith.constant 1 : index
    %c0_84 = arith.constant 0 : index
    %96 = vector.load %arg7[%c1_83, %c0_84] : memref<2x16xf32, #tpu.memory_space<vmem>>, vector<1x16xf32>
    %97 = vector.broadcast %96 : vector<1x16xf32> to vector<256x16xf32>
    %98 = arith.addf %95, %97 : vector<256x16xf32>
    %99 = arith.addf %98, %2 : vector<256x16xf32>
    %cst_85 = arith.constant 0.000000e+00 : f32
    %100 = vector.broadcast %cst_85 : f32 to vector<256x16xf32>
    %101 = arith.maximumf %99, %100 : vector<256x16xf32>
    %102 = vector.shape_cast %101 : vector<256x16xf32> to vector<16x16x16xf32>
    %c0_86 = arith.constant 0 : index
    %c0_87 = arith.constant 0 : index
    %c0_88 = arith.constant 0 : index
    %c0_89 = arith.constant 0 : index
    %103 = vector.load %arg8[%c0_86, %c0_87, %c0_88, %c0_89] : memref<1x16x16x16xf32, #tpu.memory_space<vmem>>, vector<1x16x16x16xf32>
    %104 = vector.shape_cast %103 : vector<1x16x16x16xf32> to vector<16x16x16xf32>
    %105 = vector.shape_cast %102 : vector<16x16x16xf32> to vector<1x16x16x16xf32>
    tpu.vector_store %arg8[%c0_86, %c0_87, %c0_88, %c0_89], %105 {strides = array<i32>} : memref<1x16x16x16xf32, #tpu.memory_space<vmem>>, vector<1x16x16x16xf32>,
    return
  }
  func.func @transform_0(%arg0: i32) -> (i32, i32, i32, i32) {
    %c0_i32 = arith.constant 0 : i32
    %c0_i32_0 = arith.constant 0 : i32
    %c0_i32_1 = arith.constant 0 : i32
    %c0_i32_2 = arith.constant 0 : i32
    return %arg0, %c0_i32, %c0_i32_0, %c0_i32_1 : i32, i32, i32, i32
  }
  func.func @transform_1(%arg0: i32) -> (i32, i32) {
    %c0_i32 = arith.constant 0 : i32
    %c0_i32_0 = arith.constant 0 : i32
    %c0_i32_1 = arith.constant 0 : i32
    return %c0_i32, %c0_i32_0 : i32, i32
  }
  func.func @transform_2(%arg0: i32) -> (i32, i32, i32) {
    %c0_i32 = arith.constant 0 : i32
    %c0_i32_0 = arith.constant 0 : i32
    %c0_i32_1 = arith.constant 0 : i32
    %c0_i32_2 = arith.constant 0 : i32
    return %c0_i32, %c0_i32_0, %c0_i32_1 : i32, i32, i32
  }
  func.func @transform_3(%arg0: i32) -> (i32, i32) {
    %c0_i32 = arith.constant 0 : i32
    %c0_i32_0 = arith.constant 0 : i32
    %c0_i32_1 = arith.constant 0 : i32
    return %c0_i32, %c0_i32_0 : i32, i32
  }
  func.func @transform_4(%arg0: i32) -> (i32, i32) {
    %c0_i32 = arith.constant 0 : i32
    %c0_i32_0 = arith.constant 0 : i32
    %c0_i32_1 = arith.constant 0 : i32
    return %c0_i32, %c0_i32_0 : i32, i32
  }
  func.func @transform_5(%arg0: i32) -> (i32, i32) {
    %c0_i32 = arith.constant 0 : i32
    %c0_i32_0 = arith.constant 0 : i32
    %c0_i32_1 = arith.constant 0 : i32
    return %c0_i32, %c0_i32_0 : i32, i32
  }
  func.func @transform_6(%arg0: i32) -> (i32, i32) {
    %c0_i32 = arith.constant 0 : i32
    %c0_i32_0 = arith.constant 0 : i32
    %c0_i32_1 = arith.constant 0 : i32
    return %c0_i32, %c0_i32_0 : i32, i32
  }
  func.func @transform_7(%arg0: i32) -> (i32, i32, i32, i32) {
    %c0_i32 = arith.constant 0 : i32
    %c0_i32_0 = arith.constant 0 : i32
    %c0_i32_1 = arith.constant 0 : i32
    %c0_i32_2 = arith.constant 0 : i32
    return %arg0, %c0_i32, %c0_i32_0, %c0_i32_1 : i32, i32, i32, i32
  }
}

</mosaic_0001>

<llo_original>
// kernel: bottleneck_forward.1
$region0: #{bottleneck_forward.1}
  #allocation0 [shape = 'u32[]', space=smem, size = 0x4, offset = 0x4, fixed_abs, tag = 'smem constant byte address 0x4 - core index']
  #allocation1 [shape = 'u32[144,128]{1,0:T(1,128)}', space=vmem, size = 0x12000, scoped, tag = 'internal scratch']
  #allocation2 [shape = 'f32[18,18,4]{2,1,0:T(8,128)}', space=vmem, size = 0x36000, scoped, tag = 'scratch operand']
  %s0 = inlined_call_operand.vmem [shape: f32[2,16,16,16], index: 0, kind: input, shape index: {}]
  %s1 = inlined_call_operand.vmem [shape: bf16[16,4], index: 1, kind: input, shape index: {}]
  %s2 = inlined_call_operand.vmem [shape: bf16[9,4,4], index: 2, kind: input, shape index: {}]
  %s3 = inlined_call_operand.vmem [shape: bf16[4,16], index: 3, kind: input, shape index: {}]
  %s4 = inlined_call_operand.vmem [shape: f32[2,4], index: 4, kind: input, shape index: {}]
  %s5 = inlined_call_operand.vmem [shape: f32[2,4], index: 5, kind: input, shape index: {}]
  %s6 = inlined_call_operand.vmem [shape: f32[2,16], index: 6, kind: input, shape index: {}]
  %s7 = inlined_call_operand.vmem [shape: f32[2,16,16,16], index: 7, kind: output, shape index: {}]
  %s8 = sld [smem:[#allocation0]]
  $region61: #{bottleneck_forward.1} parent=0
    _
  %s10 = ssub.s32 1, %s8
  %s11 = scalar_select 0, %s10, %s8
  loop: start=0, step=1, limit=4
  $region2: #{bottleneck_forward.1} parent=0 // loop_pre_header
    _
  $region3: #{bottleneck_forward.1} parent=0 // loop_header
    %s13 = sphi 0, %s17
    %p14 = scmp.ge.s32.totalorder %s13, 4
    %s23 = sphi 0, %s25
    %s26 = sphi 0, %s23
    %s27 = sphi 0, %s26
    %s43 = sphi 0, %s27
    %s47 = sphi 0, %s47
    %s49 = sphi 0, %s47
    %s50 = sphi 0, %s49
    %s64 = sphi 0, %s50
    %s68 = sphi 0, %s68
    %s70 = sphi 0, %s68
    %s71 = sphi 0, %s70
    %s85 = sphi 0, %s71
    %s89 = sphi 0, %s89
    %s91 = sphi 0, %s89
    %s92 = sphi 0, %s91
    %s106 = sphi 0, %s92
    %s110 = sphi 0, %s110
    %s112 = sphi 0, %s110
    %s113 = sphi 0, %s112
    %s127 = sphi 0, %s113
    %s131 = sphi 0, %s131
    %s133 = sphi 0, %s131
    %s134 = sphi 0, %s133
    %s148 = sphi 0, %s134
    %s152 = sphi 0, %s152
    %s154 = sphi 0, %s152
    %s155 = sphi 0, %s154
    %s169 = sphi 0, %s155
    %s175 = sphi 0, %s177
    %s178 = sphi 0, %s175
    %s179 = sphi 0, %s178
    %s195 = sphi 0, %s179
  $region4: #{bottleneck_forward.1} parent=0 // loop_header_branch
    %16 = sbr.rel (%p14) target = $region8
  $region5: #{bottleneck_forward.1} parent=0 // loop_body
    %s18 = ssub.s32 %s13, 1
    %s19 = ssub.s32 %s13, 2
    %s20 = sadd.s32 %s13, 1
    %s21 = ssub.s32 %s13, %s20
    %p22 = scmp.eq.s32.totalorder %s21, 0
    %s24 = sadd.s32 %s23, 1
    %s25 = scalar_select %p22, %s23, %s24
    %p28 = pneg %p22
    %p29 = scmp.eq.s32.totalorder %s13, 1
    %p30 = por %p28, %p29
    %p31 = scmp.ne.s32.totalorder %s23, %s26
    %p32 = scmp.eq.s32.totalorder %s13, 0
    %p33 = por %p31, %p32
    %p34 = scmp.ne.s32.totalorder %s23, %s26
    %p35 = scmp.eq.s32.totalorder %s18, 1
    %p36 = por %p34, %p35
    %p37 = scmp.ne.s32.totalorder %s26, %s27
    %p38 = scmp.eq.s32.totalorder %s18, 0
    %p39 = por %p37, %p38
    %p40 = scmp.ne.s32.totalorder %s26, %s27
    %p41 = scmp.eq.s32.totalorder %s19, 1
    %p42 = por %p40, %p41
    %p44 = scmp.ne.s32.totalorder %s27, %s43
    %p45 = scmp.eq.s32.totalorder %s19, 0
    %p46 = por %p44, %p45
    %s48 = sadd.s32 %s47, 1
    %p51 = scmp.eq.s32.totalorder %s13, 1
    %p52 = scmp.ne.s32.totalorder %s47, %s49
    %p53 = scmp.eq.s32.totalorder %s13, 0
    %p54 = por %p52, %p53
    %p55 = scmp.ne.s32.totalorder %s47, %s49
    %p56 = scmp.eq.s32.totalorder %s18, 1
    %p57 = por %p55, %p56
    %p58 = scmp.ne.s32.totalorder %s49, %s50
    %p59 = scmp.eq.s32.totalorder %s18, 0
    %p60 = por %p58, %p59
    %p61 = scmp.ne.s32.totalorder %s49, %s50
    %p62 = scmp.eq.s32.totalorder %s19, 1
    %p63 = por %p61, %p62
    %p65 = scmp.ne.s32.totalorder %s50, %s64
    %p66 = scmp.eq.s32.totalorder %s19, 0
    %p67 = por %p65, %p66
    %s69 = sadd.s32 %s68, 1
    %p72 = scmp.eq.s32.totalorder %s13, 1
    %p73 = scmp.ne.s32.totalorder %s68, %s70
    %p74 = scmp.eq.s32.totalorder %s13, 0
    %p75 = por %p73, %p74
    %p76 = scmp.ne.s32.totalorder %s68, %s70
    %p77 = scmp.eq.s32.totalorder %s18, 1
    %p78 = por %p76, %p77
    %p79 = scmp.ne.s32.totalorder %s70, %s71
    %p80 = scmp.eq.s32.totalorder %s18, 0
    %p81 = por %p79, %p80
    %p82 = scmp.ne.s32.totalorder %s70, %s71
    %p83 = scmp.eq.s32.totalorder %s19, 1
    %p84 = por %p82, %p83
    %p86 = scmp.ne.s32.totalorder %s71, %s85
    %p87 = scmp.eq.s32.totalorder %s19, 0
    %p88 = por %p86, %p87
    %s90 = sadd.s32 %s89, 1
    %p93 = scmp.eq.s32.totalorder %s13, 1
    %p94 = scmp.ne.s32.totalorder %s89, %s91
    %p95 = scmp.eq.s32.totalorder %s13, 0
    %p96 = por %p94, %p95
    %p97 = scmp.ne.s32.totalorder %s89, %s91
    %p98 = scmp.eq.s32.totalorder %s18, 1
    %p99 = por %p97, %p98
    %p100 = scmp.ne.s32.totalorder %s91, %s92
    %p101 = scmp.eq.s32.totalorder %s18, 0
    %p102 = por %p100, %p101
    %p103 = scmp.ne.s32.totalorder %s91, %s92
    %p104 = scmp.eq.s32.totalorder %s19, 1
    %p105 = por %p103, %p104
    %p107 = scmp.ne.s32.totalorder %s92, %s106
    %p108 = scmp.eq.s32.totalorder %s19, 0
    %p109 = por %p107, %p108
    %s111 = sadd.s32 %s110, 1
    %p114 = scmp.eq.s32.totalorder %s13, 1
    %p115 = scmp.ne.s32.totalorder %s110, %s112
    %p116 = scmp.eq.s32.totalorder %s13, 0
    %p117 = por %p115, %p116
    %p118 = scmp.ne.s32.totalorder %s110, %s112
    %p119 = scmp.eq.s32.totalorder %s18, 1
    %p120 = por %p118, %p119
    %p121 = scmp.ne.s32.totalorder %s112, %s113
    %p122 = scmp.eq.s32.totalorder %s18, 0
    %p123 = por %p121, %p122
    %p124 = scmp.ne.s32.totalorder %s112, %s113
    %p125 = scmp.eq.s32.totalorder %s19, 1
    %p126 = por %p124, %p125
    %p128 = scmp.ne.s32.totalorder %s113, %s127
    %p129 = scmp.eq.s32.totalorder %s19, 0
    %p130 = por %p128, %p129
    %s132 = sadd.s32 %s131, 1
    %p135 = scmp.eq.s32.totalorder %s13, 1
    %p136 = scmp.ne.s32.totalorder %s131, %s133
    %p137 = scmp.eq.s32.totalorder %s13, 0
    %p138 = por %p136, %p137
    %p139 = scmp.ne.s32.totalorder %s131, %s133
    %p140 = scmp.eq.s32.totalorder %s18, 1
    %p141 = por %p139, %p140
    %p142 = scmp.ne.s32.totalorder %s133, %s134
    %p143 = scmp.eq.s32.totalorder %s18, 0
    %p144 = por %p142, %p143
    %p145 = scmp.ne.s32.totalorder %s133, %s134
    %p146 = scmp.eq.s32.totalorder %s19, 1
    %p147 = por %p145, %p146
    %p149 = scmp.ne.s32.totalorder %s134, %s148
    %p150 = scmp.eq.s32.totalorder %s19, 0
    %p151 = por %p149, %p150
    %s153 = sadd.s32 %s152, 1
    %p156 = scmp.eq.s32.totalorder %s13, 1
    %p157 = scmp.ne.s32.totalorder %s152, %s154
    %p158 = scmp.eq.s32.totalorder %s13, 0
    %p159 = por %p157, %p158
    %p160 = scmp.ne.s32.totalorder %s152, %s154
    %p161 = scmp.eq.s32.totalorder %s18, 1
    %p162 = por %p160, %p161
    %p163 = scmp.ne.s32.totalorder %s154, %s155
    %p164 = scmp.eq.s32.totalorder %s18, 0
    %p165 = por %p163, %p164
    %p166 = scmp.ne.s32.totalorder %s154, %s155
    %p167 = scmp.eq.s32.totalorder %s19, 1
    %p168 = por %p166, %p167
    %p170 = scmp.ne.s32.totalorder %s155, %s169
    %p171 = scmp.eq.s32.totalorder %s19, 0
    %p172 = por %p170, %p171
    %s173 = ssub.s32 %s13, %s20
    %p174 = scmp.eq.s32.totalorder %s173, 0
    %s176 = sadd.s32 %s175, 1
    %s177 = scalar_select %p174, %s175, %s176
    %p180 = pneg %p174
    %p181 = scmp.eq.s32.totalorder %s13, 1
    %p182 = por %p180, %p181
    %p183 = scmp.ne.s32.totalorder %s175, %s178
    %p184 = scmp.eq.s32.totalorder %s13, 0
    %p185 = por %p183, %p184
    %p186 = scmp.ne.s32.totalorder %s175, %s178
    %p187 = scmp.eq.s32.totalorder %s18, 1
    %p188 = por %p186, %p187
    %p189 = scmp.ne.s32.totalorder %s178, %s179
    %p190 = scmp.eq.s32.totalorder %s18, 0
    %p191 = por %p189, %p190
    %p192 = scmp.ne.s32.totalorder %s178, %s179
    %p193 = scmp.eq.s32.totalorder %s19, 1
    %p194 = por %p192, %p193
    %p196 = scmp.ne.s32.totalorder %s179, %s195
    %p197 = scmp.eq.s32.totalorder %s19, 0
    %p198 = por %p196, %p197
    %p199 = scmp.le.s32.totalorder 1, %s13
    %p200 = scmp.lt.s32.totalorder %s13, 3
    %p201 = pnand %p199, %p200
    %p202 = pneg %p201
    // Predicated region
    $region9: #{bottleneck_forward.1} parent=5 // pred_check
      _
    $region10: #{bottleneck_forward.1} parent=5 // pred_check_branch
      %204 = sbr.rel (%p201) target = $region12
    $region11: #{bottleneck_forward.1} parent=5 // pred_region
      %s205 = ssub.s32 %s13, 1
      // Predicated region
      $region13: #{bottleneck_forward.1} parent=11 // pred_check
        %p206 = pneg %p60
      $region14: #{bottleneck_forward.1} parent=11 // pred_check_branch
        %208 = sbr.rel (%p206) target = $region16
      $region15: #{bottleneck_forward.1} parent=11 // pred_region
        _
      $region16: #{bottleneck_forward.1} parent=11 // pred_fallthru
        _
      // Predicated region
      $region17: #{bottleneck_forward.1} parent=11 // pred_check
        %p209 = pneg %p81
      $region18: #{bottleneck_forward.1} parent=11 // pred_check_branch
        %211 = sbr.rel (%p209) target = $region20
      $region19: #{bottleneck_forward.1} parent=11 // pred_region
        _
      $region20: #{bottleneck_forward.1} parent=11 // pred_fallthru
        _
      // Predicated region
      $region21: #{bottleneck_forward.1} parent=11 // pred_check
        %p212 = pneg %p102
      $region22: #{bottleneck_forward.1} parent=11 // pred_check_branch
        %214 = sbr.rel (%p212) target = $region24
      $region23: #{bottleneck_forward.1} parent=11 // pred_region
        _
      $region24: #{bottleneck_forward.1} parent=11 // pred_fallthru
        _
      // Predicated region
      $region25: #{bottleneck_forward.1} parent=11 // pred_check
        %p215 = pneg %p123
      $region26: #{bottleneck_forward.1} parent=11 // pred_check_branch
        %217 = sbr.rel (%p215) target = $region28
      $region27: #{bottleneck_forward.1} parent=11 // pred_region
        _
      $region28: #{bottleneck_forward.1} parent=11 // pred_fallthru
        _
      // Predicated region
      $region29: #{bottleneck_forward.1} parent=11 // pred_check
        %p218 = pneg %p144
      $region30: #{bottleneck_forward.1} parent=11 // pred_check_branch
        %220 = sbr.rel (%p218) target = $region32
      $region31: #{bottleneck_forward.1} parent=11 // pred_region
        _
      $region32: #{bottleneck_forward.1} parent=11 // pred_fallthru
        _
      // Predicated region
      $region33: #{bottleneck_forward.1} parent=11 // pred_check
        %p221 = pneg %p165
      $region34: #{bottleneck_forward.1} parent=11 // pred_check_branch
        %223 = sbr.rel (%p221) target = $region36
      $region35: #{bottleneck_forward.1} parent=11 // pred_region
        _
      $region36: #{bottleneck_forward.1} parent=11 // pred_fallthru
        _
    $region12: #{bottleneck_forward.1} parent=5 // pred_fallthru
      _
    %p224 = scmp.lt.s32.totalorder %s13, 2
    // Predicated region
    $region37: #{bottleneck_forward.1} parent=5 // pred_check
      %p225 = pneg %p224
    $region38: #{bottleneck_forward.1} parent=5 // pred_check_branch
      %227 = sbr.rel (%p225) target = $region40
    $region39: #{bottleneck_forward.1} parent=5 // pred_region
      // Predicated region
      $region41: #{bottleneck_forward.1} parent=39 // pred_check
        %p228 = pneg %p33
      $region42: #{bottleneck_forward.1} parent=39 // pred_check_branch
        %230 = sbr.rel (%p228) target = $region44
      $region43: #{bottleneck_forward.1} parent=39 // pred_region
        %p231 = scmp.lt.s32.totalorder %s13, 1
        %s232 = scalar_select %p231, %s13, 1
        %s233 = smul.addr %s232, 32
        %s234 = smul.addr %s233, 8
        %s235 = scalar_lea.vmem %s0, %s234
      $region44: #{bottleneck_forward.1} parent=39 // pred_fallthru
        _
    $region40: #{bottleneck_forward.1} parent=5 // pred_fallthru
      _
    %p236 = scmp.le.s32.totalorder 1, %s13
    %p237 = scmp.lt.s32.totalorder %s13, 3
    %p238 = pnand %p236, %p237
    %p239 = pneg %p238
    // Predicated region
    $region45: #{bottleneck_forward.1} parent=5 // pred_check
      _
    $region46: #{bottleneck_forward.1} parent=5 // pred_check_branch
      %241 = sbr.rel (%p238) target = $region48
    $region47: #{bottleneck_forward.1} parent=5 // pred_region
      %s242 = ssub.s32 %s13, 1
      %p243 = scmp.lt.s32.totalorder %s18, 1
      %s244 = scalar_select %p243, %s18, 1
      %s245 = smul.addr %s244, 32
      %s246 = smul.addr %s245, 8
      %s247 = scalar_lea.vmem %s0, %s246
      %p248 = pneg %p39
      %p249 = pneg %p36
      %p250 = pneg %p60
      %p251 = pneg %p57
      %p252 = pneg %p81
      %p253 = pneg %p78
      %p254 = pneg %p102
      %p255 = pneg %p99
      %p256 = pneg %p123
      %p257 = pneg %p120
      %p258 = pneg %p144
      %p259 = pneg %p141
      %p260 = pneg %p165
      %p261 = pneg %p162
      %p262 = pneg %p191
      %p263 = pneg %p188
      %p264 = scmp.lt.s32.totalorder %s18, 1
      %s265 = scalar_select %p264, %s18, 1
      %s266 = smul.addr %s265, 32
      %s267 = smul.addr %s266, 8
      %s268 = scalar_lea.vmem %s7, %s267
      %p269 = scmp.lt.s32.totalorder %s18, 1
      %s270 = scalar_select %p269, %s18, 1
      %s271 = smul.addr %s270, 32
      %s272 = smul.addr %s271, 8
      %s273 = scalar_lea.vmem %s0, %s272
      %p274 = scmp.lt.s32.totalorder %s18, 1
      %s275 = scalar_select %p274, %s18, 1
      %s276 = smul.addr %s275, 32
      %s277 = smul.addr %s276, 8
      %s278 = scalar_lea.vmem %s7, %s277
      %v280 = vld [vmem:[%s273] sm:$0xff]
      %v281 = vld [vmem:[%s273 + $0x8] sm:$0xff]
      %v282 = vld [vmem:[%s273 + $0x10] sm:$0xff]
      %v283 = vld [vmem:[%s273 + $0x18] sm:$0xff]
      %v284 = vld [vmem:[%s273 + $0x20] sm:$0xff]
      %v285 = vld [vmem:[%s273 + $0x28] sm:$0xff]
      %v286 = vld [vmem:[%s273 + $0x30] sm:$0xff]
      %v287 = vld [vmem:[%s273 + $0x38] sm:$0xff]
      %v288 = vld [vmem:[%s273 + $0x40] sm:$0xff]
      %v289 = vld [vmem:[%s273 + $0x48] sm:$0xff]
      %v290 = vld [vmem:[%s273 + $0x50] sm:$0xff]
      %v291 = vld [vmem:[%s273 + $0x58] sm:$0xff]
      %v292 = vld [vmem:[%s273 + $0x60] sm:$0xff]
      %v293 = vld [vmem:[%s273 + $0x68] sm:$0xff]
      %v294 = vld [vmem:[%s273 + $0x70] sm:$0xff]
      %v295 = vld [vmem:[%s273 + $0x78] sm:$0xff]
      %v296 = vld [vmem:[%s273 + $0x80] sm:$0xff]
      %v297 = vld [vmem:[%s273 + $0x88] sm:$0xff]
      %v298 = vld [vmem:[%s273 + $0x90] sm:$0xff]
      %v299 = vld [vmem:[%s273 + $0x98] sm:$0xff]
      %v300 = vld [vmem:[%s273 + $0xa0] sm:$0xff]
      %v301 = vld [vmem:[%s273 + $0xa8] sm:$0xff]
      %v302 = vld [vmem:[%s273 + $0xb0] sm:$0xff]
      %v303 = vld [vmem:[%s273 + $0xb8] sm:$0xff]
      %v304 = vld [vmem:[%s273 + $0xc0] sm:$0xff]
      %v305 = vld [vmem:[%s273 + $0xc8] sm:$0xff]
      %v306 = vld [vmem:[%s273 + $0xd0] sm:$0xff]
      %v307 = vld [vmem:[%s273 + $0xd8] sm:$0xff]
      %v308 = vld [vmem:[%s273 + $0xe0] sm:$0xff]
      %v309 = vld [vmem:[%s273 + $0xe8] sm:$0xff]
      %v310 = vld [vmem:[%s273 + $0xf0] sm:$0xff]
      %v311 = vld [vmem:[%s273 + $0xf8] sm:$0xff]
      %v312 = vpack.c.bf16 %v281, %v280
      %v313 = vpack.c.bf16 %v283, %v282
      %v314 = vpack.c.bf16 %v285, %v284
      %v315 = vpack.c.bf16 %v287, %v286
      %v316 = vpack.c.bf16 %v289, %v288
      %v317 = vpack.c.bf16 %v291, %v290
      %v318 = vpack.c.bf16 %v293, %v292
      %v319 = vpack.c.bf16 %v295, %v294
      %v320 = vpack.c.bf16 %v297, %v296
      %v321 = vpack.c.bf16 %v299, %v298
      %v322 = vpack.c.bf16 %v301, %v300
      %v323 = vpack.c.bf16 %v303, %v302
      %v324 = vpack.c.bf16 %v305, %v304
      %v325 = vpack.c.bf16 %v307, %v306
      %v326 = vpack.c.bf16 %v309, %v308
      %v327 = vpack.c.bf16 %v311, %v310
      %v328 = vld [vmem:[%s1] sm:$0xf]
      %v329 = vld [vmem:[%s1 + $0x4] sm:$0xf]
      %v332 = vunpack.c.l.b16 %v328
      %v333 = vunpack.c.l.b16 %v329
      %v334 = vpack.c.b16 %v333, %v332
      %vm336 = vcmask 130048
      %v338 = vsel %vm336, %v312, 0
      %v341 = vsel %vm336, %v313, 0
      %v344 = vsel %vm336, %v314, 0
      %v347 = vsel %vm336, %v315, 0
      %v350 = vsel %vm336, %v316, 0
      %v353 = vsel %vm336, %v317, 0
      %v356 = vsel %vm336, %v318, 0
      %v359 = vsel %vm336, %v319, 0
      %v362 = vsel %vm336, %v320, 0
      %v365 = vsel %vm336, %v321, 0
      %v368 = vsel %vm336, %v322, 0
      %v371 = vsel %vm336, %v323, 0
      %v374 = vsel %vm336, %v324, 0
      %v377 = vsel %vm336, %v325, 0
      %v380 = vsel %vm336, %v326, 0
      %v383 = vsel %vm336, %v327, 0
      %385 = vmatprep.subr.bf16.mxu0 0
      %386 = vmatpush1.bf16.msra.mxu0 %v334
      %387 = vmatprep.subr.bf16.mxu0 0
      %388 = vmatpush1.bf16.msra.mxu0 0
      %389 = vmatprep.subr.bf16.mxu0 0
      %390 = vmatpush1.bf16.msra.mxu0 0
      %391 = vmatprep.subr.bf16.mxu0 0
      %392 = vmatpush1.bf16.msra.mxu0 0
      %393 = vmatprep.subr.bf16.mxu0 0
      %394 = vmatpush1.bf16.msra.mxu0 0
      %395 = vmatprep.subr.bf16.mxu0 0
      %396 = vmatpush1.bf16.msra.mxu0 0
      %397 = vmatprep.subr.bf16.mxu0 0
      %398 = vmatpush1.bf16.msra.mxu0 0
      %399 = vmatprep.subr.bf16.mxu0 0
      %400 = vmatpush1.bf16.msra.mxu0 0
      %401 = vmatprep.subr.bf16.mxu0 0
      %402 = vmatpush1.bf16.msra.mxu0 0
      %403 = vmatprep.subr.bf16.mxu0 0
      %404 = vmatpush1.bf16.msra.mxu0 0
      %405 = vmatprep.subr.bf16.mxu0 0
      %406 = vmatpush1.bf16.msra.mxu0 0
      %407 = vmatprep.subr.bf16.mxu0 0
      %408 = vmatpush1.bf16.msra.mxu0 0
      %409 = vmatprep.subr.bf16.mxu0 0
      %410 = vmatpush1.bf16.msra.mxu0 0
      %411 = vmatprep.subr.bf16.mxu0 0
      %412 = vmatpush1.bf16.msra.mxu0 0
      %413 = vmatprep.subr.bf16.mxu0 0
      %414 = vmatpush1.bf16.msra.mxu0 0
      %415 = vmatprep.subr.bf16.mxu0 0
      %416 = vmatpush1.bf16.msra.mxu0 0
      %417 = vmatprep.mubr.bf16.mxu0 0
      %418 = vmatmul.mubr.bf16.gmra.mrb[0].mxu0 %v338
      %v419 = vpop.f32.mrb[0].mxu0
      %v420 = vadd.f32 0.0, %v419
      %v421 = vpop.f32.mrb[0].mxu0
      %v422 = vpop.f32.mrb[0].mxu0
      %v423 = vadd.f32 0.0, %v422
      %v424 = vpop.f32.mrb[0].mxu0
      %425 = vmatprep.mubr.bf16.mxu0 0
      %426 = vmatmul.mubr.bf16.gmra.mrb[0].mxu0 %v341
      %v427 = vpop.f32.mrb[0].mxu0
      %v428 = vadd.f32 0.0, %v427
      %v429 = vpop.f32.mrb[0].mxu0
      %v430 = vpop.f32.mrb[0].mxu0
      %v431 = vadd.f32 0.0, %v430
      %v432 = vpop.f32.mrb[0].mxu0
      %433 = vmatprep.mubr.bf16.mxu0 0
      %434 = vmatmul.mubr.bf16.gmra.mrb[0].mxu0 %v344
      %v435 = vpop.f32.mrb[0].mxu0
      %v436 = vadd.f32 0.0, %v435
      %v437 = vpop.f32.mrb[0].mxu0
      %v438 = vpop.f32.mrb[0].mxu0
      %v439 = vadd.f32 0.0, %v438
      %v440 = vpop.f32.mrb[0].mxu0
      %441 = vmatprep.mubr.bf16.mxu0 0
      %442 = vmatmul.mubr.bf16.gmra.mrb[0].mxu0 %v347
      %v443 = vpop.f32.mrb[0].mxu0
      %v444 = vadd.f32 0.0, %v443
      %v445 = vpop.f32.mrb[0].mxu0
      %v446 = vpop.f32.mrb[0].mxu0
      %v447 = vadd.f32 0.0, %v446
      %v448 = vpop.f32.mrb[0].mxu0
      %449 = vmatprep.mubr.bf16.mxu0 0
      %450 = vmatmul.mubr.bf16.gmra.mrb[0].mxu0 %v350
      %v451 = vpop.f32.mrb[0].mxu0
      %v452 = vadd.f32 0.0, %v451
      %v453 = vpop.f32.mrb[0].mxu0
      %v454 = vpop.f32.mrb[0].mxu0
      %v455 = vadd.f32 0.0, %v454
      %v456 = vpop.f32.mrb[0].mxu0
      %457 = vmatprep.mubr.bf16.mxu0 0
      %458 = vmatmul.mubr.bf16.gmra.mrb[0].mxu0 %v353
      %v459 = vpop.f32.mrb[0].mxu0
      %v460 = vadd.f32 0.0, %v459
      %v461 = vpop.f32.mrb[0].mxu0
      %v462 = vpop.f32.mrb[0].mxu0
      %v463 = vadd.f32 0.0, %v462
      %v464 = vpop.f32.mrb[0].mxu0
      %465 = vmatprep.mubr.bf16.mxu0 0
      %466 = vmatmul.mubr.bf16.gmra.mrb[0].mxu0 %v356
      %v467 = vpop.f32.mrb[0].mxu0
      %v468 = vadd.f32 0.0, %v467
      %v469 = vpop.f32.mrb[0].mxu0
      %v470 = vpop.f32.mrb[0].mxu0
      %v471 = vadd.f32 0.0, %v470
      %v472 = vpop.f32.mrb[0].mxu0
      %473 = vmatprep.mubr.bf16.mxu0 0
      %474 = vmatmul.mubr.bf16.gmra.mrb[0].mxu0 %v359
      %v475 = vpop.f32.mrb[0].mxu0
      %v476 = vadd.f32 0.0, %v475
      %v477 = vpop.f32.mrb[0].mxu0
      %v478 = vpop.f32.mrb[0].mxu0
      %v479 = vadd.f32 0.0, %v478
      %v480 = vpop.f32.mrb[0].mxu0
      %481 = vmatprep.mubr.bf16.mxu0 0
      %482 = vmatmul.mubr.bf16.gmra.mrb[0].mxu0 %v362
      %v483 = vpop.f32.mrb[0].mxu0
      %v484 = vadd.f32 0.0, %v483
      %v485 = vpop.f32.mrb[0].mxu0
      %v486 = vpop.f32.mrb[0].mxu0
      %v487 = vadd.f32 0.0, %v486
      %v488 = vpop.f32.mrb[0].mxu0
      %489 = vmatprep.mubr.bf16.mxu0 0
      %490 = vmatmul.mubr.bf16.gmra.mrb[0].mxu0 %v365
      %v491 = vpop.f32.mrb[0].mxu0
      %v492 = vadd.f32 0.0, %v491
      %v493 = vpop.f32.mrb[0].mxu0
      %v494 = vpop.f32.mrb[0].mxu0
      %v495 = vadd.f32 0.0, %v494
      %v496 = vpop.f32.mrb[0].mxu0
      %497 = vmatprep.mubr.bf16.mxu0 0
      %498 = vmatmul.mubr.bf16.gmra.mrb[0].mxu0 %v368
      %v499 = vpop.f32.mrb[0].mxu0
      %v500 = vadd.f32 0.0, %v499
      %v501 = vpop.f32.mrb[0].mxu0
      %v502 = vpop.f32.mrb[0].mxu0
      %v503 = vadd.f32 0.0, %v502
      %v504 = vpop.f32.mrb[0].mxu0
      %505 = vmatprep.mubr.bf16.mxu0 0
      %506 = vmatmul.mubr.bf16.gmra.mrb[0].mxu0 %v371
      %v507 = vpop.f32.mrb[0].mxu0
      %v508 = vadd.f32 0.0, %v507
      %v509 = vpop.f32.mrb[0].mxu0
      %v510 = vpop.f32.mrb[0].mxu0
      %v511 = vadd.f32 0.0, %v510
      %v512 = vpop.f32.mrb[0].mxu0
      %513 = vmatprep.mubr.bf16.mxu0 0
      %514 = vmatmul.mubr.bf16.gmra.mrb[0].mxu0 %v374
      %v515 = vpop.f32.mrb[0].mxu0
      %v516 = vadd.f32 0.0, %v515
      %v517 = vpop.f32.mrb[0].mxu0
      %v518 = vpop.f32.mrb[0].mxu0
      %v519 = vadd.f32 0.0, %v518
      %v520 = vpop.f32.mrb[0].mxu0
      %521 = vmatprep.mubr.bf16.mxu0 0
      %522 = vmatmul.mubr.bf16.gmra.mrb[0].mxu0 %v377
      %v523 = vpop.f32.mrb[0].mxu0
      %v524 = vadd.f32 0.0, %v523
      %v525 = vpop.f32.mrb[0].mxu0
      %v526 = vpop.f32.mrb[0].mxu0
      %v527 = vadd.f32 0.0, %v526
      %v528 = vpop.f32.mrb[0].mxu0
      %529 = vmatprep.mubr.bf16.mxu0 0
      %530 = vmatmul.mubr.bf16.gmra.mrb[0].mxu0 %v380
      %v531 = vpop.f32.mrb[0].mxu0
      %v532 = vadd.f32 0.0, %v531
      %v533 = vpop.f32.mrb[0].mxu0
      %v534 = vpop.f32.mrb[0].mxu0
      %v535 = vadd.f32 0.0, %v534
      %v536 = vpop.f32.mrb[0].mxu0
      %537 = vmatprep.mubr.bf16.mxu0 0
      %538 = vmatmul.mubr.bf16.gmra.mrb[0].mxu0 %v383
      %v539 = vpop.f32.mrb[0].mxu0
      %v540 = vadd.f32 0.0, %v539
      %v541 = vpop.f32.mrb[0].mxu0
      %v542 = vpop.f32.mrb[0].mxu0
      %v543 = vadd.f32 0.0, %v542
      %v544 = vpop.f32.mrb[0].mxu0
      %545 = vdwg.mxu0
      %v546 = vld [vmem:[%s4] sm:$0x1]
      %v547 = vlaneseq
      %v548 = vshrl.u32 %v547, 7
      %v549 = vsub.s32 0, %v548
      %v550 = vrot.slane %v546, %v549
      %v551 = vmul.f32 %v420, %v550
      %v552 = vmul.f32 %v423, %v550
      %v553 = vmul.f32 %v428, %v550
      %v554 = vmul.f32 %v431, %v550
      %v555 = vmul.f32 %v436, %v550
      %v556 = vmul.f32 %v439, %v550
      %v557 = vmul.f32 %v444, %v550
      %v558 = vmul.f32 %v447, %v550
      %v559 = vmul.f32 %v452, %v550
      %v560 = vmul.f32 %v455, %v550
      %v561 = vmul.f32 %v460, %v550
      %v562 = vmul.f32 %v463, %v550
      %v563 = vmul.f32 %v468, %v550
      %v564 = vmul.f32 %v471, %v550
      %v565 = vmul.f32 %v476, %v550
      %v566 = vmul.f32 %v479, %v550
      %v567 = vmul.f32 %v484, %v550
      %v568 = vmul.f32 %v487, %v550
      %v569 = vmul.f32 %v492, %v550
      %v570 = vmul.f32 %v495, %v550
      %v571 = vmul.f32 %v500, %v550
      %v572 = vmul.f32 %v503, %v550
      %v573 = vmul.f32 %v508, %v550
      %v574 = vmul.f32 %v511, %v550
      %v575 = vmul.f32 %v516, %v550
      %v576 = vmul.f32 %v519, %v550
      %v577 = vmul.f32 %v524, %v550
      %v578 = vmul.f32 %v527, %v550
      %v579 = vmul.f32 %v532, %v550
      %v580 = vmul.f32 %v535, %v550
      %v581 = vmul.f32 %v540, %v550
      %v582 = vmul.f32 %v543, %v550
      %v583 = vld [vmem:[%s4 + $0x1] sm:$0x1]
      %v584 = vlaneseq
      %v585 = vshrl.u32 %v584, 7
      %v586 = vsub.s32 0, %v585
      %v587 = vrot.slane %v583, %v586
      %v588 = vadd.f32 %v551, %v587
      %v589 = vadd.f32 %v552, %v587
      %v590 = vadd.f32 %v553, %v587
      %v591 = vadd.f32 %v554, %v587
      %v592 = vadd.f32 %v555, %v587
      %v593 = vadd.f32 %v556, %v587
      %v594 = vadd.f32 %v557, %v587
      %v595 = vadd.f32 %v558, %v587
      %v596 = vadd.f32 %v559, %v587
      %v597 = vadd.f32 %v560, %v587
      %v598 = vadd.f32 %v561, %v587
      %v599 = vadd.f32 %v562, %v587
      %v600 = vadd.f32 %v563, %v587
      %v601 = vadd.f32 %v564, %v587
      %v602 = vadd.f32 %v565, %v587
      %v603 = vadd.f32 %v566, %v587
      %v604 = vadd.f32 %v567, %v587
      %v605 = vadd.f32 %v568, %v587
      %v606 = vadd.f32 %v569, %v587
      %v607 = vadd.f32 %v570, %v587
      %v608 = vadd.f32 %v571, %v587
      %v609 = vadd.f32 %v572, %v587
      %v610 = vadd.f32 %v573, %v587
      %v611 = vadd.f32 %v574, %v587
      %v612 = vadd.f32 %v575, %v587
      %v613 = vadd.f32 %v576, %v587
      %v614 = vadd.f32 %v577, %v587
      %v615 = vadd.f32 %v578, %v587
      %v616 = vadd.f32 %v579, %v587
      %v617 = vadd.f32 %v580, %v587
      %v618 = vadd.f32 %v581, %v587
      %v619 = vadd.f32 %v582, %v587
      %v620 = vmax.f32 %v588, 0.0
      %v621 = vmax.f32 %v589, 0.0
      %v622 = vmax.f32 %v590, 0.0
      %v623 = vmax.f32 %v591, 0.0
      %v624 = vmax.f32 %v592, 0.0
      %v625 = vmax.f32 %v593, 0.0
      %v626 = vmax.f32 %v594, 0.0
      %v627 = vmax.f32 %v595, 0.0
      %v628 = vmax.f32 %v596, 0.0
      %v629 = vmax.f32 %v597, 0.0
      %v630 = vmax.f32 %v598, 0.0
      %v631 = vmax.f32 %v599, 0.0
      %v632 = vmax.f32 %v600, 0.0
      %v633 = vmax.f32 %v601, 0.0
      %v634 = vmax.f32 %v602, 0.0
      %v635 = vmax.f32 %v603, 0.0
      %v636 = vmax.f32 %v604, 0.0
      %v637 = vmax.f32 %v605, 0.0
      %v638 = vmax.f32 %v606, 0.0
      %v639 = vmax.f32 %v607, 0.0
      %v640 = vmax.f32 %v608, 0.0
      %v641 = vmax.f32 %v609, 0.0
      %v642 = vmax.f32 %v610, 0.0
      %v643 = vmax.f32 %v611, 0.0
      %v644 = vmax.f32 %v612, 0.0
      %v645 = vmax.f32 %v613, 0.0
      %v646 = vmax.f32 %v614, 0.0
      %v647 = vmax.f32 %v615, 0.0
      %v648 = vmax.f32 %v616, 0.0
      %v649 = vmax.f32 %v617, 0.0
      %v650 = vmax.f32 %v618, 0.0
      %v651 = vmax.f32 %v619, 0.0
      %vm652 = vcmask 31744
      %653 = vst.msk [vmem:[#allocation2] sm:$0xff] %vm652, 0.0
      %654 = vst.msk [vmem:[#allocation2 + $0x8] sm:$0xff] %vm652, 0.0
      %vm655 = vcmask 25600
      %656 = vst.msk [vmem:[#allocation2 + $0x10] sm:$0x3] %vm655, 0.0
      %657 = vst.msk [vmem:[#allocation2 + $0x18] sm:$0xff] %vm652, 0.0
      %658 = vst.msk [vmem:[#allocation2 + $0x20] sm:$0xff] %vm652, 0.0
      %659 = vst.msk [vmem:[#allocation2 + $0x28] sm:$0x3] %vm655, 0.0
      %660 = vst.msk [vmem:[#allocation2 + $0x30] sm:$0xff] %vm652, 0.0
      %661 = vst.msk [vmem:[#allocation2 + $0x38] sm:$0xff] %vm652, 0.0
      %662 = vst.msk [vmem:[#allocation2 + $0x40] sm:$0x3] %vm655, 0.0
      %663 = vst.msk [vmem:[#allocation2 + $0x48] sm:$0xff] %vm652, 0.0
      %664 = vst.msk [vmem:[#allocation2 + $0x50] sm:$0xff] %vm652, 0.0
      %665 = vst.msk [vmem:[#allocation2 + $0x58] sm:$0x3] %vm655, 0.0
      %666 = vst.msk [vmem:[#allocation2 + $0x60] sm:$0xff] %vm652, 0.0
      %667 = vst.msk [vmem:[#allocation2 + $0x68] sm:$0xff] %vm652, 0.0
      %668 = vst.msk [vmem:[#allocation2 + $0x70] sm:$0x3] %vm655, 0.0
      %669 = vst.msk [vmem:[#allocation2 + $0x78] sm:$0xff] %vm652, 0.0
      %670 = vst.msk [vmem:[#allocation2 + $0x80] sm:$0xff] %vm652, 0.0
      %671 = vst.msk [vmem:[#allocation2 + $0x88] sm:$0x3] %vm655, 0.0
      %672 = vst.msk [vmem:[#allocation2 + $0x90] sm:$0xff] %vm652, 0.0
      %673 = vst.msk [vmem:[#allocation2 + $0x98] sm:$0xff] %vm652, 0.0
      %674 = vst.msk [vmem:[#allocation2 + $0xa0] sm:$0x3] %vm655, 0.0
      %675 = vst.msk [vmem:[#allocation2 + $0xa8] sm:$0xff] %vm652, 0.0
      %676 = vst.msk [vmem:[#allocation2 + $0xb0] sm:$0xff] %vm652, 0.0
      %677 = vst.msk [vmem:[#allocation2 + $0xb8] sm:$0x3] %vm655, 0.0
      %678 = vst.msk [vmem:[#allocation2 + $0xc0] sm:$0xff] %vm652, 0.0
      %679 = vst.msk [vmem:[#allocation2 + $0xc8] sm:$0xff] %vm652, 0.0
      %680 = vst.msk [vmem:[#allocation2 + $0xd0] sm:$0x3] %vm655, 0.0
      %681 = vst.msk [vmem:[#allocation2 + $0xd8] sm:$0xff] %vm652, 0.0
      %682 = vst.msk [vmem:[#allocation2 + $0xe0] sm:$0xff] %vm652, 0.0
      %683 = vst.msk [vmem:[#allocation2 + $0xe8] sm:$0x3] %vm655, 0.0
      %684 = vst.msk [vmem:[#allocation2 + $0xf0] sm:$0xff] %vm652, 0.0
      %685 = vst.msk [vmem:[#allocation2 + $0xf8] sm:$0xff] %vm652, 0.0
      %686 = vst.msk [vmem:[#allocation2 + $0x100] sm:$0x3] %vm655, 0.0
      %687 = vst.msk [vmem:[#allocation2 + $0x108] sm:$0xff] %vm652, 0.0
      %688 = vst.msk [vmem:[#allocation2 + $0x110] sm:$0xff] %vm652, 0.0
      %689 = vst.msk [vmem:[#allocation2 + $0x118] sm:$0x3] %vm655, 0.0
      %690 = vst.msk [vmem:[#allocation2 + $0x120] sm:$0xff] %vm652, 0.0
      %691 = vst.msk [vmem:[#allocation2 + $0x128] sm:$0xff] %vm652, 0.0
      %692 = vst.msk [vmem:[#allocation2 + $0x130] sm:$0x3] %vm655, 0.0
      %693 = vst.msk [vmem:[#allocation2 + $0x138] sm:$0xff] %vm652, 0.0
      %694 = vst.msk [vmem:[#allocation2 + $0x140] sm:$0xff] %vm652, 0.0
      %695 = vst.msk [vmem:[#allocation2 + $0x148] sm:$0x3] %vm655, 0.0
      %696 = vst.msk [vmem:[#allocation2 + $0x150] sm:$0xff] %vm652, 0.0
      %697 = vst.msk [vmem:[#allocation2 + $0x158] sm:$0xff] %vm652, 0.0
      %698 = vst.msk [vmem:[#allocation2 + $0x160] sm:$0x3] %vm655, 0.0
      %699 = vst.msk [vmem:[#allocation2 + $0x168] sm:$0xff] %vm652, 0.0
      %700 = vst.msk [vmem:[#allocation2 + $0x170] sm:$0xff] %vm652, 0.0
      %701 = vst.msk [vmem:[#allocation2 + $0x178] sm:$0x3] %vm655, 0.0
      %702 = vst.msk [vmem:[#allocation2 + $0x180] sm:$0xff] %vm652, 0.0
      %703 = vst.msk [vmem:[#allocation2 + $0x188] sm:$0xff] %vm652, 0.0
      %704 = vst.msk [vmem:[#allocation2 + $0x190] sm:$0x3] %vm655, 0.0
      %705 = vst.msk [vmem:[#allocation2 + $0x198] sm:$0xff] %vm652, 0.0
      %706 = vst.msk [vmem:[#allocation2 + $0x1a0] sm:$0xff] %vm652, 0.0
      %707 = vst.msk [vmem:[#allocation2 + $0x1a8] sm:$0x3] %vm655, 0.0
      %s708 = scalar_lea.vmem [#allocation2], 24
      %709 = vst.msk [vmem:[%s708 + $0x1] sm:$0xff] %vm652, %v620
      %710 = vst.msk [vmem:[%s708 + $0x9] sm:$0xff] %vm652, %v621
      %711 = vst.msk [vmem:[%s708 + $0x19] sm:$0xff] %vm652, %v622
      %712 = vst.msk [vmem:[%s708 + $0x21] sm:$0xff] %vm652, %v623
      %713 = vst.msk [vmem:[%s708 + $0x31] sm:$0xff] %vm652, %v624
      %714 = vst.msk [vmem:[%s708 + $0x39] sm:$0xff] %vm652, %v625
      %715 = vst.msk [vmem:[%s708 + $0x49] sm:$0xff] %vm652, %v626
      %716 = vst.msk [vmem:[%s708 + $0x51] sm:$0xff] %vm652, %v627
      %717 = vst.msk [vmem:[%s708 + $0x61] sm:$0xff] %vm652, %v628
      %718 = vst.msk [vmem:[%s708 + $0x69] sm:$0xff] %vm652, %v629
      %719 = vst.msk [vmem:[%s708 + $0x79] sm:$0xff] %vm652, %v630
      %720 = vst.msk [vmem:[%s708 + $0x81] sm:$0xff] %vm652, %v631
      %721 = vst.msk [vmem:[%s708 + $0x91] sm:$0xff] %vm652, %v632
      %722 = vst.msk [vmem:[%s708 + $0x99] sm:$0xff] %vm652, %v633
      %723 = vst.msk [vmem:[%s708 + $0xa9] sm:$0xff] %vm652, %v634
      %724 = vst.msk [vmem:[%s708 + $0xb1] sm:$0xff] %vm652, %v635
      %725 = vst.msk [vmem:[%s708 + $0xc1] sm:$0xff] %vm652, %v636
      %726 = vst.msk [vmem:[%s708 + $0xc9] sm:$0xff] %vm652, %v637
      %727 = vst.msk [vmem:[%s708 + $0xd9] sm:$0xff] %vm652, %v638
      %728 = vst.msk [vmem:[%s708 + $0xe1] sm:$0xff] %vm652, %v639
      %729 = vst.msk [vmem:[%s708 + $0xf1] sm:$0xff] %vm652, %v640
      %730 = vst.msk [vmem:[%s708 + $0xf9] sm:$0xff] %vm652, %v641
      %731 = vst.msk [vmem:[%s708 + $0x109] sm:$0xff] %vm652, %v642
      %732 = vst.msk [vmem:[%s708 + $0x111] sm:$0xff] %vm652, %v643
      %733 = vst.msk [vmem:[%s708 + $0x121] sm:$0xff] %vm652, %v644
      %734 = vst.msk [vmem:[%s708 + $0x129] sm:$0xff] %vm652, %v645
      %735 = vst.msk [vmem:[%s708 + $0x139] sm:$0xff] %vm652, %v646
      %736 = vst.msk [vmem:[%s708 + $0x141] sm:$0xff] %vm652, %v647
      %737 = vst.msk [vmem:[%s708 + $0x151] sm:$0xff] %vm652, %v648
      %738 = vst.msk [vmem:[%s708 + $0x159] sm:$0xff] %vm652, %v649
      %739 = vst.msk [vmem:[%s708 + $0x169] sm:$0xff] %vm652, %v650
      %740 = vst.msk [vmem:[%s708 + $0x171] sm:$0xff] %vm652, %v651
      %v741 = vld [vmem:[#allocation2] sm:$0xff]
      %v742 = vld [vmem:[#allocation2 + $0x8] sm:$0xff]
      %v743 = vld [vmem:[#allocation2 + $0x18] sm:$0xff]
      %v744 = vld [vmem:[#allocation2 + $0x20] sm:$0xff]
      %v745 = vld [vmem:[#allocation2 + $0x30] sm:$0xff]
      %v746 = vld [vmem:[#allocation2 + $0x38] sm:$0xff]
      %v747 = vld [vmem:[#allocation2 + $0x48] sm:$0xff]
      %v748 = vld [vmem:[#allocation2 + $0x50] sm:$0xff]
      %v749 = vld [vmem:[#allocation2 + $0x60] sm:$0xff]
      %v750 = vld [vmem:[#allocation2 + $0x68] sm:$0xff]
      %v751 = vld [vmem:[#allocation2 + $0x78] sm:$0xff]
      %v752 = vld [vmem:[#allocation2 + $0x80] sm:$0xff]
      %v753 = vld [vmem:[#allocation2 + $0x90] sm:$0xff]
      %v754 = vld [vmem:[#allocation2 + $0x98] sm:$0xff]
      %v755 = vld [vmem:[#allocation2 + $0xa8] sm:$0xff]
      %v756 = vld [vmem:[#allocation2 + $0xb0] sm:$0xff]
      %v757 = vld [vmem:[#allocation2 + $0xc0] sm:$0xff]
      %v758 = vld [vmem:[#allocation2 + $0xc8] sm:$0xff]
      %v759 = vld [vmem:[#allocation2 + $0xd8] sm:$0xff]
      %v760 = vld [vmem:[#allocation2 + $0xe0] sm:$0xff]
      %v761 = vld [vmem:[#allocation2 + $0xf0] sm:$0xff]
      %v762 = vld [vmem:[#allocation2 + $0xf8] sm:$0xff]
      %v763 = vld [vmem:[#allocation2 + $0x108] sm:$0xff]
      %v764 = vld [vmem:[#allocation2 + $0x110] sm:$0xff]
      %v765 = vld [vmem:[#allocation2 + $0x120] sm:$0xff]
      %v766 = vld [vmem:[#allocation2 + $0x128] sm:$0xff]
      %v767 = vld [vmem:[#allocation2 + $0x138] sm:$0xff]
      %v768 = vld [vmem:[#allocation2 + $0x140] sm:$0xff]
      %v769 = vld [vmem:[#allocation2 + $0x150] sm:$0xff]
      %v770 = vld [vmem:[#allocation2 + $0x158] sm:$0xff]
      %v771 = vld [vmem:[#allocation2 + $0x168] sm:$0xff]
      %v772 = vld [vmem:[#allocation2 + $0x170] sm:$0xff]
      %v773 = vpack.c.bf16 %v742, %v741
      %v774 = vpack.c.bf16 %v744, %v743
      %v775 = vpack.c.bf16 %v746, %v745
      %v776 = vpack.c.bf16 %v748, %v747
      %v777 = vpack.c.bf16 %v750, %v749
      %v778 = vpack.c.bf16 %v752, %v751
      %v779 = vpack.c.bf16 %v754, %v753
      %v780 = vpack.c.bf16 %v756, %v755
      %v781 = vpack.c.bf16 %v758, %v757
      %v782 = vpack.c.bf16 %v760, %v759
      %v783 = vpack.c.bf16 %v762, %v761
      %v784 = vpack.c.bf16 %v764, %v763
      %v785 = vpack.c.bf16 %v766, %v765
      %v786 = vpack.c.bf16 %v768, %v767
      %v787 = vpack.c.bf16 %v770, %v769
      %v788 = vpack.c.bf16 %v772, %v771
      %v789 = vld [vmem:[%s2] sm:$0x3]
      %v790 = vld [vmem:[#allocation2 + $0x1] sm:$0xff]
      %v791 = vld [vmem:[#allocation2 + $0x9] sm:$0xff]
      %v792 = vld [vmem:[#allocation2 + $0x19] sm:$0xff]
      %v793 = vld [vmem:[#allocation2 + $0x21] sm:$0xff]
      %v794 = vld [vmem:[#allocation2 + $0x31] sm:$0xff]
      %v795 = vld [vmem:[#allocation2 + $0x39] sm:$0xff]
      %v796 = vld [vmem:[#allocation2 + $0x49] sm:$0xff]
      %v797 = vld [vmem:[#allocation2 + $0x51] sm:$0xff]
      %v798 = vld [vmem:[#allocation2 + $0x61] sm:$0xff]
      %v799 = vld [vmem:[#allocation2 + $0x69] sm:$0xff]
      %v800 = vld [vmem:[#allocation2 + $0x79] sm:$0xff]
      %v801 = vld [vmem:[#allocation2 + $0x81] sm:$0xff]
      %v802 = vld [vmem:[#allocation2 + $0x91] sm:$0xff]
      %v803 = vld [vmem:[#allocation2 + $0x99] sm:$0xff]
      %v804 = vld [vmem:[#allocation2 + $0xa9] sm:$0xff]
      %v805 = vld [vmem:[#allocation2 + $0xb1] sm:$0xff]
      %v806 = vld [vmem:[#allocation2 + $0xc1] sm:$0xff]
      %v807 = vld [vmem:[#allocation2 + $0xc9] sm:$0xff]
      %v808 = vld [vmem:[#allocation2 + $0xd9] sm:$0xff]
      %v809 = vld [vmem:[#allocation2 + $0xe1] sm:$0xff]
      %v810 = vld [vmem:[#allocation2 + $0xf1] sm:$0xff]
      %v811 = vld [vmem:[#allocation2 + $0xf9] sm:$0xff]
      %v812 = vld [vmem:[#allocation2 + $0x109] sm:$0xff]
      %v813 = vld [vmem:[#allocation2 + $0x111] sm:$0xff]
      %v814 = vld [vmem:[#allocation2 + $0x121] sm:$0xff]
      %v815 = vld [vmem:[#allocation2 + $0x129] sm:$0xff]
      %v816 = vld [vmem:[#allocation2 + $0x139] sm:$0xff]
      %v817 = vld [vmem:[#allocation2 + $0x141] sm:$0xff]
      %v818 = vld [vmem:[#allocation2 + $0x151] sm:$0xff]
      %v819 = vld [vmem:[#allocation2 + $0x159] sm:$0xff]
      %v820 = vld [vmem:[#allocation2 + $0x169] sm:$0xff]
      %v821 = vld [vmem:[#allocation2 + $0x171] sm:$0xff]
      %v822 = vpack.c.bf16 %v791, %v790
      %v823 = vpack.c.bf16 %v793, %v792
      %v824 = vpack.c.bf16 %v795, %v794
      %v825 = vpack.c.bf16 %v797, %v796
      %v826 = vpack.c.bf16 %v799, %v798
      %v827 = vpack.c.bf16 %v801, %v800
      %v828 = vpack.c.bf16 %v803, %v802
      %v829 = vpack.c.bf16 %v805, %v804
      %v830 = vpack.c.bf16 %v807, %v806
      %v831 = vpack.c.bf16 %v809, %v808
      %v832 = vpack.c.bf16 %v811, %v810
      %v833 = vpack.c.bf16 %v813, %v812
      %v834 = vpack.c.bf16 %v815, %v814
      %v835 = vpack.c.bf16 %v817, %v816
      %v836 = vpack.c.bf16 %v819, %v818
      %v837 = vpack.c.bf16 %v821, %v820
      %s838 = scalar_lea.vmem %s2, 2
      %v839 = vld [vmem:[%s838] sm:$0x3]
      %v841 = vsel %vm652, %v822, 0
      %v844 = vsel %vm652, %v823, 0
      %v847 = vsel %vm652, %v824, 0
      %v850 = vsel %vm652, %v825, 0
      %v853 = vsel %vm652, %v826, 0
      %v856 = vsel %vm652, %v827, 0
      %v859 = vsel %vm652, %v828, 0
      %v862 = vsel %vm652, %v829, 0
      %v865 = vsel %vm652, %v830, 0
      %v868 = vsel %vm652, %v831, 0
      %v871 = vsel %vm652, %v832, 0
      %v874 = vsel %vm652, %v833, 0
      %v877 = vsel %vm652, %v834, 0
      %v880 = vsel %vm652, %v835, 0
      %v883 = vsel %vm652, %v836, 0
      %v886 = vsel %vm652, %v837, 0
      %vm888 = vcmask 1041408
      %v890 = vsel %vm888, %v839, 0
      %892 = vmatprep.subr.bf16.mxu0 0
      %893 = vmatpush1.bf16.msra.mxu0 %v890
      %894 = vmatprep.subr.bf16.mxu0 0
      %895 = vmatpush1.bf16.msra.mxu0 0
      %896 = vmatprep.subr.bf16.mxu0 0
      %897 = vmatpush1.bf16.msra.mxu0 0
      %898 = vmatprep.subr.bf16.mxu0 0
      %899 = vmatpush1.bf16.msra.mxu0 0
      %900 = vmatprep.subr.bf16.mxu0 0
      %901 = vmatpush1.bf16.msra.mxu0 0
      %902 = vmatprep.subr.bf16.mxu0 0
      %903 = vmatpush1.bf16.msra.mxu0 0
      %904 = vmatprep.subr.bf16.mxu0 0
      %905 = vmatpush1.bf16.msra.mxu0 0
      %906 = vmatprep.subr.bf16.mxu0 0
      %907 = vmatpush1.bf16.msra.mxu0 0
      %908 = vmatprep.subr.bf16.mxu0 0
      %909 = vmatpush1.bf16.msra.mxu0 0
      %910 = vmatprep.subr.bf16.mxu0 0
      %911 = vmatpush1.bf16.msra.mxu0 0
      %912 = vmatprep.subr.bf16.mxu0 0
      %913 = vmatpush1.bf16.msra.mxu0 0
      %914 = vmatprep.subr.bf16.mxu0 0
      %915 = vmatpush1.bf16.msra.mxu0 0
      %916 = vmatprep.subr.bf16.mxu0 0
      %917 = vmatpush1.bf16.msra.mxu0 0
      %918 = vmatprep.subr.bf16.mxu0 0
      %919 = vmatpush1.bf16.msra.mxu0 0
      %920 = vmatprep.subr.bf16.mxu0 0
      %921 = vmatpush1.bf16.msra.mxu0 0
      %922 = vmatprep.subr.bf16.mxu0 0
      %923 = vmatpush1.bf16.msra.mxu0 0
      %924 = vmatprep.mubr.bf16.mxu0 0
      %925 = vmatmul.mubr.bf16.gmra.mrb[0].mxu0 %v841
      %v926 = vpop.f32.mrb[0].mxu0
      %v927 = vadd.f32 0.0, %v926
      %v928 = vpop.f32.mrb[0].mxu0
      %v929 = vpop.f32.mrb[0].mxu0
      %v930 = vadd.f32 0.0, %v929
      %v931 = vpop.f32.mrb[0].mxu0
      %932 = vmatprep.mubr.bf16.mxu0 0
      %933 = vmatmul.mubr.bf16.gmra.mrb[0].mxu0 %v844
      %v934 = vpop.f32.mrb[0].mxu0
      %v935 = vadd.f32 0.0, %v934
      %v936 = vpop.f32.mrb[0].mxu0
      %v937 = vpop.f32.mrb[0].mxu0
      %v938 = vadd.f32 0.0, %v937
      %v939 = vpop.f32.mrb[0].mxu0
      %940 = vmatprep.mubr.bf16.mxu0 0
      %941 = vmatmul.mubr.bf16.gmra.mrb[0].mxu0 %v847
      %v942 = vpop.f32.mrb[0].mxu0
      %v943 = vadd.f32 0.0, %v942
      %v944 = vpop.f32.mrb[0].mxu0
      %v945 = vpop.f32.mrb[0].mxu0
      %v946 = vadd.f32 0.0, %v945
      %v947 = vpop.f32.mrb[0].mxu0
      %948 = vmatprep.mubr.bf16.mxu0 0
      %949 = vmatmul.mubr.bf16.gmra.mrb[0].mxu0 %v850
      %v950 = vpop.f32.mrb[0].mxu0
      %v951 = vadd.f32 0.0, %v950
      %v952 = vpop.f32.mrb[0].mxu0
      %v953 = vpop.f32.mrb[0].mxu0
      %v954 = vadd.f32 0.0, %v953
      %v955 = vpop.f32.mrb[0].mxu0
      %956 = vmatprep.mubr.bf16.mxu0 0
      %957 = vmatmul.mubr.bf16.gmra.mrb[0].mxu0 %v853
      %v958 = vpop.f32.mrb[0].mxu0
      %v959 = vadd.f32 0.0, %v958
      %v960 = vpop.f32.mrb[0].mxu0
      %v961 = vpop.f32.mrb[0].mxu0
      %v962 = vadd.f32 0.0, %v961
      %v963 = vpop.f32.mrb[0].mxu0
      %964 = vmatprep.mubr.bf16.mxu0 0
      %965 = vmatmul.mubr.bf16.gmra.mrb[0].mxu0 %v856
      %v966 = vpop.f32.mrb[0].mxu0
      %v967 = vadd.f32 0.0, %v966
      %v968 = vpop.f32.mrb[0].mxu0
      %v969 = vpop.f32.mrb[0].mxu0
      %v970 = vadd.f32 0.0, %v969
      %v971 = vpop.f32.mrb[0].mxu0
      %972 = vmatprep.mubr.bf16.mxu0 0
      %973 = vmatmul.mubr.bf16.gmra.mrb[0].mxu0 %v859
      %v974 = vpop.f32.mrb[0].mxu0
      %v975 = vadd.f32 0.0, %v974
      %v976 = vpop.f32.mrb[0].mxu0
      %v977 = vpop.f32.mrb[0].mxu0
      %v978 = vadd.f32 0.0, %v977
      %v979 = vpop.f32.mrb[0].mxu0
      %980 = vmatprep.mubr.bf16.mxu0 0
      %981 = vmatmul.mubr.bf16.gmra.mrb[0].mxu0 %v862
      %v982 = vpop.f32.mrb[0].mxu0
      %v983 = vadd.f32 0.0, %v982
      %v984 = vpop.f32.mrb[0].mxu0
      %v985 = vpop.f32.mrb[0].mxu0
      %v986 = vadd.f32 0.0, %v985
      %v987 = vpop.f32.mrb[0].mxu0
      %988 = vmatprep.mubr.bf16.mxu0 0
      %989 = vmatmul.mubr.bf16.gmra.mrb[0].mxu0 %v865
      %v990 = vpop.f32.mrb[0].mxu0
      %v991 = vadd.f32 0.0, %v990
      %v992 = vpop.f32.mrb[0].mxu0
      %v993 = vpop.f32.mrb[0].mxu0
      %v994 = vadd.f32 0.0, %v993
      %v995 = vpop.f32.mrb[0].mxu0
      %996 = vmatprep.mubr.bf16.mxu0 0
      %997 = vmatmul.mubr.bf16.gmra.mrb[0].mxu0 %v868
      %v998 = vpop.f32.mrb[0].mxu0
      %v999 = vadd.f32 0.0, %v998
      %v1000 = vpop.f32.mrb[0].mxu0
      %v1001 = vpop.f32.mrb[0].mxu0
      %v1002 = vadd.f32 0.0, %v1001
      %v1003 = vpop.f32.mrb[0].mxu0
      %1004 = vmatprep.mubr.bf16.mxu0 0
      %1005 = vmatmul.mubr.bf16.gmra.mrb[0].mxu0 %v871
      %v1006 = vpop.f32.mrb[0].mxu0
      %v1007 = vadd.f32 0.0, %v1006
      %v1008 = vpop.f32.mrb[0].mxu0
      %v1009 = vpop.f32.mrb[0].mxu0
      %v1010 = vadd.f32 0.0, %v1009
      %v1011 = vpop.f32.mrb[0].mxu0
      %1012 = vmatprep.mubr.bf16.mxu0 0
      %1013 = vmatmul.mubr.bf16.gmra.mrb[0].mxu0 %v874
      %v1014 = vpop.f32.mrb[0].mxu0
      %v1015 = vadd.f32 0.0, %v1014
      %v1016 = vpop.f32.mrb[0].mxu0
      %v1017 = vpop.f32.mrb[0].mxu0
      %v1018 = vadd.f32 0.0, %v1017
      %v1019 = vpop.f32.mrb[0].mxu0
      %1020 = vmatprep.mubr.bf16.mxu0 0
      %1021 = vmatmul.mubr.bf16.gmra.mrb[0].mxu0 %v877
      %v1022 = vpop.f32.mrb[0].mxu0
      %v1023 = vadd.f32 0.0, %v1022
      %v1024 = vpop.f32.mrb[0].mxu0
      %v1025 = vpop.f32.mrb[0].mxu0
      %v1026 = vadd.f32 0.0, %v1025
      %v1027 = vpop.f32.mrb[0].mxu0
      %1028 = vmatprep.mubr.bf16.mxu0 0
      %1029 = vmatmul.mubr.bf16.gmra.mrb[0].mxu0 %v880
      %v1030 = vpop.f32.mrb[0].mxu0
      %v1031 = vadd.f32 0.0, %v1030
      %v1032 = vpop.f32.mrb[0].mxu0
      %v1033 = vpop.f32.mrb[0].mxu0
      %v1034 = vadd.f32 0.0, %v1033
      %v1035 = vpop.f32.mrb[0].mxu0
      %1036 = vmatprep.mubr.bf16.mxu0 0
      %1037 = vmatmul.mubr.bf16.gmra.mrb[0].mxu0 %v883
      %v1038 = vpop.f32.mrb[0].mxu0
      %v1039 = vadd.f32 0.0, %v1038
      %v1040 = vpop.f32.mrb[0].mxu0
      %v1041 = vpop.f32.mrb[0].mxu0
      %v1042 = vadd.f32 0.0, %v1041
      %v1043 = vpop.f32.mrb[0].mxu0
      %1044 = vmatprep.mubr.bf16.mxu0 0
      %1045 = vmatmul.mubr.bf16.gmra.mrb[0].mxu0 %v886
      %v1046 = vpop.f32.mrb[0].mxu0
      %v1047 = vadd.f32 0.0, %v1046
      %v1048 = vpop.f32.mrb[0].mxu0
      %v1049 = vpop.f32.mrb[0].mxu0
      %v1050 = vadd.f32 0.0, %v1049
      %v1051 = vpop.f32.mrb[0].mxu0
      %1052 = vdwg.mxu0
      %v1054 = vsel %vm652, %v773, 0
      %v1057 = vsel %vm652, %v774, 0
      %v1060 = vsel %vm652, %v775, 0
      %v1063 = vsel %vm652, %v776, 0
      %v1066 = vsel %vm652, %v777, 0
      %v1069 = vsel %vm652, %v778, 0
      %v1072 = vsel %vm652, %v779, 0
      %v1075 = vsel %vm652, %v780, 0
      %v1078 = vsel %vm652, %v781, 0
      %v1081 = vsel %vm652, %v782, 0
      %v1084 = vsel %vm652, %v783, 0
      %v1087 = vsel %vm652, %v784, 0
      %v1090 = vsel %vm652, %v785, 0
      %v1093 = vsel %vm652, %v786, 0
      %v1096 = vsel %vm652, %v787, 0
      %v1099 = vsel %vm652, %v788, 0
      %v1102 = vsel %vm888, %v789, 0
      %1104 = vmatprep.subr.bf16.mxu0 0
      %1105 = vmatpush1.bf16.msra.mxu0 %v1102
      %1106 = vmatprep.subr.bf16.mxu0 0
      %1107 = vmatpush1.bf16.msra.mxu0 0
      %1108 = vmatprep.subr.bf16.mxu0 0
      %1109 = vmatpush1.bf16.msra.mxu0 0
      %1110 = vmatprep.subr.bf16.mxu0 0
      %1111 = vmatpush1.bf16.msra.mxu0 0
      %1112 = vmatprep.subr.bf16.mxu0 0
      %1113 = vmatpush1.bf16.msra.mxu0 0
      %1114 = vmatprep.subr.bf16.mxu0 0
      %1115 = vmatpush1.bf16.msra.mxu0 0
      %1116 = vmatprep.subr.bf16.mxu0 0
      %1117 = vmatpush1.bf16.msra.mxu0 0
      %1118 = vmatprep.subr.bf16.mxu0 0
      %1119 = vmatpush1.bf16.msra.mxu0 0
      %1120 = vmatprep.subr.bf16.mxu0 0
      %1121 = vmatpush1.bf16.msra.mxu0 0
      %1122 = vmatprep.subr.bf16.mxu0 0
      %1123 = vmatpush1.bf16.msra.mxu0 0
      %1124 = vmatprep.subr.bf16.mxu0 0
      %1125 = vmatpush1.bf16.msra.mxu0 0
      %1126 = vmatprep.subr.bf16.mxu0 0
      %1127 = vmatpush1.bf16.msra.mxu0 0
      %1128 = vmatprep.subr.bf16.mxu0 0
      %1129 = vmatpush1.bf16.msra.mxu0 0
      %1130 = vmatprep.subr.bf16.mxu0 0
      %1131 = vmatpush1.bf16.msra.mxu0 0
      %1132 = vmatprep.subr.bf16.mxu0 0
      %1133 = vmatpush1.bf16.msra.mxu0 0
      %1134 = vmatprep.subr.bf16.mxu0 0
      %1135 = vmatpush1.bf16.msra.mxu0 0
      %1136 = vmatprep.mubr.bf16.mxu0 0
      %1137 = vmatmul.mubr.bf16.gmra.mrb[0].mxu0 %v1054
      %v1138 = vpop.f32.mrb[0].mxu0
      %v1139 = vadd.f32 %v927, %v1138
      %v1140 = vpop.f32.mrb[0].mxu0
      %v1141 = vpop.f32.mrb[0].mxu0
      %v1142 = vadd.f32 %v930, %v1141
      %v1143 = vpop.f32.mrb[0].mxu0
      %1144 = vmatprep.mubr.bf16.mxu0 0
      %1145 = vmatmul.mubr.bf16.gmra.mrb[0].mxu0 %v1057
      %v1146 = vpop.f32.mrb[0].mxu0
      %v1147 = vadd.f32 %v935, %v1146
      %v1148 = vpop.f32.mrb[0].mxu0
      %v1149 = vpop.f32.mrb[0].mxu0
      %v1150 = vadd.f32 %v938, %v1149
      %v1151 = vpop.f32.mrb[0].mxu0
      %1152 = vmatprep.mubr.bf16.mxu0 0
      %1153 = vmatmul.mubr.bf16.gmra.mrb[0].mxu0 %v1060
      %v1154 = vpop.f32.mrb[0].mxu0
      %v1155 = vadd.f32 %v943, %v1154
      %v1156 = vpop.f32.mrb[0].mxu0
      %v1157 = vpop.f32.mrb[0].mxu0
      %v1158 = vadd.f32 %v946, %v1157
      %v1159 = vpop.f32.mrb[0].mxu0
      %1160 = vmatprep.mubr.bf16.mxu0 0
      %1161 = vmatmul.mubr.bf16.gmra.mrb[0].mxu0 %v1063
      %v1162 = vpop.f32.mrb[0].mxu0
      %v1163 = vadd.f32 %v951, %v1162
      %v1164 = vpop.f32.mrb[0].mxu0
      %v1165 = vpop.f32.mrb[0].mxu0
      %v1166 = vadd.f32 %v954, %v1165
      %v1167 = vpop.f32.mrb[0].mxu0
      %1168 = vmatprep.mubr.bf16.mxu0 0
      %1169 = vmatmul.mubr.bf16.gmra.mrb[0].mxu0 %v1066
      %v1170 = vpop.f32.mrb[0].mxu0
      %v1171 = vadd.f32 %v959, %v1170
      %v1172 = vpop.f32.mrb[0].mxu0
      %v1173 = vpop.f32.mrb[0].mxu0
      %v1174 = vadd.f32 %v962, %v1173
      %v1175 = vpop.f32.mrb[0].mxu0
      %1176 = vmatprep.mubr.bf16.mxu0 0
      %1177 = vmatmul.mubr.bf16.gmra.mrb[0].mxu0 %v1069
      %v1178 = vpop.f32.mrb[0].mxu0
      %v1179 = vadd.f32 %v967, %v1178
      %v1180 = vpop.f32.mrb[0].mxu0
      %v1181 = vpop.f32.mrb[0].mxu0
      %v1182 = vadd.f32 %v970, %v1181
      %v1183 = vpop.f32.mrb[0].mxu0
      %1184 = vmatprep.mubr.bf16.mxu0 0
      %1185 = vmatmul.mubr.bf16.gmra.mrb[0].mxu0 %v1072
      %v1186 = vpop.f32.mrb[0].mxu0
      %v1187 = vadd.f32 %v975, %v1186
      %v1188 = vpop.f32.mrb[0].mxu0
      %v1189 = vpop.f32.mrb[0].mxu0
      %v1190 = vadd.f32 %v978, %v1189
      %v1191 = vpop.f32.mrb[0].mxu0
      %1192 = vmatprep.mubr.bf16.mxu0 0
      %1193 = vmatmul.mubr.bf16.gmra.mrb[0].mxu0 %v1075
      %v1194 = vpop.f32.mrb[0].mxu0
      %v1195 = vadd.f32 %v983, %v1194
      %v1196 = vpop.f32.mrb[0].mxu0
      %v1197 = vpop.f32.mrb[0].mxu0
      %v1198 = vadd.f32 %v986, %v1197
      %v1199 = vpop.f32.mrb[0].mxu0
      %1200 = vmatprep.mubr.bf16.mxu0 0
      %1201 = vmatmul.mubr.bf16.gmra.mrb[0].mxu0 %v1078
      %v1202 = vpop.f32.mrb[0].mxu0
      %v1203 = vadd.f32 %v991, %v1202
      %v1204 = vpop.f32.mrb[0].mxu0
      %v1205 = vpop.f32.mrb[0].mxu0
      %v1206 = vadd.f32 %v994, %v1205
      %v1207 = vpop.f32.mrb[0].mxu0
      %1208 = vmatprep.mubr.bf16.mxu0 0
      %1209 = vmatmul.mubr.bf16.gmra.mrb[0].mxu0 %v1081
      %v1210 = vpop.f32.mrb[0].mxu0
      %v1211 = vadd.f32 %v999, %v1210
      %v1212 = vpop.f32.mrb[0].mxu0
      %v1213 = vpop.f32.mrb[0].mxu0
      %v1214 = vadd.f32 %v1002, %v1213
      %v1215 = vpop.f32.mrb[0].mxu0
      %1216 = vmatprep.mubr.bf16.mxu0 0
      %1217 = vmatmul.mubr.bf16.gmra.mrb[0].mxu0 %v1084
      %v1218 = vpop.f32.mrb[0].mxu0
      %v1219 = vadd.f32 %v1007, %v1218
      %v1220 = vpop.f32.mrb[0].mxu0
      %v1221 = vpop.f32.mrb[0].mxu0
      %v1222 = vadd.f32 %v1010, %v1221
      %v1223 = vpop.f32.mrb[0].mxu0
      %1224 = vmatprep.mubr.bf16.mxu0 0
      %1225 = vmatmul.mubr.bf16.gmra.mrb[0].mxu0 %v1087
      %v1226 = vpop.f32.mrb[0].mxu0
      %v1227 = vadd.f32 %v1015, %v1226
      %v1228 = vpop.f32.mrb[0].mxu0
      %v1229 = vpop.f32.mrb[0].mxu0
      %v1230 = vadd.f32 %v1018, %v1229
      %v1231 = vpop.f32.mrb[0].mxu0
      %1232 = vmatprep.mubr.bf16.mxu0 0
      %1233 = vmatmul.mubr.bf16.gmra.mrb[0].mxu0 %v1090
      %v1234 = vpop.f32.mrb[0].mxu0
      %v1235 = vadd.f32 %v1023, %v1234
      %v1236 = vpop.f32.mrb[0].mxu0
      %v1237 = vpop.f32.mrb[0].mxu0
      %v1238 = vadd.f32 %v1026, %v1237
      %v1239 = vpop.f32.mrb[0].mxu0
      %1240 = vmatprep.mubr.bf16.mxu0 0
      %1241 = vmatmul.mubr.bf16.gmra.mrb[0].mxu0 %v1093
      %v1242 = vpop.f32.mrb[0].mxu0
      %v1243 = vadd.f32 %v1031, %v1242
      %v1244 = vpop.f32.mrb[0].mxu0
      %v1245 = vpop.f32.mrb[0].mxu0
      %v1246 = vadd.f32 %v1034, %v1245
      %v1247 = vpop.f32.mrb[0].mxu0
      %1248 = vmatprep.mubr.bf16.mxu0 0
      %1249 = vmatmul.mubr.bf16.gmra.mrb[0].mxu0 %v1096
      %v1250 = vpop.f32.mrb[0].mxu0
      %v1251 = vadd.f32 %v1039, %v1250
      %v1252 = vpop.f32.mrb[0].mxu0
      %v1253 = vpop.f32.mrb[0].mxu0
      %v1254 = vadd.f32 %v1042, %v1253
      %v1255 = vpop.f32.mrb[0].mxu0
      %1256 = vmatprep.mubr.bf16.mxu0 0
      %1257 = vmatmul.mubr.bf16.gmra.mrb[0].mxu0 %v1099
      %v1258 = vpop.f32.mrb[0].mxu0
      %v1259 = vadd.f32 %v1047, %v1258
      %v1260 = vpop.f32.mrb[0].mxu0
      %v1261 = vpop.f32.mrb[0].mxu0
      %v1262 = vadd.f32 %v1050, %v1261
      %v1263 = vpop.f32.mrb[0].mxu0
      %1264 = vdwg.mxu0
      %v1265 = vld [vmem:[#allocation2 + $0x2] sm:$0xff]
      %v1266 = vld [vmem:[#allocation2 + $0xa] sm:$0xff]
      %v1267 = vld [vmem:[#allocation2 + $0x1a] sm:$0xff]
      %v1268 = vld [vmem:[#allocation2 + $0x22] sm:$0xff]
      %v1269 = vld [vmem:[#allocation2 + $0x32] sm:$0xff]
      %v1270 = vld [vmem:[#allocation2 + $0x3a] sm:$0xff]
      %v1271 = vld [vmem:[#allocation2 + $0x4a] sm:$0xff]
      %v1272 = vld [vmem:[#allocation2 + $0x52] sm:$0xff]
      %v1273 = vld [vmem:[#allocation2 + $0x62] sm:$0xff]
      %v1274 = vld [vmem:[#allocation2 + $0x6a] sm:$0xff]
      %v1275 = vld [vmem:[#allocation2 + $0x7a] sm:$0xff]
      %v1276 = vld [vmem:[#allocation2 + $0x82] sm:$0xff]
      %v1277 = vld [vmem:[#allocation2 + $0x92] sm:$0xff]
      %v1278 = vld [vmem:[#allocation2 + $0x9a] sm:$0xff]
      %v1279 = vld [vmem:[#allocation2 + $0xaa] sm:$0xff]
      %v1280 = vld [vmem:[#allocation2 + $0xb2] sm:$0xff]
      %v1281 = vld [vmem:[#allocation2 + $0xc2] sm:$0xff]
      %v1282 = vld [vmem:[#allocation2 + $0xca] sm:$0xff]
      %v1283 = vld [vmem:[#allocation2 + $0xda] sm:$0xff]
      %v1284 = vld [vmem:[#allocation2 + $0xe2] sm:$0xff]
      %v1285 = vld [vmem:[#allocation2 + $0xf2] sm:$0xff]
      %v1286 = vld [vmem:[#allocation2 + $0xfa] sm:$0xff]
      %v1287 = vld [vmem:[#allocation2 + $0x10a] sm:$0xff]
      %v1288 = vld [vmem:[#allocation2 + $0x112] sm:$0xff]
      %v1289 = vld [vmem:[#allocation2 + $0x122] sm:$0xff]
      %v1290 = vld [vmem:[#allocation2 + $0x12a] sm:$0xff]
      %v1291 = vld [vmem:[#allocation2 + $0x13a] sm:$0xff]
      %v1292 = vld [vmem:[#allocation2 + $0x142] sm:$0xff]
      %v1293 = vld [vmem:[#allocation2 + $0x152] sm:$0xff]
      %v1294 = vld [vmem:[#allocation2 + $0x15a] sm:$0xff]
      %v1295 = vld [vmem:[#allocation2 + $0x16a] sm:$0xff]
      %v1296 = vld [vmem:[#allocation2 + $0x172] sm:$0xff]
      %v1297 = vpack.c.bf16 %v1266, %v1265
      %v1298 = vpack.c.bf16 %v1268, %v1267
      %v1299 = vpack.c.bf16 %v1270, %v1269
      %v1300 = vpack.c.bf16 %v1272, %v1271
      %v1301 = vpack.c.bf16 %v1274, %v1273
      %v1302 = vpack.c.bf16 %v1276, %v1275
      %v1303 = vpack.c.bf16 %v1278, %v1277
      %v1304 = vpack.c.bf16 %v1280, %v1279
      %v1305 = vpack.c.bf16 %v1282, %v1281
      %v1306 = vpack.c.bf16 %v1284, %v1283
      %v1307 = vpack.c.bf16 %v1286, %v1285
      %v1308 = vpack.c.bf16 %v1288, %v1287
      %v1309 = vpack.c.bf16 %v1290, %v1289
      %v1310 = vpack.c.bf16 %v1292, %v1291
      %v1311 = vpack.c.bf16 %v1294, %v1293
      %v1312 = vpack.c.bf16 %v1296, %v1295
      %s1313 = scalar_lea.vmem %s2, 4
      %v1314 = vld [vmem:[%s1313] sm:$0x3]
      %v1316 = vsel %vm652, %v1297, 0
      %v1319 = vsel %vm652, %v1298, 0
      %v1322 = vsel %vm652, %v1299, 0
      %v1325 = vsel %vm652, %v1300, 0
      %v1328 = vsel %vm652, %v1301, 0
      %v1331 = vsel %vm652, %v1302, 0
      %v1334 = vsel %vm652, %v1303, 0
      %v1337 = vsel %vm652, %v1304, 0
      %v1340 = vsel %vm652, %v1305, 0
      %v1343 = vsel %vm652, %v1306, 0
      %v1346 = vsel %vm652, %v1307, 0
      %v1349 = vsel %vm652, %v1308, 0
      %v1352 = vsel %vm652, %v1309, 0
      %v1355 = vsel %vm652, %v1310, 0
      %v1358 = vsel %vm652, %v1311, 0
      %v1361 = vsel %vm652, %v1312, 0
      %v1364 = vsel %vm888, %v1314, 0
      %1366 = vmatprep.subr.bf16.mxu0 0
      %1367 = vmatpush1.bf16.msra.mxu0 %v1364
      %1368 = vmatprep.subr.bf16.mxu0 0
      %1369 = vmatpush1.bf16.msra.mxu0 0
      %1370 = vmatprep.subr.bf16.mxu0 0
      %1371 = vmatpush1.bf16.msra.mxu0 0
      %1372 = vmatprep.subr.bf16.mxu0 0
      %1373 = vmatpush1.bf16.msra.mxu0 0
      %1374 = vmatprep.subr.bf16.mxu0 0
      %1375 = vmatpush1.bf16.msra.mxu0 0
      %1376 = vmatprep.subr.bf16.mxu0 0
      %1377 = vmatpush1.bf16.msra.mxu0 0
      %1378 = vmatprep.subr.bf16.mxu0 0
      %1379 = vmatpush1.bf16.msra.mxu0 0
      %1380 = vmatprep.subr.bf16.mxu0 0
      %1381 = vmatpush1.bf16.msra.mxu0 0
      %1382 = vmatprep.subr.bf16.mxu0 0
      %1383 = vmatpush1.bf16.msra.mxu0 0
      %1384 = vmatprep.subr.bf16.mxu0 0
      %1385 = vmatpush1.bf16.msra.mxu0 0
      %1386 = vmatprep.subr.bf16.mxu0 0
      %1387 = vmatpush1.bf16.msra.mxu0 0
      %1388 = vmatprep.subr.bf16.mxu0 0
      %1389 = vmatpush1.bf16.msra.mxu0 0
      %1390 = vmatprep.subr.bf16.mxu0 0
      %1391 = vmatpush1.bf16.msra.mxu0 0
      %1392 = vmatprep.subr.bf16.mxu0 0
      %1393 = vmatpush1.bf16.msra.mxu0 0
      %1394 = vmatprep.subr.bf16.mxu0 0
      %1395 = vmatpush1.bf16.msra.mxu0 0
      %1396 = vmatprep.subr.bf16.mxu0 0
      %1397 = vmatpush1.bf16.msra.mxu0 0
      %1398 = vmatprep.mubr.bf16.mxu0 0
      %1399 = vmatmul.mubr.bf16.gmra.mrb[0].mxu0 %v1316
      %v1400 = vpop.f32.mrb[0].mxu0
      %v1401 = vadd.f32 0.0, %v1400
      %v1402 = vpop.f32.mrb[0].mxu0
      %v1403 = vpop.f32.mrb[0].mxu0
      %v1404 = vadd.f32 0.0, %v1403
      %v1405 = vpop.f32.mrb[0].mxu0
      %1406 = vmatprep.mubr.bf16.mxu0 0
      %1407 = vmatmul.mubr.bf16.gmra.mrb[0].mxu0 %v1319
      %v1408 = vpop.f32.mrb[0].mxu0
      %v1409 = vadd.f32 0.0, %v1408
      %v1410 = vpop.f32.mrb[0].mxu0
      %v1411 = vpop.f32.mrb[0].mxu0
      %v1412 = vadd.f32 0.0, %v1411
      %v1413 = vpop.f32.mrb[0].mxu0
      %1414 = vmatprep.mubr.bf16.mxu0 0
      %1415 = vmatmul.mubr.bf16.gmra.mrb[0].mxu0 %v1322
      %v1416 = vpop.f32.mrb[0].mxu0
      %v1417 = vadd.f32 0.0, %v1416
      %v1418 = vpop.f32.mrb[0].mxu0
      %v1419 = vpop.f32.mrb[0].mxu0
      %v1420 = vadd.f32 0.0, %v1419
      %v1421 = vpop.f32.mrb[0].mxu0
      %1422 = vmatprep.mubr.bf16.mxu0 0
      %1423 = vmatmul.mubr.bf16.gmra.mrb[0].mxu0 %v1325
      %v1424 = vpop.f32.mrb[0].mxu0
      %v1425 = vadd.f32 0.0, %v1424
      %v1426 = vpop.f32.mrb[0].mxu0
      %v1427 = vpop.f32.mrb[0].mxu0
      %v1428 = vadd.f32 0.0, %v1427
      %v1429 = vpop.f32.mrb[0].mxu0
      %1430 = vmatprep.mubr.bf16.mxu0 0
      %1431 = vmatmul.mubr.bf16.gmra.mrb[0].mxu0 %v1328
      %v1432 = vpop.f32.mrb[0].mxu0
      %v1433 = vadd.f32 0.0, %v1432
      %v1434 = vpop.f32.mrb[0].mxu0
      %v1435 = vpop.f32.mrb[0].mxu0
      %v1436 = vadd.f32 0.0, %v1435
      %v1437 = vpop.f32.mrb[0].mxu0
      %1438 = vmatprep.mubr.bf16.mxu0 0
      %1439 = vmatmul.mubr.bf16.gmra.mrb[0].mxu0 %v1331
      %v1440 = vpop.f32.mrb[0].mxu0
      %v1441 = vadd.f32 0.0, %v1440
      %v1442 = vpop.f32.mrb[0].mxu0
      %v1443 = vpop.f32.mrb[0].mxu0
      %v1444 = vadd.f32 0.0, %v1443
      %v1445 = vpop.f32.mrb[0].mxu0
      %1446 = vmatprep.mubr.bf16.mxu0 0
      %1447 = vmatmul.mubr.bf16.gmra.mrb[0].mxu0 %v1334
      %v1448 = vpop.f32.mrb[0].mxu0
      %v1449 = vadd.f32 0.0, %v1448
      %v1450 = vpop.f32.mrb[0].mxu0
      %v1451 = vpop.f32.mrb[0].mxu0
      %v1452 = vadd.f32 0.0, %v1451
      %v1453 = vpop.f32.mrb[0].mxu0
      %1454 = vmatprep.mubr.bf16.mxu0 0
      %1455 = vmatmul.mubr.bf16.gmra.mrb[0].mxu0 %v1337
      %v1456 = vpop.f32.mrb[0].mxu0
      %v1457 = vadd.f32 0.0, %v1456
      %v1458 = vpop.f32.mrb[0].mxu0
      %v1459 = vpop.f32.mrb[0].mxu0
      %v1460 = vadd.f32 0.0, %v1459
      %v1461 = vpop.f32.mrb[0].mxu0
      %1462 = vmatprep.mubr.bf16.mxu0 0
      %1463 = vmatmul.mubr.bf16.gmra.mrb[0].mxu0 %v1340
      %v1464 = vpop.f32.mrb[0].mxu0
      %v1465 = vadd.f32 0.0, %v1464
      %v1466 = vpop.f32.mrb[0].mxu0
      %v1467 = vpop.f32.mrb[0].mxu0
      %v1468 = vadd.f32 0.0, %v1467
      %v1469 = vpop.f32.mrb[0].mxu0
      %1470 = vmatprep.mubr.bf16.mxu0 0
      %1471 = vmatmul.mubr.bf16.gmra.mrb[0].mxu0 %v1343
      %v1472 = vpop.f32.mrb[0].mxu0
      %v1473 = vadd.f32 0.0, %v1472
      %v1474 = vpop.f32.mrb[0].mxu0
      %v1475 = vpop.f32.mrb[0].mxu0
      %v1476 = vadd.f32 0.0, %v1475
      %v1477 = vpop.f32.mrb[0].mxu0
      %1478 = vmatprep.mubr.bf16.mxu0 0
      %1479 = vmatmul.mubr.bf16.gmra.mrb[0].mxu0 %v1346
      %v1480 = vpop.f32.mrb[0].mxu0
      %v1481 = vadd.f32 0.0, %v1480
      %v1482 = vpop.f32.mrb[0].mxu0
      %v1483 = vpop.f32.mrb[0].mxu0
      %v1484 = vadd.f32 0.0, %v1483
      %v1485 = vpop.f32.mrb[0].mxu0
      %1486 = vmatprep.mubr.bf16.mxu0 0
      %1487 = vmatmul.mubr.bf16.gmra.mrb[0].mxu0 %v1349
      %v1488 = vpop.f32.mrb[0].mxu0
      %v1489 = vadd.f32 0.0, %v1488
      %v1490 = vpop.f32.mrb[0].mxu0
      %v1491 = vpop.f32.mrb[0].mxu0
      %v1492 = vadd.f32 0.0, %v1491
      %v1493 = vpop.f32.mrb[0].mxu0
      %1494 = vmatprep.mubr.bf16.mxu0 0
      %1495 = vmatmul.mubr.bf16.gmra.mrb[0].mxu0 %v1352
      %v1496 = vpop.f32.mrb[0].mxu0
      %v1497 = vadd.f32 0.0, %v1496
      %v1498 = vpop.f32.mrb[0].mxu0
      %v1499 = vpop.f32.mrb[0].mxu0
      %v1500 = vadd.f32 0.0, %v1499
      %v1501 = vpop.f32.mrb[0].mxu0
      %1502 = vmatprep.mubr.bf16.mxu0 0
      %1503 = vmatmul.mubr.bf16.gmra.mrb[0].mxu0 %v1355
      %v1504 = vpop.f32.mrb[0].mxu0
      %v1505 = vadd.f32 0.0, %v1504
      %v1506 = vpop.f32.mrb[0].mxu0
      %v1507 = vpop.f32.mrb[0].mxu0
      %v1508 = vadd.f32 0.0, %v1507
      %v1509 = vpop.f32.mrb[0].mxu0
      %1510 = vmatprep.mubr.bf16.mxu0 0
      %1511 = vmatmul.mubr.bf16.gmra.mrb[0].mxu0 %v1358
      %v1512 = vpop.f32.mrb[0].mxu0
      %v1513 = vadd.f32 0.0, %v1512
      %v1514 = vpop.f32.mrb[0].mxu0
      %v1515 = vpop.f32.mrb[0].mxu0
      %v1516 = vadd.f32 0.0, %v1515
      %v1517 = vpop.f32.mrb[0].mxu0
      %1518 = vmatprep.mubr.bf16.mxu0 0
      %1519 = vmatmul.mubr.bf16.gmra.mrb[0].mxu0 %v1361
      %v1520 = vpop.f32.mrb[0].mxu0
      %v1521 = vadd.f32 0.0, %v1520
      %v1522 = vpop.f32.mrb[0].mxu0
      %v1523 = vpop.f32.mrb[0].mxu0
      %v1524 = vadd.f32 0.0, %v1523
      %v1525 = vpop.f32.mrb[0].mxu0
      %1526 = vdwg.mxu0
      %v1527 = vadd.f32 %v1139, %v1401
      %v1528 = vadd.f32 %v1142, %v1404
      %v1529 = vadd.f32 %v1147, %v1409
      %v1530 = vadd.f32 %v1150, %v1412
      %v1531 = vadd.f32 %v1155, %v1417
      %v1532 = vadd.f32 %v1158, %v1420
      %v1533 = vadd.f32 %v1163, %v1425
      %v1534 = vadd.f32 %v1166, %v1428
      %v1535 = vadd.f32 %v1171, %v1433
      %v1536 = vadd.f32 %v1174, %v1436
      %v1537 = vadd.f32 %v1179, %v1441
      %v1538 = vadd.f32 %v1182, %v1444
      %v1539 = vadd.f32 %v1187, %v1449
      %v1540 = vadd.f32 %v1190, %v1452
      %v1541 = vadd.f32 %v1195, %v1457
      %v1542 = vadd.f32 %v1198, %v1460
      %v1543 = vadd.f32 %v1203, %v1465
      %v1544 = vadd.f32 %v1206, %v1468
      %v1545 = vadd.f32 %v1211, %v1473
      %v1546 = vadd.f32 %v1214, %v1476
      %v1547 = vadd.f32 %v1219, %v1481
      %v1548 = vadd.f32 %v1222, %v1484
      %v1549 = vadd.f32 %v1227, %v1489
      %v1550 = vadd.f32 %v1230, %v1492
      %v1551 = vadd.f32 %v1235, %v1497
      %v1552 = vadd.f32 %v1238, %v1500
      %v1553 = vadd.f32 %v1243, %v1505
      %v1554 = vadd.f32 %v1246, %v1508
      %v1555 = vadd.f32 %v1251, %v1513
      %v1556 = vadd.f32 %v1254, %v1516
      %v1557 = vadd.f32 %v1259, %v1521
      %v1558 = vadd.f32 %v1262, %v1524
      %v1559 = vld [vmem:[%s708] sm:$0xff]
      %v1560 = vld [vmem:[%s708 + $0x8] sm:$0xff]
      %v1561 = vld [vmem:[%s708 + $0x18] sm:$0xff]
      %v1562 = vld [vmem:[%s708 + $0x20] sm:$0xff]
      %v1563 = vld [vmem:[%s708 + $0x30] sm:$0xff]
      %v1564 = vld [vmem:[%s708 + $0x38] sm:$0xff]
      %v1565 = vld [vmem:[%s708 + $0x48] sm:$0xff]
      %v1566 = vld [vmem:[%s708 + $0x50] sm:$0xff]
      %v1567 = vld [vmem:[%s708 + $0x60] sm:$0xff]
      %v1568 = vld [vmem:[%s708 + $0x68] sm:$0xff]
      %v1569 = vld [vmem:[%s708 + $0x78] sm:$0xff]
      %v1570 = vld [vmem:[%s708 + $0x80] sm:$0xff]
      %v1571 = vld [vmem:[%s708 + $0x90] sm:$0xff]
      %v1572 = vld [vmem:[%s708 + $0x98] sm:$0xff]
      %v1573 = vld [vmem:[%s708 + $0xa8] sm:$0xff]
      %v1574 = vld [vmem:[%s708 + $0xb0] sm:$0xff]
      %v1575 = vld [vmem:[%s708 + $0xc0] sm:$0xff]
      %v1576 = vld [vmem:[%s708 + $0xc8] sm:$0xff]
      %v1577 = vld [vmem:[%s708 + $0xd8] sm:$0xff]
      %v1578 = vld [vmem:[%s708 + $0xe0] sm:$0xff]
      %v1579 = vld [vmem:[%s708 + $0xf0] sm:$0xff]
      %v1580 = vld [vmem:[%s708 + $0xf8] sm:$0xff]
      %v1581 = vld [vmem:[%s708 + $0x108] sm:$0xff]
      %v1582 = vld [vmem:[%s708 + $0x110] sm:$0xff]
      %v1583 = vld [vmem:[%s708 + $0x120] sm:$0xff]
      %v1584 = vld [vmem:[%s708 + $0x128] sm:$0xff]
      %v1585 = vld [vmem:[%s708 + $0x138] sm:$0xff]
      %v1586 = vld [vmem:[%s708 + $0x140] sm:$0xff]
      %v1587 = vld [vmem:[%s708 + $0x150] sm:$0xff]
      %v1588 = vld [vmem:[%s708 + $0x158] sm:$0xff]
      %v1589 = vld [vmem:[%s708 + $0x168] sm:$0xff]
      %v1590 = vld [vmem:[%s708 + $0x170] sm:$0xff]
      %v1591 = vpack.c.bf16 %v1560, %v1559
      %v1592 = vpack.c.bf16 %v1562, %v1561
      %v1593 = vpack.c.bf16 %v1564, %v1563
      %v1594 = vpack.c.bf16 %v1566, %v1565
      %v1595 = vpack.c.bf16 %v1568, %v1567
      %v1596 = vpack.c.bf16 %v1570, %v1569
      %v1597 = vpack.c.bf16 %v1572, %v1571
      %v1598 = vpack.c.bf16 %v1574, %v1573
      %v1599 = vpack.c.bf16 %v1576, %v1575
      %v1600 = vpack.c.bf16 %v1578, %v1577
      %v1601 = vpack.c.bf16 %v1580, %v1579
      %v1602 = vpack.c.bf16 %v1582, %v1581
      %v1603 = vpack.c.bf16 %v1584, %v1583
      %v1604 = vpack.c.bf16 %v1586, %v1585
      %v1605 = vpack.c.bf16 %v1588, %v1587
      %v1606 = vpack.c.bf16 %v1590, %v1589
      %s1607 = scalar_lea.vmem %s2, 6
      %v1608 = vld [vmem:[%s1607] sm:$0x3]
      %v1610 = vsel %vm652, %v1591, 0
      %v1613 = vsel %vm652, %v1592, 0
      %v1616 = vsel %vm652, %v1593, 0
      %v1619 = vsel %vm652, %v1594, 0
      %v1622 = vsel %vm652, %v1595, 0
      %v1625 = vsel %vm652, %v1596, 0
      %v1628 = vsel %vm652, %v1597, 0
      %v1631 = vsel %vm652, %v1598, 0
      %v1634 = vsel %vm652, %v1599, 0
      %v1637 = vsel %vm652, %v1600, 0
      %v1640 = vsel %vm652, %v1601, 0
      %v1643 = vsel %vm652, %v1602, 0
      %v1646 = vsel %vm652, %v1603, 0
      %v1649 = vsel %vm652, %v1604, 0
      %v1652 = vsel %vm652, %v1605, 0
      %v1655 = vsel %vm652, %v1606, 0
      %v1658 = vsel %vm888, %v1608, 0
      %1660 = vmatprep.subr.bf16.mxu0 0
      %1661 = vmatpush1.bf16.msra.mxu0 %v1658
      %1662 = vmatprep.subr.bf16.mxu0 0
      %1663 = vmatpush1.bf16.msra.mxu0 0
      %1664 = vmatprep.subr.bf16.mxu0 0
      %1665 = vmatpush1.bf16.msra.mxu0 0
      %1666 = vmatprep.subr.bf16.mxu0 0
      %1667 = vmatpush1.bf16.msra.mxu0 0
      %1668 = vmatprep.subr.bf16.mxu0 0
      %1669 = vmatpush1.bf16.msra.mxu0 0
      %1670 = vmatprep.subr.bf16.mxu0 0
      %1671 = vmatpush1.bf16.msra.mxu0 0
      %1672 = vmatprep.subr.bf16.mxu0 0
      %1673 = vmatpush1.bf16.msra.mxu0 0
      %1674 = vmatprep.subr.bf16.mxu0 0
      %1675 = vmatpush1.bf16.msra.mxu0 0
      %1676 = vmatprep.subr.bf16.mxu0 0
      %1677 = vmatpush1.bf16.msra.mxu0 0
      %1678 = vmatprep.subr.bf16.mxu0 0
      %1679 = vmatpush1.bf16.msra.mxu0 0
      %1680 = vmatprep.subr.bf16.mxu0 0
      %1681 = vmatpush1.bf16.msra.mxu0 0
      %1682 = vmatprep.subr.bf16.mxu0 0
      %1683 = vmatpush1.bf16.msra.mxu0 0
      %1684 = vmatprep.subr.bf16.mxu0 0
      %1685 = vmatpush1.bf16.msra.mxu0 0
      %1686 = vmatprep.subr.bf16.mxu0 0
      %1687 = vmatpush1.bf16.msra.mxu0 0
      %1688 = vmatprep.subr.bf16.mxu0 0
      %1689 = vmatpush1.bf16.msra.mxu0 0
      %1690 = vmatprep.subr.bf16.mxu0 0
      %1691 = vmatpush1.bf16.msra.mxu0 0
      %1692 = vmatprep.mubr.bf16.mxu0 0
      %1693 = vmatmul.mubr.bf16.gmra.mrb[0].mxu0 %v1610
      %v1694 = vpop.f32.mrb[0].mxu0
      %v1695 = vadd.f32 0.0, %v1694
      %v1696 = vpop.f32.mrb[0].mxu0
      %v1697 = vpop.f32.mrb[0].mxu0
      %v1698 = vadd.f32 0.0, %v1697
      %v1699 = vpop.f32.mrb[0].mxu0
      %1700 = vmatprep.mubr.bf16.mxu0 0
      %1701 = vmatmul.mubr.bf16.gmra.mrb[0].mxu0 %v1613
      %v1702 = vpop.f32.mrb[0].mxu0
      %v1703 = vadd.f32 0.0, %v1702
      %v1704 = vpop.f32.mrb[0].mxu0
      %v1705 = vpop.f32.mrb[0].mxu0
      %v1706 = vadd.f32 0.0, %v1705
      %v1707 = vpop.f32.mrb[0].mxu0
      %1708 = vmatprep.mubr.bf16.mxu0 0
      %1709 = vmatmul.mubr.bf16.gmra.mrb[0].mxu0 %v1616
      %v1710 = vpop.f32.mrb[0].mxu0
      %v1711 = vadd.f32 0.0, %v1710
      %v1712 = vpop.f32.mrb[0].mxu0
      %v1713 = vpop.f32.mrb[0].mxu0
      %v1714 = vadd.f32 0.0, %v1713
      %v1715 = vpop.f32.mrb[0].mxu0
      %1716 = vmatprep.mubr.bf16.mxu0 0
      %1717 = vmatmul.mubr.bf16.gmra.mrb[0].mxu0 %v1619
      %v1718 = vpop.f32.mrb[0].mxu0
      %v1719 = vadd.f32 0.0, %v1718
      %v1720 = vpop.f32.mrb[0].mxu0
      %v1721 = vpop.f32.mrb[0].mxu0
      %v1722 = vadd.f32 0.0, %v1721
      %v1723 = vpop.f32.mrb[0].mxu0
      %1724 = vmatprep.mubr.bf16.mxu0 0
      %1725 = vmatmul.mubr.bf16.gmra.mrb[0].mxu0 %v1622
      %v1726 = vpop.f32.mrb[0].mxu0
      %v1727 = vadd.f32 0.0, %v1726
      %v1728 = vpop.f32.mrb[0].mxu0
      %v1729 = vpop.f32.mrb[0].mxu0
      %v1730 = vadd.f32 0.0, %v1729
      %v1731 = vpop.f32.mrb[0].mxu0
      %1732 = vmatprep.mubr.bf16.mxu0 0
      %1733 = vmatmul.mubr.bf16.gmra.mrb[0].mxu0 %v1625
      %v1734 = vpop.f32.mrb[0].mxu0
      %v1735 = vadd.f32 0.0, %v1734
      %v1736 = vpop.f32.mrb[0].mxu0
      %v1737 = vpop.f32.mrb[0].mxu0
      %v1738 = vadd.f32 0.0, %v1737
      %v1739 = vpop.f32.mrb[0].mxu0
      %1740 = vmatprep.mubr.bf16.mxu0 0
      %1741 = vmatmul.mubr.bf16.gmra.mrb[0].mxu0 %v1628
      %v1742 = vpop.f32.mrb[0].mxu0
      %v1743 = vadd.f32 0.0, %v1742
      %v1744 = vpop.f32.mrb[0].mxu0
      %v1745 = vpop.f32.mrb[0].mxu0
      %v1746 = vadd.f32 0.0, %v1745
      %v1747 = vpop.f32.mrb[0].mxu0
      %1748 = vmatprep.mubr.bf16.mxu0 0
      %1749 = vmatmul.mubr.bf16.gmra.mrb[0].mxu0 %v1631
      %v1750 = vpop.f32.mrb[0].mxu0
      %v1751 = vadd.f32 0.0, %v1750
      %v1752 = vpop.f32.mrb[0].mxu0
      %v1753 = vpop.f32.mrb[0].mxu0
      %v1754 = vadd.f32 0.0, %v1753
      %v1755 = vpop.f32.mrb[0].mxu0
      %1756 = vmatprep.mubr.bf16.mxu0 0
      %1757 = vmatmul.mubr.bf16.gmra.mrb[0].mxu0 %v1634
      %v1758 = vpop.f32.mrb[0].mxu0
      %v1759 = vadd.f32 0.0, %v1758
      %v1760 = vpop.f32.mrb[0].mxu0
      %v1761 = vpop.f32.mrb[0].mxu0
      %v1762 = vadd.f32 0.0, %v1761
      %v1763 = vpop.f32.mrb[0].mxu0
      %1764 = vmatprep.mubr.bf16.mxu0 0
      %1765 = vmatmul.mubr.bf16.gmra.mrb[0].mxu0 %v1637
      %v1766 = vpop.f32.mrb[0].mxu0
      %v1767 = vadd.f32 0.0, %v1766
      %v1768 = vpop.f32.mrb[0].mxu0
      %v1769 = vpop.f32.mrb[0].mxu0
      %v1770 = vadd.f32 0.0, %v1769
      %v1771 = vpop.f32.mrb[0].mxu0
      %1772 = vmatprep.mubr.bf16.mxu0 0
      %1773 = vmatmul.mubr.bf16.gmra.mrb[0].mxu0 %v1640
      %v1774 = vpop.f32.mrb[0].mxu0
      %v1775 = vadd.f32 0.0, %v1774
      %v1776 = vpop.f32.mrb[0].mxu0
      %v1777 = vpop.f32.mrb[0].mxu0
      %v1778 = vadd.f32 0.0, %v1777
      %v1779 = vpop.f32.mrb[0].mxu0
      %1780 = vmatprep.mubr.bf16.mxu0 0
      %1781 = vmatmul.mubr.bf16.gmra.mrb[0].mxu0 %v1643
      %v1782 = vpop.f32.mrb[0].mxu0
      %v1783 = vadd.f32 0.0, %v1782
      %v1784 = vpop.f32.mrb[0].mxu0
      %v1785 = vpop.f32.mrb[0].mxu0
      %v1786 = vadd.f32 0.0, %v1785
      %v1787 = vpop.f32.mrb[0].mxu0
      %1788 = vmatprep.mubr.bf16.mxu0 0
      %1789 = vmatmul.mubr.bf16.gmra.mrb[0].mxu0 %v1646
      %v1790 = vpop.f32.mrb[0].mxu0
      %v1791 = vadd.f32 0.0, %v1790
      %v1792 = vpop.f32.mrb[0].mxu0
      %v1793 = vpop.f32.mrb[0].mxu0
      %v1794 = vadd.f32 0.0, %v1793
      %v1795 = vpop.f32.mrb[0].mxu0
      %1796 = vmatprep.mubr.bf16.mxu0 0
      %1797 = vmatmul.mubr.bf16.gmra.mrb[0].mxu0 %v1649
      %v1798 = vpop.f32.mrb[0].mxu0
      %v1799 = vadd.f32 0.0, %v1798
      %v1800 = vpop.f32.mrb[0].mxu0
      %v1801 = vpop.f32.mrb[0].mxu0
      %v1802 = vadd.f32 0.0, %v1801
      %v1803 = vpop.f32.mrb[0].mxu0
      %1804 = vmatprep.mubr.bf16.mxu0 0
      %1805 = vmatmul.mubr.bf16.gmra.mrb[0].mxu0 %v1652
      %v1806 = vpop.f32.mrb[0].mxu0
      %v1807 = vadd.f32 0.0, %v1806
      %v1808 = vpop.f32.mrb[0].mxu0
      %v1809 = vpop.f32.mrb[0].mxu0
      %v1810 = vadd.f32 0.0, %v1809
      %v1811 = vpop.f32.mrb[0].mxu0
      %1812 = vmatprep.mubr.bf16.mxu0 0
      %1813 = vmatmul.mubr.bf16.gmra.mrb[0].mxu0 %v1655
      %v1814 = vpop.f32.mrb[0].mxu0
      %v1815 = vadd.f32 0.0, %v1814
      %v1816 = vpop.f32.mrb[0].mxu0
      %v1817 = vpop.f32.mrb[0].mxu0
      %v1818 = vadd.f32 0.0, %v1817
      %v1819 = vpop.f32.mrb[0].mxu0
      %1820 = vdwg.mxu0
      %v1821 = vadd.f32 %v1527, %v1695
      %v1822 = vadd.f32 %v1528, %v1698
      %v1823 = vadd.f32 %v1529, %v1703
      %v1824 = vadd.f32 %v1530, %v1706
      %v1825 = vadd.f32 %v1531, %v1711
      %v1826 = vadd.f32 %v1532, %v1714
      %v1827 = vadd.f32 %v1533, %v1719
      %v1828 = vadd.f32 %v1534, %v1722
      %v1829 = vadd.f32 %v1535, %v1727
      %v1830 = vadd.f32 %v1536, %v1730
      %v1831 = vadd.f32 %v1537, %v1735
      %v1832 = vadd.f32 %v1538, %v1738
      %v1833 = vadd.f32 %v1539, %v1743
      %v1834 = vadd.f32 %v1540, %v1746
      %v1835 = vadd.f32 %v1541, %v1751
      %v1836 = vadd.f32 %v1542, %v1754
      %v1837 = vadd.f32 %v1543, %v1759
      %v1838 = vadd.f32 %v1544, %v1762
      %v1839 = vadd.f32 %v1545, %v1767
      %v1840 = vadd.f32 %v1546, %v1770
      %v1841 = vadd.f32 %v1547, %v1775
      %v1842 = vadd.f32 %v1548, %v1778
      %v1843 = vadd.f32 %v1549, %v1783
      %v1844 = vadd.f32 %v1550, %v1786
      %v1845 = vadd.f32 %v1551, %v1791
      %v1846 = vadd.f32 %v1552, %v1794
      %v1847 = vadd.f32 %v1553, %v1799
      %v1848 = vadd.f32 %v1554, %v1802
      %v1849 = vadd.f32 %v1555, %v1807
      %v1850 = vadd.f32 %v1556, %v1810
      %v1851 = vadd.f32 %v1557, %v1815
      %v1852 = vadd.f32 %v1558, %v1818
      %v1853 = vld [vmem:[%s708 + $0x1] sm:$0xff]
      %v1854 = vld [vmem:[%s708 + $0x9] sm:$0xff]
      %v1855 = vld [vmem:[%s708 + $0x19] sm:$0xff]
      %v1856 = vld [vmem:[%s708 + $0x21] sm:$0xff]
      %v1857 = vld [vmem:[%s708 + $0x31] sm:$0xff]
      %v1858 = vld [vmem:[%s708 + $0x39] sm:$0xff]
      %v1859 = vld [vmem:[%s708 + $0x49] sm:$0xff]
      %v1860 = vld [vmem:[%s708 + $0x51] sm:$0xff]
      %v1861 = vld [vmem:[%s708 + $0x61] sm:$0xff]
      %v1862 = vld [vmem:[%s708 + $0x69] sm:$0xff]
      %v1863 = vld [vmem:[%s708 + $0x79] sm:$0xff]
      %v1864 = vld [vmem:[%s708 + $0x81] sm:$0xff]
      %v1865 = vld [vmem:[%s708 + $0x91] sm:$0xff]
      %v1866 = vld [vmem:[%s708 + $0x99] sm:$0xff]
      %v1867 = vld [vmem:[%s708 + $0xa9] sm:$0xff]
      %v1868 = vld [vmem:[%s708 + $0xb1] sm:$0xff]
      %v1869 = vld [vmem:[%s708 + $0xc1] sm:$0xff]
      %v1870 = vld [vmem:[%s708 + $0xc9] sm:$0xff]
      %v1871 = vld [vmem:[%s708 + $0xd9] sm:$0xff]
      %v1872 = vld [vmem:[%s708 + $0xe1] sm:$0xff]
      %v1873 = vld [vmem:[%s708 + $0xf1] sm:$0xff]
      %v1874 = vld [vmem:[%s708 + $0xf9] sm:$0xff]
      %v1875 = vld [vmem:[%s708 + $0x109] sm:$0xff]
      %v1876 = vld [vmem:[%s708 + $0x111] sm:$0xff]
      %v1877 = vld [vmem:[%s708 + $0x121] sm:$0xff]
      %v1878 = vld [vmem:[%s708 + $0x129] sm:$0xff]
      %v1879 = vld [vmem:[%s708 + $0x139] sm:$0xff]
      %v1880 = vld [vmem:[%s708 + $0x141] sm:$0xff]
      %v1881 = vld [vmem:[%s708 + $0x151] sm:$0xff]
      %v1882 = vld [vmem:[%s708 + $0x159] sm:$0xff]
      %v1883 = vld [vmem:[%s708 + $0x169] sm:$0xff]
      %v1884 = vld [vmem:[%s708 + $0x171] sm:$0xff]
      %v1885 = vpack.c.bf16 %v1854, %v1853
      %v1886 = vpack.c.bf16 %v1856, %v1855
      %v1887 = vpack.c.bf16 %v1858, %v1857
      %v1888 = vpack.c.bf16 %v1860, %v1859
      %v1889 = vpack.c.bf16 %v1862, %v1861
      %v1890 = vpack.c.bf16 %v1864, %v1863
      %v1891 = vpack.c.bf16 %v1866, %v1865
      %v1892 = vpack.c.bf16 %v1868, %v1867
      %v1893 = vpack.c.bf16 %v1870, %v1869
      %v1894 = vpack.c.bf16 %v1872, %v1871
      %v1895 = vpack.c.bf16 %v1874, %v1873
      %v1896 = vpack.c.bf16 %v1876, %v1875
      %v1897 = vpack.c.bf16 %v1878, %v1877
      %v1898 = vpack.c.bf16 %v1880, %v1879
      %v1899 = vpack.c.bf16 %v1882, %v1881
      %v1900 = vpack.c.bf16 %v1884, %v1883
      %s1901 = scalar_lea.vmem %s2, 8
      %v1902 = vld [vmem:[%s1901] sm:$0x3]
      %v1904 = vsel %vm652, %v1885, 0
      %v1907 = vsel %vm652, %v1886, 0
      %v1910 = vsel %vm652, %v1887, 0
      %v1913 = vsel %vm652, %v1888, 0
      %v1916 = vsel %vm652, %v1889, 0
      %v1919 = vsel %vm652, %v1890, 0
      %v1922 = vsel %vm652, %v1891, 0
      %v1925 = vsel %vm652, %v1892, 0
      %v1928 = vsel %vm652, %v1893, 0
      %v1931 = vsel %vm652, %v1894, 0
      %v1934 = vsel %vm652, %v1895, 0
      %v1937 = vsel %vm652, %v1896, 0
      %v1940 = vsel %vm652, %v1897, 0
      %v1943 = vsel %vm652, %v1898, 0
      %v1946 = vsel %vm652, %v1899, 0
      %v1949 = vsel %vm652, %v1900, 0
      %v1952 = vsel %vm888, %v1902, 0
      %1954 = vmatprep.subr.bf16.mxu0 0
      %1955 = vmatpush1.bf16.msra.mxu0 %v1952
      %1956 = vmatprep.subr.bf16.mxu0 0
      %1957 = vmatpush1.bf16.msra.mxu0 0
      %1958 = vmatprep.subr.bf16.mxu0 0
      %1959 = vmatpush1.bf16.msra.mxu0 0
      %1960 = vmatprep.subr.bf16.mxu0 0
      %1961 = vmatpush1.bf16.msra.mxu0 0
      %1962 = vmatprep.subr.bf16.mxu0 0
      %1963 = vmatpush1.bf16.msra.mxu0 0
      %1964 = vmatprep.subr.bf16.mxu0 0
      %1965 = vmatpush1.bf16.msra.mxu0 0
      %1966 = vmatprep.subr.bf16.mxu0 0
      %1967 = vmatpush1.bf16.msra.mxu0 0
      %1968 = vmatprep.subr.bf16.mxu0 0
      %1969 = vmatpush1.bf16.msra.mxu0 0
      %1970 = vmatprep.subr.bf16.mxu0 0
      %1971 = vmatpush1.bf16.msra.mxu0 0
      %1972 = vmatprep.subr.bf16.mxu0 0
      %1973 = vmatpush1.bf16.msra.mxu0 0
      %1974 = vmatprep.subr.bf16.mxu0 0
      %1975 = vmatpush1.bf16.msra.mxu0 0
      %1976 = vmatprep.subr.bf16.mxu0 0
      %1977 = vmatpush1.bf16.msra.mxu0 0
      %1978 = vmatprep.subr.bf16.mxu0 0
      %1979 = vmatpush1.bf16.msra.mxu0 0
      %1980 = vmatprep.subr.bf16.mxu0 0
      %1981 = vmatpush1.bf16.msra.mxu0 0
      %1982 = vmatprep.subr.bf16.mxu0 0
      %1983 = vmatpush1.bf16.msra.mxu0 0
      %1984 = vmatprep.subr.bf16.mxu0 0
      %1985 = vmatpush1.bf16.msra.mxu0 0
      %1986 = vmatprep.mubr.bf16.mxu0 0
      %1987 = vmatmul.mubr.bf16.gmra.mrb[0].mxu0 %v1904
      %v1988 = vpop.f32.mrb[0].mxu0
      %v1989 = vadd.f32 0.0, %v1988
      %v1990 = vpop.f32.mrb[0].mxu0
      %v1991 = vpop.f32.mrb[0].mxu0
      %v1992 = vadd.f32 0.0, %v1991
      %v1993 = vpop.f32.mrb[0].mxu0
      %1994 = vmatprep.mubr.bf16.mxu0 0
      %1995 = vmatmul.mubr.bf16.gmra.mrb[0].mxu0 %v1907
      %v1996 = vpop.f32.mrb[0].mxu0
      %v1997 = vadd.f32 0.0, %v1996
      %v1998 = vpop.f32.mrb[0].mxu0
      %v1999 = vpop.f32.mrb[0].mxu0
      %v2000 = vadd.f32 0.0, %v1999
      %v2001 = vpop.f32.mrb[0].mxu0
      %2002 = vmatprep.mubr.bf16.mxu0 0
      %2003 = vmatmul.mubr.bf16.gmra.mrb[0].mxu0 %v1910
      %v2004 = vpop.f32.mrb[0].mxu0
      %v2005 = vadd.f32 0.0, %v2004
      %v2006 = vpop.f32.mrb[0].mxu0
      %v2007 = vpop.f32.mrb[0].mxu0
      %v2008 = vadd.f32 0.0, %v2007
      %v2009 = vpop.f32.mrb[0].mxu0
      %2010 = vmatprep.mubr.bf16.mxu0 0
      %2011 = vmatmul.mubr.bf16.gmra.mrb[0].mxu0 %v1913
      %v2012 = vpop.f32.mrb[0].mxu0
      %v2013 = vadd.f32 0.0, %v2012
      %v2014 = vpop.f32.mrb[0].mxu0
      %v2015 = vpop.f32.mrb[0].mxu0
      %v2016 = vadd.f32 0.0, %v2015
      %v2017 = vpop.f32.mrb[0].mxu0
      %2018 = vmatprep.mubr.bf16.mxu0 0
      %2019 = vmatmul.mubr.bf16.gmra.mrb[0].mxu0 %v1916
      %v2020 = vpop.f32.mrb[0].mxu0
      %v2021 = vadd.f32 0.0, %v2020
      %v2022 = vpop.f32.mrb[0].mxu0
      %v2023 = vpop.f32.mrb[0].mxu0
      %v2024 = vadd.f32 0.0, %v2023
      %v2025 = vpop.f32.mrb[0].mxu0
      %2026 = vmatprep.mubr.bf16.mxu0 0
      %2027 = vmatmul.mubr.bf16.gmra.mrb[0].mxu0 %v1919
      %v2028 = vpop.f32.mrb[0].mxu0
      %v2029 = vadd.f32 0.0, %v2028
      %v2030 = vpop.f32.mrb[0].mxu0
      %v2031 = vpop.f32.mrb[0].mxu0
      %v2032 = vadd.f32 0.0, %v2031
      %v2033 = vpop.f32.mrb[0].mxu0
      %2034 = vmatprep.mubr.bf16.mxu0 0
      %2035 = vmatmul.mubr.bf16.gmra.mrb[0].mxu0 %v1922
      %v2036 = vpop.f32.mrb[0].mxu0
      %v2037 = vadd.f32 0.0, %v2036
      %v2038 = vpop.f32.mrb[0].mxu0
      %v2039 = vpop.f32.mrb[0].mxu0
      %v2040 = vadd.f32 0.0, %v2039
      %v2041 = vpop.f32.mrb[0].mxu0
      %2042 = vmatprep.mubr.bf16.mxu0 0
      %2043 = vmatmul.mubr.bf16.gmra.mrb[0].mxu0 %v1925
      %v2044 = vpop.f32.mrb[0].mxu0
      %v2045 = vadd.f32 0.0, %v2044
      %v2046 = vpop.f32.mrb[0].mxu0
      %v2047 = vpop.f32.mrb[0].mxu0
      %v2048 = vadd.f32 0.0, %v2047
      %v2049 = vpop.f32.mrb[0].mxu0
      %2050 = vmatprep.mubr.bf16.mxu0 0
      %2051 = vmatmul.mubr.bf16.gmra.mrb[0].mxu0 %v1928
      %v2052 = vpop.f32.mrb[0].mxu0
      %v2053 = vadd.f32 0.0, %v2052
      %v2054 = vpop.f32.mrb[0].mxu0
      %v2055 = vpop.f32.mrb[0].mxu0
      %v2056 = vadd.f32 0.0, %v2055
      %v2057 = vpop.f32.mrb[0].mxu0
      %2058 = vmatprep.mubr.bf16.mxu0 0
      %2059 = vmatmul.mubr.bf16.gmra.mrb[0].mxu0 %v1931
      %v2060 = vpop.f32.mrb[0].mxu0
      %v2061 = vadd.f32 0.0, %v2060
      %v2062 = vpop.f32.mrb[0].mxu0
      %v2063 = vpop.f32.mrb[0].mxu0
      %v2064 = vadd.f32 0.0, %v2063
      %v2065 = vpop.f32.mrb[0].mxu0
      %2066 = vmatprep.mubr.bf16.mxu0 0
      %2067 = vmatmul.mubr.bf16.gmra.mrb[0].mxu0 %v1934
      %v2068 = vpop.f32.mrb[0].mxu0
      %v2069 = vadd.f32 0.0, %v2068
      %v2070 = vpop.f32.mrb[0].mxu0
      %v2071 = vpop.f32.mrb[0].mxu0
      %v2072 = vadd.f32 0.0, %v2071
      %v2073 = vpop.f32.mrb[0].mxu0
      %2074 = vmatprep.mubr.bf16.mxu0 0
      %2075 = vmatmul.mubr.bf16.gmra.mrb[0].mxu0 %v1937
      %v2076 = vpop.f32.mrb[0].mxu0
      %v2077 = vadd.f32 0.0, %v2076
      %v2078 = vpop.f32.mrb[0].mxu0
      %v2079 = vpop.f32.mrb[0].mxu0
      %v2080 = vadd.f32 0.0, %v2079
      %v2081 = vpop.f32.mrb[0].mxu0
      %2082 = vmatprep.mubr.bf16.mxu0 0
      %2083 = vmatmul.mubr.bf16.gmra.mrb[0].mxu0 %v1940
      %v2084 = vpop.f32.mrb[0].mxu0
      %v2085 = vadd.f32 0.0, %v2084
      %v2086 = vpop.f32.mrb[0].mxu0
      %v2087 = vpop.f32.mrb[0].mxu0
      %v2088 = vadd.f32 0.0, %v2087
      %v2089 = vpop.f32.mrb[0].mxu0
      %2090 = vmatprep.mubr.bf16.mxu0 0
      %2091 = vmatmul.mubr.bf16.gmra.mrb[0].mxu0 %v1943
      %v2092 = vpop.f32.mrb[0].mxu0
      %v2093 = vadd.f32 0.0, %v2092
      %v2094 = vpop.f32.mrb[0].mxu0
      %v2095 = vpop.f32.mrb[0].mxu0
      %v2096 = vadd.f32 0.0, %v2095
      %v2097 = vpop.f32.mrb[0].mxu0
      %2098 = vmatprep.mubr.bf16.mxu0 0
      %2099 = vmatmul.mubr.bf16.gmra.mrb[0].mxu0 %v1946
      %v2100 = vpop.f32.mrb[0].mxu0
      %v2101 = vadd.f32 0.0, %v2100
      %v2102 = vpop.f32.mrb[0].mxu0
      %v2103 = vpop.f32.mrb[0].mxu0
      %v2104 = vadd.f32 0.0, %v2103
      %v2105 = vpop.f32.mrb[0].mxu0
      %2106 = vmatprep.mubr.bf16.mxu0 0
      %2107 = vmatmul.mubr.bf16.gmra.mrb[0].mxu0 %v1949
      %v2108 = vpop.f32.mrb[0].mxu0
      %v2109 = vadd.f32 0.0, %v2108
      %v2110 = vpop.f32.mrb[0].mxu0
      %v2111 = vpop.f32.mrb[0].mxu0
      %v2112 = vadd.f32 0.0, %v2111
      %v2113 = vpop.f32.mrb[0].mxu0
      %2114 = vdwg.mxu0
      %v2115 = vadd.f32 %v1821, %v1989
      %v2116 = vadd.f32 %v1822, %v1992
      %v2117 = vadd.f32 %v1823, %v1997
      %v2118 = vadd.f32 %v1824, %v2000
      %v2119 = vadd.f32 %v1825, %v2005
      %v2120 = vadd.f32 %v1826, %v2008
      %v2121 = vadd.f32 %v1827, %v2013
      %v2122 = vadd.f32 %v1828, %v2016
      %v2123 = vadd.f32 %v1829, %v2021
      %v2124 = vadd.f32 %v1830, %v2024
      %v2125 = vadd.f32 %v1831, %v2029
      %v2126 = vadd.f32 %v1832, %v2032
      %v2127 = vadd.f32 %v1833, %v2037
      %v2128 = vadd.f32 %v1834, %v2040
      %v2129 = vadd.f32 %v1835, %v2045
      %v2130 = vadd.f32 %v1836, %v2048
      %v2131 = vadd.f32 %v1837, %v2053
      %v2132 = vadd.f32 %v1838, %v2056
      %v2133 = vadd.f32 %v1839, %v2061
      %v2134 = vadd.f32 %v1840, %v2064
      %v2135 = vadd.f32 %v1841, %v2069
      %v2136 = vadd.f32 %v1842, %v2072
      %v2137 = vadd.f32 %v1843, %v2077
      %v2138 = vadd.f32 %v1844, %v2080
      %v2139 = vadd.f32 %v1845, %v2085
      %v2140 = vadd.f32 %v1846, %v2088
      %v2141 = vadd.f32 %v1847, %v2093
      %v2142 = vadd.f32 %v1848, %v2096
      %v2143 = vadd.f32 %v1849, %v2101
      %v2144 = vadd.f32 %v1850, %v2104
      %v2145 = vadd.f32 %v1851, %v2109
      %v2146 = vadd.f32 %v1852, %v2112
      %v2147 = vld [vmem:[%s708 + $0x2] sm:$0xff]
      %v2148 = vld [vmem:[%s708 + $0xa] sm:$0xff]
      %v2149 = vld [vmem:[%s708 + $0x1a] sm:$0xff]
      %v2150 = vld [vmem:[%s708 + $0x22] sm:$0xff]
      %v2151 = vld [vmem:[%s708 + $0x32] sm:$0xff]
      %v2152 = vld [vmem:[%s708 + $0x3a] sm:$0xff]
      %v2153 = vld [vmem:[%s708 + $0x4a] sm:$0xff]
      %v2154 = vld [vmem:[%s708 + $0x52] sm:$0xff]
      %v2155 = vld [vmem:[%s708 + $0x62] sm:$0xff]
      %v2156 = vld [vmem:[%s708 + $0x6a] sm:$0xff]
      %v2157 = vld [vmem:[%s708 + $0x7a] sm:$0xff]
      %v2158 = vld [vmem:[%s708 + $0x82] sm:$0xff]
      %v2159 = vld [vmem:[%s708 + $0x92] sm:$0xff]
      %v2160 = vld [vmem:[%s708 + $0x9a] sm:$0xff]
      %v2161 = vld [vmem:[%s708 + $0xaa] sm:$0xff]
      %v2162 = vld [vmem:[%s708 + $0xb2] sm:$0xff]
      %v2163 = vld [vmem:[%s708 + $0xc2] sm:$0xff]
      %v2164 = vld [vmem:[%s708 + $0xca] sm:$0xff]
      %v2165 = vld [vmem:[%s708 + $0xda] sm:$0xff]
      %v2166 = vld [vmem:[%s708 + $0xe2] sm:$0xff]
      %v2167 = vld [vmem:[%s708 + $0xf2] sm:$0xff]
      %v2168 = vld [vmem:[%s708 + $0xfa] sm:$0xff]
      %v2169 = vld [vmem:[%s708 + $0x10a] sm:$0xff]
      %v2170 = vld [vmem:[%s708 + $0x112] sm:$0xff]
      %v2171 = vld [vmem:[%s708 + $0x122] sm:$0xff]
      %v2172 = vld [vmem:[%s708 + $0x12a] sm:$0xff]
      %v2173 = vld [vmem:[%s708 + $0x13a] sm:$0xff]
      %v2174 = vld [vmem:[%s708 + $0x142] sm:$0xff]
      %v2175 = vld [vmem:[%s708 + $0x152] sm:$0xff]
      %v2176 = vld [vmem:[%s708 + $0x15a] sm:$0xff]
      %v2177 = vld [vmem:[%s708 + $0x16a] sm:$0xff]
      %v2178 = vld [vmem:[%s708 + $0x172] sm:$0xff]
      %v2179 = vpack.c.bf16 %v2148, %v2147
      %v2180 = vpack.c.bf16 %v2150, %v2149
      %v2181 = vpack.c.bf16 %v2152, %v2151
      %v2182 = vpack.c.bf16 %v2154, %v2153
      %v2183 = vpack.c.bf16 %v2156, %v2155
      %v2184 = vpack.c.bf16 %v2158, %v2157
      %v2185 = vpack.c.bf16 %v2160, %v2159
      %v2186 = vpack.c.bf16 %v2162, %v2161
      %v2187 = vpack.c.bf16 %v2164, %v2163
      %v2188 = vpack.c.bf16 %v2166, %v2165
      %v2189 = vpack.c.bf16 %v2168, %v2167
      %v2190 = vpack.c.bf16 %v2170, %v2169
      %v2191 = vpack.c.bf16 %v2172, %v2171
      %v2192 = vpack.c.bf16 %v2174, %v2173
      %v2193 = vpack.c.bf16 %v2176, %v2175
      %v2194 = vpack.c.bf16 %v2178, %v2177
      %s2195 = scalar_lea.vmem %s2, 10
      %v2196 = vld [vmem:[%s2195] sm:$0x3]
      %v2198 = vsel %vm652, %v2179, 0
      %v2201 = vsel %vm652, %v2180, 0
      %v2204 = vsel %vm652, %v2181, 0
      %v2207 = vsel %vm652, %v2182, 0
      %v2210 = vsel %vm652, %v2183, 0
      %v2213 = vsel %vm652, %v2184, 0
      %v2216 = vsel %vm652, %v2185, 0
      %v2219 = vsel %vm652, %v2186, 0
      %v2222 = vsel %vm652, %v2187, 0
      %v2225 = vsel %vm652, %v2188, 0
      %v2228 = vsel %vm652, %v2189, 0
      %v2231 = vsel %vm652, %v2190, 0
      %v2234 = vsel %vm652, %v2191, 0
      %v2237 = vsel %vm652, %v2192, 0
      %v2240 = vsel %vm652, %v2193, 0
      %v2243 = vsel %vm652, %v2194, 0
      %v2246 = vsel %vm888, %v2196, 0
      %2248 = vmatprep.subr.bf16.mxu0 0
      %2249 = vmatpush1.bf16.msra.mxu0 %v2246
      %2250 = vmatprep.subr.bf16.mxu0 0
      %2251 = vmatpush1.bf16.msra.mxu0 0
      %2252 = vmatprep.subr.bf16.mxu0 0
      %2253 = vmatpush1.bf16.msra.mxu0 0
      %2254 = vmatprep.subr.bf16.mxu0 0
      %2255 = vmatpush1.bf16.msra.mxu0 0
      %2256 = vmatprep.subr.bf16.mxu0 0
      %2257 = vmatpush1.bf16.msra.mxu0 0
      %2258 = vmatprep.subr.bf16.mxu0 0
      %2259 = vmatpush1.bf16.msra.mxu0 0
      %2260 = vmatprep.subr.bf16.mxu0 0
      %2261 = vmatpush1.bf16.msra.mxu0 0
      %2262 = vmatprep.subr.bf16.mxu0 0
      %2263 = vmatpush1.bf16.msra.mxu0 0
      %2264 = vmatprep.subr.bf16.mxu0 0
      %2265 = vmatpush1.bf16.msra.mxu0 0
      %2266 = vmatprep.subr.bf16.mxu0 0
      %2267 = vmatpush1.bf16.msra.mxu0 0
      %2268 = vmatprep.subr.bf16.mxu0 0
      %2269 = vmatpush1.bf16.msra.mxu0 0
      %2270 = vmatprep.subr.bf16.mxu0 0
      %2271 = vmatpush1.bf16.msra.mxu0 0
      %2272 = vmatprep.subr.bf16.mxu0 0
      %2273 = vmatpush1.bf16.msra.mxu0 0
      %2274 = vmatprep.subr.bf16.mxu0 0
      %2275 = vmatpush1.bf16.msra.mxu0 0
      %2276 = vmatprep.subr.bf16.mxu0 0
      %2277 = vmatpush1.bf16.msra.mxu0 0
      %2278 = vmatprep.subr.bf16.mxu0 0
      %2279 = vmatpush1.bf16.msra.mxu0 0
      %2280 = vmatprep.mubr.bf16.mxu0 0
      %2281 = vmatmul.mubr.bf16.gmra.mrb[0].mxu0 %v2198
      %v2282 = vpop.f32.mrb[0].mxu0
      %v2283 = vadd.f32 0.0, %v2282
      %v2284 = vpop.f32.mrb[0].mxu0
      %v2285 = vpop.f32.mrb[0].mxu0
      %v2286 = vadd.f32 0.0, %v2285
      %v2287 = vpop.f32.mrb[0].mxu0
      %2288 = vmatprep.mubr.bf16.mxu0 0
      %2289 = vmatmul.mubr.bf16.gmra.mrb[0].mxu0 %v2201
      %v2290 = vpop.f32.mrb[0].mxu0
      %v2291 = vadd.f32 0.0, %v2290
      %v2292 = vpop.f32.mrb[0].mxu0
      %v2293 = vpop.f32.mrb[0].mxu0
      %v2294 = vadd.f32 0.0, %v2293
      %v2295 = vpop.f32.mrb[0].mxu0
      %2296 = vmatprep.mubr.bf16.mxu0 0
      %2297 = vmatmul.mubr.bf16.gmra.mrb[0].mxu0 %v2204
      %v2298 = vpop.f32.mrb[0].mxu0
      %v2299 = vadd.f32 0.0, %v2298
      %v2300 = vpop.f32.mrb[0].mxu0
      %v2301 = vpop.f32.mrb[0].mxu0
      %v2302 = vadd.f32 0.0, %v2301
      %v2303 = vpop.f32.mrb[0].mxu0
      %2304 = vmatprep.mubr.bf16.mxu0 0
      %2305 = vmatmul.mubr.bf16.gmra.mrb[0].mxu0 %v2207
      %v2306 = vpop.f32.mrb[0].mxu0
      %v2307 = vadd.f32 0.0, %v2306
      %v2308 = vpop.f32.mrb[0].mxu0
      %v2309 = vpop.f32.mrb[0].mxu0
      %v2310 = vadd.f32 0.0, %v2309
      %v2311 = vpop.f32.mrb[0].mxu0
      %2312 = vmatprep.mubr.bf16.mxu0 0
      %2313 = vmatmul.mubr.bf16.gmra.mrb[0].mxu0 %v2210
      %v2314 = vpop.f32.mrb[0].mxu0
      %v2315 = vadd.f32 0.0, %v2314
      %v2316 = vpop.f32.mrb[0].mxu0
      %v2317 = vpop.f32.mrb[0].mxu0
      %v2318 = vadd.f32 0.0, %v2317
      %v2319 = vpop.f32.mrb[0].mxu0
      %2320 = vmatprep.mubr.bf16.mxu0 0
      %2321 = vmatmul.mubr.bf16.gmra.mrb[0].mxu0 %v2213
      %v2322 = vpop.f32.mrb[0].mxu0
      %v2323 = vadd.f32 0.0, %v2322
      %v2324 = vpop.f32.mrb[0].mxu0
      %v2325 = vpop.f32.mrb[0].mxu0
      %v2326 = vadd.f32 0.0, %v2325
      %v2327 = vpop.f32.mrb[0].mxu0
      %2328 = vmatprep.mubr.bf16.mxu0 0
      %2329 = vmatmul.mubr.bf16.gmra.mrb[0].mxu0 %v2216
      %v2330 = vpop.f32.mrb[0].mxu0
      %v2331 = vadd.f32 0.0, %v2330
      %v2332 = vpop.f32.mrb[0].mxu0
      %v2333 = vpop.f32.mrb[0].mxu0
      %v2334 = vadd.f32 0.0, %v2333
      %v2335 = vpop.f32.mrb[0].mxu0
      %2336 = vmatprep.mubr.bf16.mxu0 0
      %2337 = vmatmul.mubr.bf16.gmra.mrb[0].mxu0 %v2219
      %v2338 = vpop.f32.mrb[0].mxu0
      %v2339 = vadd.f32 0.0, %v2338
      %v2340 = vpop.f32.mrb[0].mxu0
      %v2341 = vpop.f32.mrb[0].mxu0
      %v2342 = vadd.f32 0.0, %v2341
      %v2343 = vpop.f32.mrb[0].mxu0
      %2344 = vmatprep.mubr.bf16.mxu0 0
      %2345 = vmatmul.mubr.bf16.gmra.mrb[0].mxu0 %v2222
      %v2346 = vpop.f32.mrb[0].mxu0
      %v2347 = vadd.f32 0.0, %v2346
      %v2348 = vpop.f32.mrb[0].mxu0
      %v2349 = vpop.f32.mrb[0].mxu0
      %v2350 = vadd.f32 0.0, %v2349
      %v2351 = vpop.f32.mrb[0].mxu0
      %2352 = vmatprep.mubr.bf16.mxu0 0
      %2353 = vmatmul.mubr.bf16.gmra.mrb[0].mxu0 %v2225
      %v2354 = vpop.f32.mrb[0].mxu0
      %v2355 = vadd.f32 0.0, %v2354
      %v2356 = vpop.f32.mrb[0].mxu0
      %v2357 = vpop.f32.mrb[0].mxu0
      %v2358 = vadd.f32 0.0, %v2357
      %v2359 = vpop.f32.mrb[0].mxu0
      %2360 = vmatprep.mubr.bf16.mxu0 0
      %2361 = vmatmul.mubr.bf16.gmra.mrb[0].mxu0 %v2228
      %v2362 = vpop.f32.mrb[0].mxu0
      %v2363 = vadd.f32 0.0, %v2362
      %v2364 = vpop.f32.mrb[0].mxu0
      %v2365 = vpop.f32.mrb[0].mxu0
      %v2366 = vadd.f32 0.0, %v2365
      %v2367 = vpop.f32.mrb[0].mxu0
      %2368 = vmatprep.mubr.bf16.mxu0 0
      %2369 = vmatmul.mubr.bf16.gmra.mrb[0].mxu0 %v2231
      %v2370 = vpop.f32.mrb[0].mxu0
      %v2371 = vadd.f32 0.0, %v2370
      %v2372 = vpop.f32.mrb[0].mxu0
      %v2373 = vpop.f32.mrb[0].mxu0
      %v2374 = vadd.f32 0.0, %v2373
      %v2375 = vpop.f32.mrb[0].mxu0
      %2376 = vmatprep.mubr.bf16.mxu0 0
      %2377 = vmatmul.mubr.bf16.gmra.mrb[0].mxu0 %v2234
      %v2378 = vpop.f32.mrb[0].mxu0
      %v2379 = vadd.f32 0.0, %v2378
      %v2380 = vpop.f32.mrb[0].mxu0
      %v2381 = vpop.f32.mrb[0].mxu0
      %v2382 = vadd.f32 0.0, %v2381
      %v2383 = vpop.f32.mrb[0].mxu0
      %2384 = vmatprep.mubr.bf16.mxu0 0
      %2385 = vmatmul.mubr.bf16.gmra.mrb[0].mxu0 %v2237
      %v2386 = vpop.f32.mrb[0].mxu0
      %v2387 = vadd.f32 0.0, %v2386
      %v2388 = vpop.f32.mrb[0].mxu0
      %v2389 = vpop.f32.mrb[0].mxu0
      %v2390 = vadd.f32 0.0, %v2389
      %v2391 = vpop.f32.mrb[0].mxu0
      %2392 = vmatprep.mubr.bf16.mxu0 0
      %2393 = vmatmul.mubr.bf16.gmra.mrb[0].mxu0 %v2240
      %v2394 = vpop.f32.mrb[0].mxu0
      %v2395 = vadd.f32 0.0, %v2394
      %v2396 = vpop.f32.mrb[0].mxu0
      %v2397 = vpop.f32.mrb[0].mxu0
      %v2398 = vadd.f32 0.0, %v2397
      %v2399 = vpop.f32.mrb[0].mxu0
      %2400 = vmatprep.mubr.bf16.mxu0 0
      %2401 = vmatmul.mubr.bf16.gmra.mrb[0].mxu0 %v2243
      %v2402 = vpop.f32.mrb[0].mxu0
      %v2403 = vadd.f32 0.0, %v2402
      %v2404 = vpop.f32.mrb[0].mxu0
      %v2405 = vpop.f32.mrb[0].mxu0
      %v2406 = vadd.f32 0.0, %v2405
      %v2407 = vpop.f32.mrb[0].mxu0
      %2408 = vdwg.mxu0
      %v2409 = vadd.f32 %v2115, %v2283
      %v2410 = vadd.f32 %v2116, %v2286
      %v2411 = vadd.f32 %v2117, %v2291
      %v2412 = vadd.f32 %v2118, %v2294
      %v2413 = vadd.f32 %v2119, %v2299
      %v2414 = vadd.f32 %v2120, %v2302
      %v2415 = vadd.f32 %v2121, %v2307
      %v2416 = vadd.f32 %v2122, %v2310
      %v2417 = vadd.f32 %v2123, %v2315
      %v2418 = vadd.f32 %v2124, %v2318
      %v2419 = vadd.f32 %v2125, %v2323
      %v2420 = vadd.f32 %v2126, %v2326
      %v2421 = vadd.f32 %v2127, %v2331
      %v2422 = vadd.f32 %v2128, %v2334
      %v2423 = vadd.f32 %v2129, %v2339
      %v2424 = vadd.f32 %v2130, %v2342
      %v2425 = vadd.f32 %v2131, %v2347
      %v2426 = vadd.f32 %v2132, %v2350
      %v2427 = vadd.f32 %v2133, %v2355
      %v2428 = vadd.f32 %v2134, %v2358
      %v2429 = vadd.f32 %v2135, %v2363
      %v2430 = vadd.f32 %v2136, %v2366
      %v2431 = vadd.f32 %v2137, %v2371
      %v2432 = vadd.f32 %v2138, %v2374
      %v2433 = vadd.f32 %v2139, %v2379
      %v2434 = vadd.f32 %v2140, %v2382
      %v2435 = vadd.f32 %v2141, %v2387
      %v2436 = vadd.f32 %v2142, %v2390
      %v2437 = vadd.f32 %v2143, %v2395
      %v2438 = vadd.f32 %v2144, %v2398
      %v2439 = vadd.f32 %v2145, %v2403
      %v2440 = vadd.f32 %v2146, %v2406
      %s2441 = scalar_lea.vmem [#allocation2], 48
      %v2442 = vld [vmem:[%s2441] sm:$0xff]
      %v2443 = vld [vmem:[%s2441 + $0x8] sm:$0xff]
      %v2444 = vld [vmem:[%s2441 + $0x18] sm:$0xff]
      %v2445 = vld [vmem:[%s2441 + $0x20] sm:$0xff]
      %v2446 = vld [vmem:[%s2441 + $0x30] sm:$0xff]
      %v2447 = vld [vmem:[%s2441 + $0x38] sm:$0xff]
      %v2448 = vld [vmem:[%s2441 + $0x48] sm:$0xff]
      %v2449 = vld [vmem:[%s2441 + $0x50] sm:$0xff]
      %v2450 = vld [vmem:[%s2441 + $0x60] sm:$0xff]
      %v2451 = vld [vmem:[%s2441 + $0x68] sm:$0xff]
      %v2452 = vld [vmem:[%s2441 + $0x78] sm:$0xff]
      %v2453 = vld [vmem:[%s2441 + $0x80] sm:$0xff]
      %v2454 = vld [vmem:[%s2441 + $0x90] sm:$0xff]
      %v2455 = vld [vmem:[%s2441 + $0x98] sm:$0xff]
      %v2456 = vld [vmem:[%s2441 + $0xa8] sm:$0xff]
      %v2457 = vld [vmem:[%s2441 + $0xb0] sm:$0xff]
      %v2458 = vld [vmem:[%s2441 + $0xc0] sm:$0xff]
      %v2459 = vld [vmem:[%s2441 + $0xc8] sm:$0xff]
      %v2460 = vld [vmem:[%s2441 + $0xd8] sm:$0xff]
      %v2461 = vld [vmem:[%s2441 + $0xe0] sm:$0xff]
      %v2462 = vld [vmem:[%s2441 + $0xf0] sm:$0xff]
      %v2463 = vld [vmem:[%s2441 + $0xf8] sm:$0xff]
      %v2464 = vld [vmem:[%s2441 + $0x108] sm:$0xff]
      %v2465 = vld [vmem:[%s2441 + $0x110] sm:$0xff]
      %v2466 = vld [vmem:[%s2441 + $0x120] sm:$0xff]
      %v2467 = vld [vmem:[%s2441 + $0x128] sm:$0xff]
      %v2468 = vld [vmem:[%s2441 + $0x138] sm:$0xff]
      %v2469 = vld [vmem:[%s2441 + $0x140] sm:$0xff]
      %v2470 = vld [vmem:[%s2441 + $0x150] sm:$0xff]
      %v2471 = vld [vmem:[%s2441 + $0x158] sm:$0xff]
      %v2472 = vld [vmem:[%s2441 + $0x168] sm:$0xff]
      %v2473 = vld [vmem:[%s2441 + $0x170] sm:$0xff]
      %v2474 = vpack.c.bf16 %v2443, %v2442
      %v2475 = vpack.c.bf16 %v2445, %v2444
      %v2476 = vpack.c.bf16 %v2447, %v2446
      %v2477 = vpack.c.bf16 %v2449, %v2448
      %v2478 = vpack.c.bf16 %v2451, %v2450
      %v2479 = vpack.c.bf16 %v2453, %v2452
      %v2480 = vpack.c.bf16 %v2455, %v2454
      %v2481 = vpack.c.bf16 %v2457, %v2456
      %v2482 = vpack.c.bf16 %v2459, %v2458
      %v2483 = vpack.c.bf16 %v2461, %v2460
      %v2484 = vpack.c.bf16 %v2463, %v2462
      %v2485 = vpack.c.bf16 %v2465, %v2464
      %v2486 = vpack.c.bf16 %v2467, %v2466
      %v2487 = vpack.c.bf16 %v2469, %v2468
      %v2488 = vpack.c.bf16 %v2471, %v2470
      %v2489 = vpack.c.bf16 %v2473, %v2472
      %s2490 = scalar_lea.vmem %s2, 12
      %v2491 = vld [vmem:[%s2490] sm:$0x3]
      %v2493 = vsel %vm652, %v2474, 0
      %v2496 = vsel %vm652, %v2475, 0
      %v2499 = vsel %vm652, %v2476, 0
      %v2502 = vsel %vm652, %v2477, 0
      %v2505 = vsel %vm652, %v2478, 0
      %v2508 = vsel %vm652, %v2479, 0
      %v2511 = vsel %vm652, %v2480, 0
      %v2514 = vsel %vm652, %v2481, 0
      %v2517 = vsel %vm652, %v2482, 0
      %v2520 = vsel %vm652, %v2483, 0
      %v2523 = vsel %vm652, %v2484, 0
      %v2526 = vsel %vm652, %v2485, 0
      %v2529 = vsel %vm652, %v2486, 0
      %v2532 = vsel %vm652, %v2487, 0
      %v2535 = vsel %vm652, %v2488, 0
      %v2538 = vsel %vm652, %v2489, 0
      %v2541 = vsel %vm888, %v2491, 0
      %2543 = vmatprep.subr.bf16.mxu0 0
      %2544 = vmatpush1.bf16.msra.mxu0 %v2541
      %2545 = vmatprep.subr.bf16.mxu0 0
      %2546 = vmatpush1.bf16.msra.mxu0 0
      %2547 = vmatprep.subr.bf16.mxu0 0
      %2548 = vmatpush1.bf16.msra.mxu0 0
      %2549 = vmatprep.subr.bf16.mxu0 0
      %2550 = vmatpush1.bf16.msra.mxu0 0
      %2551 = vmatprep.subr.bf16.mxu0 0
      %2552 = vmatpush1.bf16.msra.mxu0 0
      %2553 = vmatprep.subr.bf16.mxu0 0
      %2554 = vmatpush1.bf16.msra.mxu0 0
      %2555 = vmatprep.subr.bf16.mxu0 0
      %2556 = vmatpush1.bf16.msra.mxu0 0
      %2557 = vmatprep.subr.bf16.mxu0 0
      %2558 = vmatpush1.bf16.msra.mxu0 0
      %2559 = vmatprep.subr.bf16.mxu0 0
      %2560 = vmatpush1.bf16.msra.mxu0 0
      %2561 = vmatprep.subr.bf16.mxu0 0
      %2562 = vmatpush1.bf16.msra.mxu0 0
      %2563 = vmatprep.subr.bf16.mxu0 0
      %2564 = vmatpush1.bf16.msra.mxu0 0
      %2565 = vmatprep.subr.bf16.mxu0 0
      %2566 = vmatpush1.bf16.msra.mxu0 0
      %2567 = vmatprep.subr.bf16.mxu0 0
      %2568 = vmatpush1.bf16.msra.mxu0 0
      %2569 = vmatprep.subr.bf16.mxu0 0
      %2570 = vmatpush1.bf16.msra.mxu0 0
      %2571 = vmatprep.subr.bf16.mxu0 0
      %2572 = vmatpush1.bf16.msra.mxu0 0
      %2573 = vmatprep.subr.bf16.mxu0 0
      %2574 = vmatpush1.bf16.msra.mxu0 0
      %2575 = vmatprep.mubr.bf16.mxu0 0
      %2576 = vmatmul.mubr.bf16.gmra.mrb[0].mxu0 %v2493
      %v2577 = vpop.f32.mrb[0].mxu0
      %v2578 = vadd.f32 0.0, %v2577
      %v2579 = vpop.f32.mrb[0].mxu0
      %v2580 = vpop.f32.mrb[0].mxu0
      %v2581 = vadd.f32 0.0, %v2580
      %v2582 = vpop.f32.mrb[0].mxu0
      %2583 = vmatprep.mubr.bf16.mxu0 0
      %2584 = vmatmul.mubr.bf16.gmra.mrb[0].mxu0 %v2496
      %v2585 = vpop.f32.mrb[0].mxu0
      %v2586 = vadd.f32 0.0, %v2585
      %v2587 = vpop.f32.mrb[0].mxu0
      %v2588 = vpop.f32.mrb[0].mxu0
      %v2589 = vadd.f32 0.0, %v2588
      %v2590 = vpop.f32.mrb[0].mxu0
      %2591 = vmatprep.mubr.bf16.mxu0 0
      %2592 = vmatmul.mubr.bf16.gmra.mrb[0].mxu0 %v2499
      %v2593 = vpop.f32.mrb[0].mxu0
      %v2594 = vadd.f32 0.0, %v2593
      %v2595 = vpop.f32.mrb[0].mxu0
      %v2596 = vpop.f32.mrb[0].mxu0
      %v2597 = vadd.f32 0.0, %v2596
      %v2598 = vpop.f32.mrb[0].mxu0
      %2599 = vmatprep.mubr.bf16.mxu0 0
      %2600 = vmatmul.mubr.bf16.gmra.mrb[0].mxu0 %v2502
      %v2601 = vpop.f32.mrb[0].mxu0
      %v2602 = vadd.f32 0.0, %v2601
      %v2603 = vpop.f32.mrb[0].mxu0
      %v2604 = vpop.f32.mrb[0].mxu0
      %v2605 = vadd.f32 0.0, %v2604
      %v2606 = vpop.f32.mrb[0].mxu0
      %2607 = vmatprep.mubr.bf16.mxu0 0
      %2608 = vmatmul.mubr.bf16.gmra.mrb[0].mxu0 %v2505
      %v2609 = vpop.f32.mrb[0].mxu0
      %v2610 = vadd.f32 0.0, %v2609
      %v2611 = vpop.f32.mrb[0].mxu0
      %v2612 = vpop.f32.mrb[0].mxu0
      %v2613 = vadd.f32 0.0, %v2612
      %v2614 = vpop.f32.mrb[0].mxu0
      %2615 = vmatprep.mubr.bf16.mxu0 0
      %2616 = vmatmul.mubr.bf16.gmra.mrb[0].mxu0 %v2508
      %v2617 = vpop.f32.mrb[0].mxu0
      %v2618 = vadd.f32 0.0, %v2617
      %v2619 = vpop.f32.mrb[0].mxu0
      %v2620 = vpop.f32.mrb[0].mxu0
      %v2621 = vadd.f32 0.0, %v2620
      %v2622 = vpop.f32.mrb[0].mxu0
      %2623 = vmatprep.mubr.bf16.mxu0 0
      %2624 = vmatmul.mubr.bf16.gmra.mrb[0].mxu0 %v2511
      %v2625 = vpop.f32.mrb[0].mxu0
      %v2626 = vadd.f32 0.0, %v2625
      %v2627 = vpop.f32.mrb[0].mxu0
      %v2628 = vpop.f32.mrb[0].mxu0
      %v2629 = vadd.f32 0.0, %v2628
      %v2630 = vpop.f32.mrb[0].mxu0
      %2631 = vmatprep.mubr.bf16.mxu0 0
      %2632 = vmatmul.mubr.bf16.gmra.mrb[0].mxu0 %v2514
      %v2633 = vpop.f32.mrb[0].mxu0
      %v2634 = vadd.f32 0.0, %v2633
      %v2635 = vpop.f32.mrb[0].mxu0
      %v2636 = vpop.f32.mrb[0].mxu0
      %v2637 = vadd.f32 0.0, %v2636
      %v2638 = vpop.f32.mrb[0].mxu0
      %2639 = vmatprep.mubr.bf16.mxu0 0
      %2640 = vmatmul.mubr.bf16.gmra.mrb[0].mxu0 %v2517
      %v2641 = vpop.f32.mrb[0].mxu0
      %v2642 = vadd.f32 0.0, %v2641
      %v2643 = vpop.f32.mrb[0].mxu0
      %v2644 = vpop.f32.mrb[0].mxu0
      %v2645 = vadd.f32 0.0, %v2644
      %v2646 = vpop.f32.mrb[0].mxu0
      %2647 = vmatprep.mubr.bf16.mxu0 0
      %2648 = vmatmul.mubr.bf16.gmra.mrb[0].mxu0 %v2520
      %v2649 = vpop.f32.mrb[0].mxu0
      %v2650 = vadd.f32 0.0, %v2649
      %v2651 = vpop.f32.mrb[0].mxu0
      %v2652 = vpop.f32.mrb[0].mxu0
      %v2653 = vadd.f32 0.0, %v2652
      %v2654 = vpop.f32.mrb[0].mxu0
      %2655 = vmatprep.mubr.bf16.mxu0 0
      %2656 = vmatmul.mubr.bf16.gmra.mrb[0].mxu0 %v2523
      %v2657 = vpop.f32.mrb[0].mxu0
      %v2658 = vadd.f32 0.0, %v2657
      %v2659 = vpop.f32.mrb[0].mxu0
      %v2660 = vpop.f32.mrb[0].mxu0
      %v2661 = vadd.f32 0.0, %v2660
      %v2662 = vpop.f32.mrb[0].mxu0
      %2663 = vmatprep.mubr.bf16.mxu0 0
      %2664 = vmatmul.mubr.bf16.gmra.mrb[0].mxu0 %v2526
      %v2665 = vpop.f32.mrb[0].mxu0
      %v2666 = vadd.f32 0.0, %v2665
      %v2667 = vpop.f32.mrb[0].mxu0
      %v2668 = vpop.f32.mrb[0].mxu0
      %v2669 = vadd.f32 0.0, %v2668
      %v2670 = vpop.f32.mrb[0].mxu0
      %2671 = vmatprep.mubr.bf16.mxu0 0
      %2672 = vmatmul.mubr.bf16.gmra.mrb[0].mxu0 %v2529
      %v2673 = vpop.f32.mrb[0].mxu0
      %v2674 = vadd.f32 0.0, %v2673
      %v2675 = vpop.f32.mrb[0].mxu0
      %v2676 = vpop.f32.mrb[0].mxu0
      %v2677 = vadd.f32 0.0, %v2676
      %v2678 = vpop.f32.mrb[0].mxu0
      %2679 = vmatprep.mubr.bf16.mxu0 0
      %2680 = vmatmul.mubr.bf16.gmra.mrb[0].mxu0 %v2532
      %v2681 = vpop.f32.mrb[0].mxu0
      %v2682 = vadd.f32 0.0, %v2681
      %v2683 = vpop.f32.mrb[0].mxu0
      %v2684 = vpop.f32.mrb[0].mxu0
      %v2685 = vadd.f32 0.0, %v2684
      %v2686 = vpop.f32.mrb[0].mxu0
      %2687 = vmatprep.mubr.bf16.mxu0 0
      %2688 = vmatmul.mubr.bf16.gmra.mrb[0].mxu0 %v2535
      %v2689 = vpop.f32.mrb[0].mxu0
      %v2690 = vadd.f32 0.0, %v2689
      %v2691 = vpop.f32.mrb[0].mxu0
      %v2692 = vpop.f32.mrb[0].mxu0
      %v2693 = vadd.f32 0.0, %v2692
      %v2694 = vpop.f32.mrb[0].mxu0
      %2695 = vmatprep.mubr.bf16.mxu0 0
      %2696 = vmatmul.mubr.bf16.gmra.mrb[0].mxu0 %v2538
      %v2697 = vpop.f32.mrb[0].mxu0
      %v2698 = vadd.f32 0.0, %v2697
      %v2699 = vpop.f32.mrb[0].mxu0
      %v2700 = vpop.f32.mrb[0].mxu0
      %v2701 = vadd.f32 0.0, %v2700
      %v2702 = vpop.f32.mrb[0].mxu0
      %2703 = vdwg.mxu0
      %v2704 = vadd.f32 %v2409, %v2578
      %v2705 = vadd.f32 %v2410, %v2581
      %v2706 = vadd.f32 %v2411, %v2586
      %v2707 = vadd.f32 %v2412, %v2589
      %v2708 = vadd.f32 %v2413, %v2594
      %v2709 = vadd.f32 %v2414, %v2597
      %v2710 = vadd.f32 %v2415, %v2602
      %v2711 = vadd.f32 %v2416, %v2605
      %v2712 = vadd.f32 %v2417, %v2610
      %v2713 = vadd.f32 %v2418, %v2613
      %v2714 = vadd.f32 %v2419, %v2618
      %v2715 = vadd.f32 %v2420, %v2621
      %v2716 = vadd.f32 %v2421, %v2626
      %v2717 = vadd.f32 %v2422, %v2629
      %v2718 = vadd.f32 %v2423, %v2634
      %v2719 = vadd.f32 %v2424, %v2637
      %v2720 = vadd.f32 %v2425, %v2642
      %v2721 = vadd.f32 %v2426, %v2645
      %v2722 = vadd.f32 %v2427, %v2650
      %v2723 = vadd.f32 %v2428, %v2653
      %v2724 = vadd.f32 %v2429, %v2658
      %v2725 = vadd.f32 %v2430, %v2661
      %v2726 = vadd.f32 %v2431, %v2666
      %v2727 = vadd.f32 %v2432, %v2669
      %v2728 = vadd.f32 %v2433, %v2674
      %v2729 = vadd.f32 %v2434, %v2677
      %v2730 = vadd.f32 %v2435, %v2682
      %v2731 = vadd.f32 %v2436, %v2685
      %v2732 = vadd.f32 %v2437, %v2690
      %v2733 = vadd.f32 %v2438, %v2693
      %v2734 = vadd.f32 %v2439, %v2698
      %v2735 = vadd.f32 %v2440, %v2701
      %v2736 = vld [vmem:[%s2441 + $0x1] sm:$0xff]
      %v2737 = vld [vmem:[%s2441 + $0x9] sm:$0xff]
      %v2738 = vld [vmem:[%s2441 + $0x19] sm:$0xff]
      %v2739 = vld [vmem:[%s2441 + $0x21] sm:$0xff]
      %v2740 = vld [vmem:[%s2441 + $0x31] sm:$0xff]
      %v2741 = vld [vmem:[%s2441 + $0x39] sm:$0xff]
      %v2742 = vld [vmem:[%s2441 + $0x49] sm:$0xff]
      %v2743 = vld [vmem:[%s2441 + $0x51] sm:$0xff]
      %v2744 = vld [vmem:[%s2441 + $0x61] sm:$0xff]
      %v2745 = vld [vmem:[%s2441 + $0x69] sm:$0xff]
      %v2746 = vld [vmem:[%s2441 + $0x79] sm:$0xff]
      %v2747 = vld [vmem:[%s2441 + $0x81] sm:$0xff]
      %v2748 = vld [vmem:[%s2441 + $0x91] sm:$0xff]
      %v2749 = vld [vmem:[%s2441 + $0x99] sm:$0xff]
      %v2750 = vld [vmem:[%s2441 + $0xa9] sm:$0xff]
      %v2751 = vld [vmem:[%s2441 + $0xb1] sm:$0xff]
      %v2752 = vld [vmem:[%s2441 + $0xc1] sm:$0xff]
      %v2753 = vld [vmem:[%s2441 + $0xc9] sm:$0xff]
      %v2754 = vld [vmem:[%s2441 + $0xd9] sm:$0xff]
      %v2755 = vld [vmem:[%s2441 + $0xe1] sm:$0xff]
      %v2756 = vld [vmem:[%s2441 + $0xf1] sm:$0xff]
      %v2757 = vld [vmem:[%s2441 + $0xf9] sm:$0xff]
      %v2758 = vld [vmem:[%s2441 + $0x109] sm:$0xff]
      %v2759 = vld [vmem:[%s2441 + $0x111] sm:$0xff]
      %v2760 = vld [vmem:[%s2441 + $0x121] sm:$0xff]
      %v2761 = vld [vmem:[%s2441 + $0x129] sm:$0xff]
      %v2762 = vld [vmem:[%s2441 + $0x139] sm:$0xff]
      %v2763 = vld [vmem:[%s2441 + $0x141] sm:$0xff]
      %v2764 = vld [vmem:[%s2441 + $0x151] sm:$0xff]
      %v2765 = vld [vmem:[%s2441 + $0x159] sm:$0xff]
      %v2766 = vld [vmem:[%s2441 + $0x169] sm:$0xff]
      %v2767 = vld [vmem:[%s2441 + $0x171] sm:$0xff]
      %v2768 = vpack.c.bf16 %v2737, %v2736
      %v2769 = vpack.c.bf16 %v2739, %v2738
      %v2770 = vpack.c.bf16 %v2741, %v2740
      %v2771 = vpack.c.bf16 %v2743, %v2742
      %v2772 = vpack.c.bf16 %v2745, %v2744
      %v2773 = vpack.c.bf16 %v2747, %v2746
      %v2774 = vpack.c.bf16 %v2749, %v2748
      %v2775 = vpack.c.bf16 %v2751, %v2750
      %v2776 = vpack.c.bf16 %v2753, %v2752
      %v2777 = vpack.c.bf16 %v2755, %v2754
      %v2778 = vpack.c.bf16 %v2757, %v2756
      %v2779 = vpack.c.bf16 %v2759, %v2758
      %v2780 = vpack.c.bf16 %v2761, %v2760
      %v2781 = vpack.c.bf16 %v2763, %v2762
      %v2782 = vpack.c.bf16 %v2765, %v2764
      %v2783 = vpack.c.bf16 %v2767, %v2766
      %s2784 = scalar_lea.vmem %s2, 14
      %v2785 = vld [vmem:[%s2784] sm:$0x3]
      %v2787 = vsel %vm652, %v2768, 0
      %v2790 = vsel %vm652, %v2769, 0
      %v2793 = vsel %vm652, %v2770, 0
      %v2796 = vsel %vm652, %v2771, 0
      %v2799 = vsel %vm652, %v2772, 0
      %v2802 = vsel %vm652, %v2773, 0
      %v2805 = vsel %vm652, %v2774, 0
      %v2808 = vsel %vm652, %v2775, 0
      %v2811 = vsel %vm652, %v2776, 0
      %v2814 = vsel %vm652, %v2777, 0
      %v2817 = vsel %vm652, %v2778, 0
      %v2820 = vsel %vm652, %v2779, 0
      %v2823 = vsel %vm652, %v2780, 0
      %v2826 = vsel %vm652, %v2781, 0
      %v2829 = vsel %vm652, %v2782, 0
      %v2832 = vsel %vm652, %v2783, 0
      %v2835 = vsel %vm888, %v2785, 0
      %2837 = vmatprep.subr.bf16.mxu0 0
      %2838 = vmatpush1.bf16.msra.mxu0 %v2835
      %2839 = vmatprep.subr.bf16.mxu0 0
      %2840 = vmatpush1.bf16.msra.mxu0 0
      %2841 = vmatprep.subr.bf16.mxu0 0
      %2842 = vmatpush1.bf16.msra.mxu0 0
      %2843 = vmatprep.subr.bf16.mxu0 0
      %2844 = vmatpush1.bf16.msra.mxu0 0
      %2845 = vmatprep.subr.bf16.mxu0 0
      %2846 = vmatpush1.bf16.msra.mxu0 0
      %2847 = vmatprep.subr.bf16.mxu0 0
      %2848 = vmatpush1.bf16.msra.mxu0 0
      %2849 = vmatprep.subr.bf16.mxu0 0
      %2850 = vmatpush1.bf16.msra.mxu0 0
      %2851 = vmatprep.subr.bf16.mxu0 0
      %2852 = vmatpush1.bf16.msra.mxu0 0
      %2853 = vmatprep.subr.bf16.mxu0 0
      %2854 = vmatpush1.bf16.msra.mxu0 0
      %2855 = vmatprep.subr.bf16.mxu0 0
      %2856 = vmatpush1.bf16.msra.mxu0 0
      %2857 = vmatprep.subr.bf16.mxu0 0
      %2858 = vmatpush1.bf16.msra.mxu0 0
      %2859 = vmatprep.subr.bf16.mxu0 0
      %2860 = vmatpush1.bf16.msra.mxu0 0
      %2861 = vmatprep.subr.bf16.mxu0 0
      %2862 = vmatpush1.bf16.msra.mxu0 0
      %2863 = vmatprep.subr.bf16.mxu0 0
      %2864 = vmatpush1.bf16.msra.mxu0 0
      %2865 = vmatprep.subr.bf16.mxu0 0
      %2866 = vmatpush1.bf16.msra.mxu0 0
      %2867 = vmatprep.subr.bf16.mxu0 0
      %2868 = vmatpush1.bf16.msra.mxu0 0
      %2869 = vmatprep.mubr.bf16.mxu0 0
      %2870 = vmatmul.mubr.bf16.gmra.mrb[0].mxu0 %v2787
      %v2871 = vpop.f32.mrb[0].mxu0
      %v2872 = vadd.f32 0.0, %v2871
      %v2873 = vpop.f32.mrb[0].mxu0
      %v2874 = vpop.f32.mrb[0].mxu0
      %v2875 = vadd.f32 0.0, %v2874
      %v2876 = vpop.f32.mrb[0].mxu0
      %2877 = vmatprep.mubr.bf16.mxu0 0
      %2878 = vmatmul.mubr.bf16.gmra.mrb[0].mxu0 %v2790
      %v2879 = vpop.f32.mrb[0].mxu0
      %v2880 = vadd.f32 0.0, %v2879
      %v2881 = vpop.f32.mrb[0].mxu0
      %v2882 = vpop.f32.mrb[0].mxu0
      %v2883 = vadd.f32 0.0, %v2882
      %v2884 = vpop.f32.mrb[0].mxu0
      %2885 = vmatprep.mubr.bf16.mxu0 0
      %2886 = vmatmul.mubr.bf16.gmra.mrb[0].mxu0 %v2793
      %v2887 = vpop.f32.mrb[0].mxu0
      %v2888 = vadd.f32 0.0, %v2887
      %v2889 = vpop.f32.mrb[0].mxu0
      %v2890 = vpop.f32.mrb[0].mxu0
      %v2891 = vadd.f32 0.0, %v2890
      %v2892 = vpop.f32.mrb[0].mxu0
      %2893 = vmatprep.mubr.bf16.mxu0 0
      %2894 = vmatmul.mubr.bf16.gmra.mrb[0].mxu0 %v2796
      %v2895 = vpop.f32.mrb[0].mxu0
      %v2896 = vadd.f32 0.0, %v2895
      %v2897 = vpop.f32.mrb[0].mxu0
      %v2898 = vpop.f32.mrb[0].mxu0
      %v2899 = vadd.f32 0.0, %v2898
      %v2900 = vpop.f32.mrb[0].mxu0
      %2901 = vmatprep.mubr.bf16.mxu0 0
      %2902 = vmatmul.mubr.bf16.gmra.mrb[0].mxu0 %v2799
      %v2903 = vpop.f32.mrb[0].mxu0
      %v2904 = vadd.f32 0.0, %v2903
      %v2905 = vpop.f32.mrb[0].mxu0
      %v2906 = vpop.f32.mrb[0].mxu0
      %v2907 = vadd.f32 0.0, %v2906
      %v2908 = vpop.f32.mrb[0].mxu0
      %2909 = vmatprep.mubr.bf16.mxu0 0
      %2910 = vmatmul.mubr.bf16.gmra.mrb[0].mxu0 %v2802
      %v2911 = vpop.f32.mrb[0].mxu0
      %v2912 = vadd.f32 0.0, %v2911
      %v2913 = vpop.f32.mrb[0].mxu0
      %v2914 = vpop.f32.mrb[0].mxu0
      %v2915 = vadd.f32 0.0, %v2914
      %v2916 = vpop.f32.mrb[0].mxu0
      %2917 = vmatprep.mubr.bf16.mxu0 0
      %2918 = vmatmul.mubr.bf16.gmra.mrb[0].mxu0 %v2805
      %v2919 = vpop.f32.mrb[0].mxu0
      %v2920 = vadd.f32 0.0, %v2919
      %v2921 = vpop.f32.mrb[0].mxu0
      %v2922 = vpop.f32.mrb[0].mxu0
      %v2923 = vadd.f32 0.0, %v2922
      %v2924 = vpop.f32.mrb[0].mxu0
      %2925 = vmatprep.mubr.bf16.mxu0 0
      %2926 = vmatmul.mubr.bf16.gmra.mrb[0].mxu0 %v2808
      %v2927 = vpop.f32.mrb[0].mxu0
      %v2928 = vadd.f32 0.0, %v2927
      %v2929 = vpop.f32.mrb[0].mxu0
      %v2930 = vpop.f32.mrb[0].mxu0
      %v2931 = vadd.f32 0.0, %v2930
      %v2932 = vpop.f32.mrb[0].mxu0
      %2933 = vmatprep.mubr.bf16.mxu0 0
      %2934 = vmatmul.mubr.bf16.gmra.mrb[0].mxu0 %v2811
      %v2935 = vpop.f32.mrb[0].mxu0
      %v2936 = vadd.f32 0.0, %v2935
      %v2937 = vpop.f32.mrb[0].mxu0
      %v2938 = vpop.f32.mrb[0].mxu0
      %v2939 = vadd.f32 0.0, %v2938
      %v2940 = vpop.f32.mrb[0].mxu0
      %2941 = vmatprep.mubr.bf16.mxu0 0
      %2942 = vmatmul.mubr.bf16.gmra.mrb[0].mxu0 %v2814
      %v2943 = vpop.f32.mrb[0].mxu0
      %v2944 = vadd.f32 0.0, %v2943
      %v2945 = vpop.f32.mrb[0].mxu0
      %v2946 = vpop.f32.mrb[0].mxu0
      %v2947 = vadd.f32 0.0, %v2946
      %v2948 = vpop.f32.mrb[0].mxu0
      %2949 = vmatprep.mubr.bf16.mxu0 0
      %2950 = vmatmul.mubr.bf16.gmra.mrb[0].mxu0 %v2817
      %v2951 = vpop.f32.mrb[0].mxu0
      %v2952 = vadd.f32 0.0, %v2951
      %v2953 = vpop.f32.mrb[0].mxu0
      %v2954 = vpop.f32.mrb[0].mxu0
      %v2955 = vadd.f32 0.0, %v2954
      %v2956 = vpop.f32.mrb[0].mxu0
      %2957 = vmatprep.mubr.bf16.mxu0 0
      %2958 = vmatmul.mubr.bf16.gmra.mrb[0].mxu0 %v2820
      %v2959 = vpop.f32.mrb[0].mxu0
      %v2960 = vadd.f32 0.0, %v2959
      %v2961 = vpop.f32.mrb[0].mxu0
      %v2962 = vpop.f32.mrb[0].mxu0
      %v2963 = vadd.f32 0.0, %v2962
      %v2964 = vpop.f32.mrb[0].mxu0
      %2965 = vmatprep.mubr.bf16.mxu0 0
      %2966 = vmatmul.mubr.bf16.gmra.mrb[0].mxu0 %v2823
      %v2967 = vpop.f32.mrb[0].mxu0
      %v2968 = vadd.f32 0.0, %v2967
      %v2969 = vpop.f32.mrb[0].mxu0
      %v2970 = vpop.f32.mrb[0].mxu0
      %v2971 = vadd.f32 0.0, %v2970
      %v2972 = vpop.f32.mrb[0].mxu0
      %2973 = vmatprep.mubr.bf16.mxu0 0
      %2974 = vmatmul.mubr.bf16.gmra.mrb[0].mxu0 %v2826
      %v2975 = vpop.f32.mrb[0].mxu0
      %v2976 = vadd.f32 0.0, %v2975
      %v2977 = vpop.f32.mrb[0].mxu0
      %v2978 = vpop.f32.mrb[0].mxu0
      %v2979 = vadd.f32 0.0, %v2978
      %v2980 = vpop.f32.mrb[0].mxu0
      %2981 = vmatprep.mubr.bf16.mxu0 0
      %2982 = vmatmul.mubr.bf16.gmra.mrb[0].mxu0 %v2829
      %v2983 = vpop.f32.mrb[0].mxu0
      %v2984 = vadd.f32 0.0, %v2983
      %v2985 = vpop.f32.mrb[0].mxu0
      %v2986 = vpop.f32.mrb[0].mxu0
      %v2987 = vadd.f32 0.0, %v2986
      %v2988 = vpop.f32.mrb[0].mxu0
      %2989 = vmatprep.mubr.bf16.mxu0 0
      %2990 = vmatmul.mubr.bf16.gmra.mrb[0].mxu0 %v2832
      %v2991 = vpop.f32.mrb[0].mxu0
      %v2992 = vadd.f32 0.0, %v2991
      %v2993 = vpop.f32.mrb[0].mxu0
      %v2994 = vpop.f32.mrb[0].mxu0
      %v2995 = vadd.f32 0.0, %v2994
      %v2996 = vpop.f32.mrb[0].mxu0
      %2997 = vdwg.mxu0
      %v2998 = vadd.f32 %v2704, %v2872
      %v2999 = vadd.f32 %v2705, %v2875
      %v3000 = vadd.f32 %v2706, %v2880
      %v3001 = vadd.f32 %v2707, %v2883
      %v3002 = vadd.f32 %v2708, %v2888
      %v3003 = vadd.f32 %v2709, %v2891
      %v3004 = vadd.f32 %v2710, %v2896
      %v3005 = vadd.f32 %v2711, %v2899
      %v3006 = vadd.f32 %v2712, %v2904
      %v3007 = vadd.f32 %v2713, %v2907
      %v3008 = vadd.f32 %v2714, %v2912
      %v3009 = vadd.f32 %v2715, %v2915
      %v3010 = vadd.f32 %v2716, %v2920
      %v3011 = vadd.f32 %v2717, %v2923
      %v3012 = vadd.f32 %v2718, %v2928
      %v3013 = vadd.f32 %v2719, %v2931
      %v3014 = vadd.f32 %v2720, %v2936
      %v3015 = vadd.f32 %v2721, %v2939
      %v3016 = vadd.f32 %v2722, %v2944
      %v3017 = vadd.f32 %v2723, %v2947
      %v3018 = vadd.f32 %v2724, %v2952
      %v3019 = vadd.f32 %v2725, %v2955
      %v3020 = vadd.f32 %v2726, %v2960
      %v3021 = vadd.f32 %v2727, %v2963
      %v3022 = vadd.f32 %v2728, %v2968
      %v3023 = vadd.f32 %v2729, %v2971
      %v3024 = vadd.f32 %v2730, %v2976
      %v3025 = vadd.f32 %v2731, %v2979
      %v3026 = vadd.f32 %v2732, %v2984
      %v3027 = vadd.f32 %v2733, %v2987
      %v3028 = vadd.f32 %v2734, %v2992
      %v3029 = vadd.f32 %v2735, %v2995
      %v3030 = vld [vmem:[%s2441 + $0x2] sm:$0xff]
      %v3031 = vld [vmem:[%s2441 + $0xa] sm:$0xff]
      %v3032 = vld [vmem:[%s2441 + $0x1a] sm:$0xff]
      %v3033 = vld [vmem:[%s2441 + $0x22] sm:$0xff]
      %v3034 = vld [vmem:[%s2441 + $0x32] sm:$0xff]
      %v3035 = vld [vmem:[%s2441 + $0x3a] sm:$0xff]
      %v3036 = vld [vmem:[%s2441 + $0x4a] sm:$0xff]
      %v3037 = vld [vmem:[%s2441 + $0x52] sm:$0xff]
      %v3038 = vld [vmem:[%s2441 + $0x62] sm:$0xff]
      %v3039 = vld [vmem:[%s2441 + $0x6a] sm:$0xff]
      %v3040 = vld [vmem:[%s2441 + $0x7a] sm:$0xff]
      %v3041 = vld [vmem:[%s2441 + $0x82] sm:$0xff]
      %v3042 = vld [vmem:[%s2441 + $0x92] sm:$0xff]
      %v3043 = vld [vmem:[%s2441 + $0x9a] sm:$0xff]
      %v3044 = vld [vmem:[%s2441 + $0xaa] sm:$0xff]
      %v3045 = vld [vmem:[%s2441 + $0xb2] sm:$0xff]
      %v3046 = vld [vmem:[%s2441 + $0xc2] sm:$0xff]
      %v3047 = vld [vmem:[%s2441 + $0xca] sm:$0xff]
      %v3048 = vld [vmem:[%s2441 + $0xda] sm:$0xff]
      %v3049 = vld [vmem:[%s2441 + $0xe2] sm:$0xff]
      %v3050 = vld [vmem:[%s2441 + $0xf2] sm:$0xff]
      %v3051 = vld [vmem:[%s2441 + $0xfa] sm:$0xff]
      %v3052 = vld [vmem:[%s2441 + $0x10a] sm:$0xff]
      %v3053 = vld [vmem:[%s2441 + $0x112] sm:$0xff]
      %v3054 = vld [vmem:[%s2441 + $0x122] sm:$0xff]
      %v3055 = vld [vmem:[%s2441 + $0x12a] sm:$0xff]
      %v3056 = vld [vmem:[%s2441 + $0x13a] sm:$0xff]
      %v3057 = vld [vmem:[%s2441 + $0x142] sm:$0xff]
      %v3058 = vld [vmem:[%s2441 + $0x152] sm:$0xff]
      %v3059 = vld [vmem:[%s2441 + $0x15a] sm:$0xff]
      %v3060 = vld [vmem:[%s2441 + $0x16a] sm:$0xff]
      %v3061 = vld [vmem:[%s2441 + $0x172] sm:$0xff]
      %v3062 = vpack.c.bf16 %v3031, %v3030
      %v3063 = vpack.c.bf16 %v3033, %v3032
      %v3064 = vpack.c.bf16 %v3035, %v3034
      %v3065 = vpack.c.bf16 %v3037, %v3036
      %v3066 = vpack.c.bf16 %v3039, %v3038
      %v3067 = vpack.c.bf16 %v3041, %v3040
      %v3068 = vpack.c.bf16 %v3043, %v3042
      %v3069 = vpack.c.bf16 %v3045, %v3044
      %v3070 = vpack.c.bf16 %v3047, %v3046
      %v3071 = vpack.c.bf16 %v3049, %v3048
      %v3072 = vpack.c.bf16 %v3051, %v3050
      %v3073 = vpack.c.bf16 %v3053, %v3052
      %v3074 = vpack.c.bf16 %v3055, %v3054
      %v3075 = vpack.c.bf16 %v3057, %v3056
      %v3076 = vpack.c.bf16 %v3059, %v3058
      %v3077 = vpack.c.bf16 %v3061, %v3060
      %s3078 = scalar_lea.vmem %s2, 16
      %v3079 = vld [vmem:[%s3078] sm:$0x3]
      %v3081 = vsel %vm652, %v3062, 0
      %v3084 = vsel %vm652, %v3063, 0
      %v3087 = vsel %vm652, %v3064, 0
      %v3090 = vsel %vm652, %v3065, 0
      %v3093 = vsel %vm652, %v3066, 0
      %v3096 = vsel %vm652, %v3067, 0
      %v3099 = vsel %vm652, %v3068, 0
      %v3102 = vsel %vm652, %v3069, 0
      %v3105 = vsel %vm652, %v3070, 0
      %v3108 = vsel %vm652, %v3071, 0
      %v3111 = vsel %vm652, %v3072, 0
      %v3114 = vsel %vm652, %v3073, 0
      %v3117 = vsel %vm652, %v3074, 0
      %v3120 = vsel %vm652, %v3075, 0
      %v3123 = vsel %vm652, %v3076, 0
      %v3126 = vsel %vm652, %v3077, 0
      %v3129 = vsel %vm888, %v3079, 0
      %3131 = vmatprep.subr.bf16.mxu0 0
      %3132 = vmatpush1.bf16.msra.mxu0 %v3129
      %3133 = vmatprep.subr.bf16.mxu0 0
      %3134 = vmatpush1.bf16.msra.mxu0 0
      %3135 = vmatprep.subr.bf16.mxu0 0
      %3136 = vmatpush1.bf16.msra.mxu0 0
      %3137 = vmatprep.subr.bf16.mxu0 0
      %3138 = vmatpush1.bf16.msra.mxu0 0
      %3139 = vmatprep.subr.bf16.mxu0 0
      %3140 = vmatpush1.bf16.msra.mxu0 0
      %3141 = vmatprep.subr.bf16.mxu0 0
      %3142 = vmatpush1.bf16.msra.mxu0 0
      %3143 = vmatprep.subr.bf16.mxu0 0
      %3144 = vmatpush1.bf16.msra.mxu0 0
      %3145 = vmatprep.subr.bf16.mxu0 0
      %3146 = vmatpush1.bf16.msra.mxu0 0
      %3147 = vmatprep.subr.bf16.mxu0 0
      %3148 = vmatpush1.bf16.msra.mxu0 0
      %3149 = vmatprep.subr.bf16.mxu0 0
      %3150 = vmatpush1.bf16.msra.mxu0 0
      %3151 = vmatprep.subr.bf16.mxu0 0
      %3152 = vmatpush1.bf16.msra.mxu0 0
      %3153 = vmatprep.subr.bf16.mxu0 0
      %3154 = vmatpush1.bf16.msra.mxu0 0
      %3155 = vmatprep.subr.bf16.mxu0 0
      %3156 = vmatpush1.bf16.msra.mxu0 0
      %3157 = vmatprep.subr.bf16.mxu0 0
      %3158 = vmatpush1.bf16.msra.mxu0 0
      %3159 = vmatprep.subr.bf16.mxu0 0
      %3160 = vmatpush1.bf16.msra.mxu0 0
      %3161 = vmatprep.subr.bf16.mxu0 0
      %3162 = vmatpush1.bf16.msra.mxu0 0
      %3163 = vmatprep.mubr.bf16.mxu0 0
      %3164 = vmatmul.mubr.bf16.gmra.mrb[0].mxu0 %v3081
      %v3165 = vpop.f32.mrb[0].mxu0
      %v3166 = vadd.f32 0.0, %v3165
      %v3167 = vpop.f32.mrb[0].mxu0
      %v3168 = vpop.f32.mrb[0].mxu0
      %v3169 = vadd.f32 0.0, %v3168
      %v3170 = vpop.f32.mrb[0].mxu0
      %3171 = vmatprep.mubr.bf16.mxu0 0
      %3172 = vmatmul.mubr.bf16.gmra.mrb[0].mxu0 %v3084
      %v3173 = vpop.f32.mrb[0].mxu0
      %v3174 = vadd.f32 0.0, %v3173
      %v3175 = vpop.f32.mrb[0].mxu0
      %v3176 = vpop.f32.mrb[0].mxu0
      %v3177 = vadd.f32 0.0, %v3176
      %v3178 = vpop.f32.mrb[0].mxu0
      %3179 = vmatprep.mubr.bf16.mxu0 0
      %3180 = vmatmul.mubr.bf16.gmra.mrb[0].mxu0 %v3087
      %v3181 = vpop.f32.mrb[0].mxu0
      %v3182 = vadd.f32 0.0, %v3181
      %v3183 = vpop.f32.mrb[0].mxu0
      %v3184 = vpop.f32.mrb[0].mxu0
      %v3185 = vadd.f32 0.0, %v3184
      %v3186 = vpop.f32.mrb[0].mxu0
      %3187 = vmatprep.mubr.bf16.mxu0 0
      %3188 = vmatmul.mubr.bf16.gmra.mrb[0].mxu0 %v3090
      %v3189 = vpop.f32.mrb[0].mxu0
      %v3190 = vadd.f32 0.0, %v3189
      %v3191 = vpop.f32.mrb[0].mxu0
      %v3192 = vpop.f32.mrb[0].mxu0
      %v3193 = vadd.f32 0.0, %v3192
      %v3194 = vpop.f32.mrb[0].mxu0
      %3195 = vmatprep.mubr.bf16.mxu0 0
      %3196 = vmatmul.mubr.bf16.gmra.mrb[0].mxu0 %v3093
      %v3197 = vpop.f32.mrb[0].mxu0
      %v3198 = vadd.f32 0.0, %v3197
      %v3199 = vpop.f32.mrb[0].mxu0
      %v3200 = vpop.f32.mrb[0].mxu0
      %v3201 = vadd.f32 0.0, %v3200
      %v3202 = vpop.f32.mrb[0].mxu0
      %3203 = vmatprep.mubr.bf16.mxu0 0
      %3204 = vmatmul.mubr.bf16.gmra.mrb[0].mxu0 %v3096
      %v3205 = vpop.f32.mrb[0].mxu0
      %v3206 = vadd.f32 0.0, %v3205
      %v3207 = vpop.f32.mrb[0].mxu0
      %v3208 = vpop.f32.mrb[0].mxu0
      %v3209 = vadd.f32 0.0, %v3208
      %v3210 = vpop.f32.mrb[0].mxu0
      %3211 = vmatprep.mubr.bf16.mxu0 0
      %3212 = vmatmul.mubr.bf16.gmra.mrb[0].mxu0 %v3099
      %v3213 = vpop.f32.mrb[0].mxu0
      %v3214 = vadd.f32 0.0, %v3213
      %v3215 = vpop.f32.mrb[0].mxu0
      %v3216 = vpop.f32.mrb[0].mxu0
      %v3217 = vadd.f32 0.0, %v3216
      %v3218 = vpop.f32.mrb[0].mxu0
      %3219 = vmatprep.mubr.bf16.mxu0 0
      %3220 = vmatmul.mubr.bf16.gmra.mrb[0].mxu0 %v3102
      %v3221 = vpop.f32.mrb[0].mxu0
      %v3222 = vadd.f32 0.0, %v3221
      %v3223 = vpop.f32.mrb[0].mxu0
      %v3224 = vpop.f32.mrb[0].mxu0
      %v3225 = vadd.f32 0.0, %v3224
      %v3226 = vpop.f32.mrb[0].mxu0
      %3227 = vmatprep.mubr.bf16.mxu0 0
      %3228 = vmatmul.mubr.bf16.gmra.mrb[0].mxu0 %v3105
      %v3229 = vpop.f32.mrb[0].mxu0
      %v3230 = vadd.f32 0.0, %v3229
      %v3231 = vpop.f32.mrb[0].mxu0
      %v3232 = vpop.f32.mrb[0].mxu0
      %v3233 = vadd.f32 0.0, %v3232
      %v3234 = vpop.f32.mrb[0].mxu0
      %3235 = vmatprep.mubr.bf16.mxu0 0
      %3236 = vmatmul.mubr.bf16.gmra.mrb[0].mxu0 %v3108
      %v3237 = vpop.f32.mrb[0].mxu0
      %v3238 = vadd.f32 0.0, %v3237
      %v3239 = vpop.f32.mrb[0].mxu0
      %v3240 = vpop.f32.mrb[0].mxu0
      %v3241 = vadd.f32 0.0, %v3240
      %v3242 = vpop.f32.mrb[0].mxu0
      %3243 = vmatprep.mubr.bf16.mxu0 0
      %3244 = vmatmul.mubr.bf16.gmra.mrb[0].mxu0 %v3111
      %v3245 = vpop.f32.mrb[0].mxu0
      %v3246 = vadd.f32 0.0, %v3245
      %v3247 = vpop.f32.mrb[0].mxu0
      %v3248 = vpop.f32.mrb[0].mxu0
      %v3249 = vadd.f32 0.0, %v3248
      %v3250 = vpop.f32.mrb[0].mxu0
      %3251 = vmatprep.mubr.bf16.mxu0 0
      %3252 = vmatmul.mubr.bf16.gmra.mrb[0].mxu0 %v3114
      %v3253 = vpop.f32.mrb[0].mxu0
      %v3254 = vadd.f32 0.0, %v3253
      %v3255 = vpop.f32.mrb[0].mxu0
      %v3256 = vpop.f32.mrb[0].mxu0
      %v3257 = vadd.f32 0.0, %v3256
      %v3258 = vpop.f32.mrb[0].mxu0
      %3259 = vmatprep.mubr.bf16.mxu0 0
      %3260 = vmatmul.mubr.bf16.gmra.mrb[0].mxu0 %v3117
      %v3261 = vpop.f32.mrb[0].mxu0
      %v3262 = vadd.f32 0.0, %v3261
      %v3263 = vpop.f32.mrb[0].mxu0
      %v3264 = vpop.f32.mrb[0].mxu0
      %v3265 = vadd.f32 0.0, %v3264
      %v3266 = vpop.f32.mrb[0].mxu0
      %3267 = vmatprep.mubr.bf16.mxu0 0
      %3268 = vmatmul.mubr.bf16.gmra.mrb[0].mxu0 %v3120
      %v3269 = vpop.f32.mrb[0].mxu0
      %v3270 = vadd.f32 0.0, %v3269
      %v3271 = vpop.f32.mrb[0].mxu0
      %v3272 = vpop.f32.mrb[0].mxu0
      %v3273 = vadd.f32 0.0, %v3272
      %v3274 = vpop.f32.mrb[0].mxu0
      %3275 = vmatprep.mubr.bf16.mxu0 0
      %3276 = vmatmul.mubr.bf16.gmra.mrb[0].mxu0 %v3123
      %v3277 = vpop.f32.mrb[0].mxu0
      %v3278 = vadd.f32 0.0, %v3277
      %v3279 = vpop.f32.mrb[0].mxu0
      %v3280 = vpop.f32.mrb[0].mxu0
      %v3281 = vadd.f32 0.0, %v3280
      %v3282 = vpop.f32.mrb[0].mxu0
      %3283 = vmatprep.mubr.bf16.mxu0 0
      %3284 = vmatmul.mubr.bf16.gmra.mrb[0].mxu0 %v3126
      %v3285 = vpop.f32.mrb[0].mxu0
      %v3286 = vadd.f32 0.0, %v3285
      %v3287 = vpop.f32.mrb[0].mxu0
      %v3288 = vpop.f32.mrb[0].mxu0
      %v3289 = vadd.f32 0.0, %v3288
      %v3290 = vpop.f32.mrb[0].mxu0
      %3291 = vdwg.mxu0
      %v3292 = vadd.f32 %v2998, %v3166
      %v3293 = vadd.f32 %v2999, %v3169
      %v3294 = vadd.f32 %v3000, %v3174
      %v3295 = vadd.f32 %v3001, %v3177
      %v3296 = vadd.f32 %v3002, %v3182
      %v3297 = vadd.f32 %v3003, %v3185
      %v3298 = vadd.f32 %v3004, %v3190
      %v3299 = vadd.f32 %v3005, %v3193
      %v3300 = vadd.f32 %v3006, %v3198
      %v3301 = vadd.f32 %v3007, %v3201
      %v3302 = vadd.f32 %v3008, %v3206
      %v3303 = vadd.f32 %v3009, %v3209
      %v3304 = vadd.f32 %v3010, %v3214
      %v3305 = vadd.f32 %v3011, %v3217
      %v3306 = vadd.f32 %v3012, %v3222
      %v3307 = vadd.f32 %v3013, %v3225
      %v3308 = vadd.f32 %v3014, %v3230
      %v3309 = vadd.f32 %v3015, %v3233
      %v3310 = vadd.f32 %v3016, %v3238
      %v3311 = vadd.f32 %v3017, %v3241
      %v3312 = vadd.f32 %v3018, %v3246
      %v3313 = vadd.f32 %v3019, %v3249
      %v3314 = vadd.f32 %v3020, %v3254
      %v3315 = vadd.f32 %v3021, %v3257
      %v3316 = vadd.f32 %v3022, %v3262
      %v3317 = vadd.f32 %v3023, %v3265
      %v3318 = vadd.f32 %v3024, %v3270
      %v3319 = vadd.f32 %v3025, %v3273
      %v3320 = vadd.f32 %v3026, %v3278
      %v3321 = vadd.f32 %v3027, %v3281
      %v3322 = vadd.f32 %v3028, %v3286
      %v3323 = vadd.f32 %v3029, %v3289
      %v3324 = vld [vmem:[%s5] sm:$0x1]
      %v3325 = vlaneseq
      %v3326 = vshrl.u32 %v3325, 7
      %v3327 = vsub.s32 0, %v3326
      %v3328 = vrot.slane %v3324, %v3327
      %v3329 = vmul.f32 %v3292, %v3328
      %v3330 = vmul.f32 %v3293, %v3328
      %v3331 = vmul.f32 %v3294, %v3328
      %v3332 = vmul.f32 %v3295, %v3328
      %v3333 = vmul.f32 %v3296, %v3328
      %v3334 = vmul.f32 %v3297, %v3328
      %v3335 = vmul.f32 %v3298, %v3328
      %v3336 = vmul.f32 %v3299, %v3328
      %v3337 = vmul.f32 %v3300, %v3328
      %v3338 = vmul.f32 %v3301, %v3328
      %v3339 = vmul.f32 %v3302, %v3328
      %v3340 = vmul.f32 %v3303, %v3328
      %v3341 = vmul.f32 %v3304, %v3328
      %v3342 = vmul.f32 %v3305, %v3328
      %v3343 = vmul.f32 %v3306, %v3328
      %v3344 = vmul.f32 %v3307, %v3328
      %v3345 = vmul.f32 %v3308, %v3328
      %v3346 = vmul.f32 %v3309, %v3328
      %v3347 = vmul.f32 %v3310, %v3328
      %v3348 = vmul.f32 %v3311, %v3328
      %v3349 = vmul.f32 %v3312, %v3328
      %v3350 = vmul.f32 %v3313, %v3328
      %v3351 = vmul.f32 %v3314, %v3328
      %v3352 = vmul.f32 %v3315, %v3328
      %v3353 = vmul.f32 %v3316, %v3328
      %v3354 = vmul.f32 %v3317, %v3328
      %v3355 = vmul.f32 %v3318, %v3328
      %v3356 = vmul.f32 %v3319, %v3328
      %v3357 = vmul.f32 %v3320, %v3328
      %v3358 = vmul.f32 %v3321, %v3328
      %v3359 = vmul.f32 %v3322, %v3328
      %v3360 = vmul.f32 %v3323, %v3328
      %v3361 = vld [vmem:[%s5 + $0x1] sm:$0x1]
      %v3362 = vlaneseq
      %v3363 = vshrl.u32 %v3362, 7
      %v3364 = vsub.s32 0, %v3363
      %v3365 = vrot.slane %v3361, %v3364
      %v3366 = vadd.f32 %v3329, %v3365
      %v3367 = vadd.f32 %v3330, %v3365
      %v3368 = vadd.f32 %v3331, %v3365
      %v3369 = vadd.f32 %v3332, %v3365
      %v3370 = vadd.f32 %v3333, %v3365
      %v3371 = vadd.f32 %v3334, %v3365
      %v3372 = vadd.f32 %v3335, %v3365
      %v3373 = vadd.f32 %v3336, %v3365
      %v3374 = vadd.f32 %v3337, %v3365
      %v3375 = vadd.f32 %v3338, %v3365
      %v3376 = vadd.f32 %v3339, %v3365
      %v3377 = vadd.f32 %v3340, %v3365
      %v3378 = vadd.f32 %v3341, %v3365
      %v3379 = vadd.f32 %v3342, %v3365
      %v3380 = vadd.f32 %v3343, %v3365
      %v3381 = vadd.f32 %v3344, %v3365
      %v3382 = vadd.f32 %v3345, %v3365
      %v3383 = vadd.f32 %v3346, %v3365
      %v3384 = vadd.f32 %v3347, %v3365
      %v3385 = vadd.f32 %v3348, %v3365
      %v3386 = vadd.f32 %v3349, %v3365
      %v3387 = vadd.f32 %v3350, %v3365
      %v3388 = vadd.f32 %v3351, %v3365
      %v3389 = vadd.f32 %v3352, %v3365
      %v3390 = vadd.f32 %v3353, %v3365
      %v3391 = vadd.f32 %v3354, %v3365
      %v3392 = vadd.f32 %v3355, %v3365
      %v3393 = vadd.f32 %v3356, %v3365
      %v3394 = vadd.f32 %v3357, %v3365
      %v3395 = vadd.f32 %v3358, %v3365
      %v3396 = vadd.f32 %v3359, %v3365
      %v3397 = vadd.f32 %v3360, %v3365
      %v3398 = vmax.f32 %v3366, 0.0
      %v3399 = vmax.f32 %v3367, 0.0
      %v3400 = vmax.f32 %v3368, 0.0
      %v3401 = vmax.f32 %v3369, 0.0
      %v3402 = vmax.f32 %v3370, 0.0
      %v3403 = vmax.f32 %v3371, 0.0
      %v3404 = vmax.f32 %v3372, 0.0
      %v3405 = vmax.f32 %v3373, 0.0
      %v3406 = vmax.f32 %v3374, 0.0
      %v3407 = vmax.f32 %v3375, 0.0
      %v3408 = vmax.f32 %v3376, 0.0
      %v3409 = vmax.f32 %v3377, 0.0
      %v3410 = vmax.f32 %v3378, 0.0
      %v3411 = vmax.f32 %v3379, 0.0
      %v3412 = vmax.f32 %v3380, 0.0
      %v3413 = vmax.f32 %v3381, 0.0
      %v3414 = vmax.f32 %v3382, 0.0
      %v3415 = vmax.f32 %v3383, 0.0
      %v3416 = vmax.f32 %v3384, 0.0
      %v3417 = vmax.f32 %v3385, 0.0
      %v3418 = vmax.f32 %v3386, 0.0
      %v3419 = vmax.f32 %v3387, 0.0
      %v3420 = vmax.f32 %v3388, 0.0
      %v3421 = vmax.f32 %v3389, 0.0
      %v3422 = vmax.f32 %v3390, 0.0
      %v3423 = vmax.f32 %v3391, 0.0
      %v3424 = vmax.f32 %v3392, 0.0
      %v3425 = vmax.f32 %v3393, 0.0
      %v3426 = vmax.f32 %v3394, 0.0
      %v3427 = vmax.f32 %v3395, 0.0
      %v3428 = vmax.f32 %v3396, 0.0
      %v3429 = vmax.f32 %v3397, 0.0
      %v3430 = vpack.c.bf16 %v3399, %v3398
      %v3431 = vpack.c.bf16 %v3401, %v3400
      %v3432 = vpack.c.bf16 %v3403, %v3402
      %v3433 = vpack.c.bf16 %v3405, %v3404
      %v3434 = vpack.c.bf16 %v3407, %v3406
      %v3435 = vpack.c.bf16 %v3409, %v3408
      %v3436 = vpack.c.bf16 %v3411, %v3410
      %v3437 = vpack.c.bf16 %v3413, %v3412
      %v3438 = vpack.c.bf16 %v3415, %v3414
      %v3439 = vpack.c.bf16 %v3417, %v3416
      %v3440 = vpack.c.bf16 %v3419, %v3418
      %v3441 = vpack.c.bf16 %v3421, %v3420
      %v3442 = vpack.c.bf16 %v3423, %v3422
      %v3443 = vpack.c.bf16 %v3425, %v3424
      %v3444 = vpack.c.bf16 %v3427, %v3426
      %v3445 = vpack.c.bf16 %v3429, %v3428
      %v3446 = vld [vmem:[%s3] sm:$0x3]
      %v3448 = vsel %vm652, %v3430, 0
      %v3451 = vsel %vm652, %v3431, 0
      %v3454 = vsel %vm652, %v3432, 0
      %v3457 = vsel %vm652, %v3433, 0
      %v3460 = vsel %vm652, %v3434, 0
      %v3463 = vsel %vm652, %v3435, 0
      %v3466 = vsel %vm652, %v3436, 0
      %v3469 = vsel %vm652, %v3437, 0
      %v3472 = vsel %vm652, %v3438, 0
      %v3475 = vsel %vm652, %v3439, 0
      %v3478 = vsel %vm652, %v3440, 0
      %v3481 = vsel %vm652, %v3441, 0
      %v3484 = vsel %vm652, %v3442, 0
      %v3487 = vsel %vm652, %v3443, 0
      %v3490 = vsel %vm652, %v3444, 0
      %v3493 = vsel %vm652, %v3445, 0
      %v3496 = vsel %vm888, %v3446, 0
      %3498 = vmatprep.subr.bf16.mxu0 0
      %3499 = vmatpush1.bf16.msra.mxu0 %v3496
      %3500 = vmatprep.subr.bf16.mxu0 0
      %3501 = vmatpush1.bf16.msra.mxu0 0
      %3502 = vmatprep.subr.bf16.mxu0 0
      %3503 = vmatpush1.bf16.msra.mxu0 0
      %3504 = vmatprep.subr.bf16.mxu0 0
      %3505 = vmatpush1.bf16.msra.mxu0 0
      %3506 = vmatprep.subr.bf16.mxu0 0
      %3507 = vmatpush1.bf16.msra.mxu0 0
      %3508 = vmatprep.subr.bf16.mxu0 0
      %3509 = vmatpush1.bf16.msra.mxu0 0
      %3510 = vmatprep.subr.bf16.mxu0 0
      %3511 = vmatpush1.bf16.msra.mxu0 0
      %3512 = vmatprep.subr.bf16.mxu0 0
      %3513 = vmatpush1.bf16.msra.mxu0 0
      %3514 = vmatprep.subr.bf16.mxu0 0
      %3515 = vmatpush1.bf16.msra.mxu0 0
      %3516 = vmatprep.subr.bf16.mxu0 0
      %3517 = vmatpush1.bf16.msra.mxu0 0
      %3518 = vmatprep.subr.bf16.mxu0 0
      %3519 = vmatpush1.bf16.msra.mxu0 0
      %3520 = vmatprep.subr.bf16.mxu0 0
      %3521 = vmatpush1.bf16.msra.mxu0 0
      %3522 = vmatprep.subr.bf16.mxu0 0
      %3523 = vmatpush1.bf16.msra.mxu0 0
      %3524 = vmatprep.subr.bf16.mxu0 0
      %3525 = vmatpush1.bf16.msra.mxu0 0
      %3526 = vmatprep.subr.bf16.mxu0 0
      %3527 = vmatpush1.bf16.msra.mxu0 0
      %3528 = vmatprep.subr.bf16.mxu0 0
      %3529 = vmatpush1.bf16.msra.mxu0 0
      %3530 = vmatprep.mubr.bf16.mxu0 0
      %3531 = vmatmul.mubr.bf16.gmra.mrb[0].mxu0 %v3448
      %v3532 = vpop.f32.mrb[0].mxu0
      %v3533 = vadd.f32 0.0, %v3532
      %v3534 = vpop.f32.mrb[0].mxu0
      %v3535 = vpop.f32.mrb[0].mxu0
      %v3536 = vadd.f32 0.0, %v3535
      %v3537 = vpop.f32.mrb[0].mxu0
      %3538 = vmatprep.mubr.bf16.mxu0 0
      %3539 = vmatmul.mubr.bf16.gmra.mrb[0].mxu0 %v3451
      %v3540 = vpop.f32.mrb[0].mxu0
      %v3541 = vadd.f32 0.0, %v3540
      %v3542 = vpop.f32.mrb[0].mxu0
      %v3543 = vpop.f32.mrb[0].mxu0
      %v3544 = vadd.f32 0.0, %v3543
      %v3545 = vpop.f32.mrb[0].mxu0
      %3546 = vmatprep.mubr.bf16.mxu0 0
      %3547 = vmatmul.mubr.bf16.gmra.mrb[0].mxu0 %v3454
      %v3548 = vpop.f32.mrb[0].mxu0
      %v3549 = vadd.f32 0.0, %v3548
      %v3550 = vpop.f32.mrb[0].mxu0
      %v3551 = vpop.f32.mrb[0].mxu0
      %v3552 = vadd.f32 0.0, %v3551
      %v3553 = vpop.f32.mrb[0].mxu0
      %3554 = vmatprep.mubr.bf16.mxu0 0
      %3555 = vmatmul.mubr.bf16.gmra.mrb[0].mxu0 %v3457
      %v3556 = vpop.f32.mrb[0].mxu0
      %v3557 = vadd.f32 0.0, %v3556
      %v3558 = vpop.f32.mrb[0].mxu0
      %v3559 = vpop.f32.mrb[0].mxu0
      %v3560 = vadd.f32 0.0, %v3559
      %v3561 = vpop.f32.mrb[0].mxu0
      %3562 = vmatprep.mubr.bf16.mxu0 0
      %3563 = vmatmul.mubr.bf16.gmra.mrb[0].mxu0 %v3460
      %v3564 = vpop.f32.mrb[0].mxu0
      %v3565 = vadd.f32 0.0, %v3564
      %v3566 = vpop.f32.mrb[0].mxu0
      %v3567 = vpop.f32.mrb[0].mxu0
      %v3568 = vadd.f32 0.0, %v3567
      %v3569 = vpop.f32.mrb[0].mxu0
      %3570 = vmatprep.mubr.bf16.mxu0 0
      %3571 = vmatmul.mubr.bf16.gmra.mrb[0].mxu0 %v3463
      %v3572 = vpop.f32.mrb[0].mxu0
      %v3573 = vadd.f32 0.0, %v3572
      %v3574 = vpop.f32.mrb[0].mxu0
      %v3575 = vpop.f32.mrb[0].mxu0
      %v3576 = vadd.f32 0.0, %v3575
      %v3577 = vpop.f32.mrb[0].mxu0
      %3578 = vmatprep.mubr.bf16.mxu0 0
      %3579 = vmatmul.mubr.bf16.gmra.mrb[0].mxu0 %v3466
      %v3580 = vpop.f32.mrb[0].mxu0
      %v3581 = vadd.f32 0.0, %v3580
      %v3582 = vpop.f32.mrb[0].mxu0
      %v3583 = vpop.f32.mrb[0].mxu0
      %v3584 = vadd.f32 0.0, %v3583
      %v3585 = vpop.f32.mrb[0].mxu0
      %3586 = vmatprep.mubr.bf16.mxu0 0
      %3587 = vmatmul.mubr.bf16.gmra.mrb[0].mxu0 %v3469
      %v3588 = vpop.f32.mrb[0].mxu0
      %v3589 = vadd.f32 0.0, %v3588
      %v3590 = vpop.f32.mrb[0].mxu0
      %v3591 = vpop.f32.mrb[0].mxu0
      %v3592 = vadd.f32 0.0, %v3591
      %v3593 = vpop.f32.mrb[0].mxu0
      %3594 = vmatprep.mubr.bf16.mxu0 0
      %3595 = vmatmul.mubr.bf16.gmra.mrb[0].mxu0 %v3472
      %v3596 = vpop.f32.mrb[0].mxu0
      %v3597 = vadd.f32 0.0, %v3596
      %v3598 = vpop.f32.mrb[0].mxu0
      %v3599 = vpop.f32.mrb[0].mxu0
      %v3600 = vadd.f32 0.0, %v3599
      %v3601 = vpop.f32.mrb[0].mxu0
      %3602 = vmatprep.mubr.bf16.mxu0 0
      %3603 = vmatmul.mubr.bf16.gmra.mrb[0].mxu0 %v3475
      %v3604 = vpop.f32.mrb[0].mxu0
      %v3605 = vadd.f32 0.0, %v3604
      %v3606 = vpop.f32.mrb[0].mxu0
      %v3607 = vpop.f32.mrb[0].mxu0
      %v3608 = vadd.f32 0.0, %v3607
      %v3609 = vpop.f32.mrb[0].mxu0
      %3610 = vmatprep.mubr.bf16.mxu0 0
      %3611 = vmatmul.mubr.bf16.gmra.mrb[0].mxu0 %v3478
      %v3612 = vpop.f32.mrb[0].mxu0
      %v3613 = vadd.f32 0.0, %v3612
      %v3614 = vpop.f32.mrb[0].mxu0
      %v3615 = vpop.f32.mrb[0].mxu0
      %v3616 = vadd.f32 0.0, %v3615
      %v3617 = vpop.f32.mrb[0].mxu0
      %3618 = vmatprep.mubr.bf16.mxu0 0
      %3619 = vmatmul.mubr.bf16.gmra.mrb[0].mxu0 %v3481
      %v3620 = vpop.f32.mrb[0].mxu0
      %v3621 = vadd.f32 0.0, %v3620
      %v3622 = vpop.f32.mrb[0].mxu0
      %v3623 = vpop.f32.mrb[0].mxu0
      %v3624 = vadd.f32 0.0, %v3623
      %v3625 = vpop.f32.mrb[0].mxu0
      %3626 = vmatprep.mubr.bf16.mxu0 0
      %3627 = vmatmul.mubr.bf16.gmra.mrb[0].mxu0 %v3484
      %v3628 = vpop.f32.mrb[0].mxu0
      %v3629 = vadd.f32 0.0, %v3628
      %v3630 = vpop.f32.mrb[0].mxu0
      %v3631 = vpop.f32.mrb[0].mxu0
      %v3632 = vadd.f32 0.0, %v3631
      %v3633 = vpop.f32.mrb[0].mxu0
      %3634 = vmatprep.mubr.bf16.mxu0 0
      %3635 = vmatmul.mubr.bf16.gmra.mrb[0].mxu0 %v3487
      %v3636 = vpop.f32.mrb[0].mxu0
      %v3637 = vadd.f32 0.0, %v3636
      %v3638 = vpop.f32.mrb[0].mxu0
      %v3639 = vpop.f32.mrb[0].mxu0
      %v3640 = vadd.f32 0.0, %v3639
      %v3641 = vpop.f32.mrb[0].mxu0
      %3642 = vmatprep.mubr.bf16.mxu0 0
      %3643 = vmatmul.mubr.bf16.gmra.mrb[0].mxu0 %v3490
      %v3644 = vpop.f32.mrb[0].mxu0
      %v3645 = vadd.f32 0.0, %v3644
      %v3646 = vpop.f32.mrb[0].mxu0
      %v3647 = vpop.f32.mrb[0].mxu0
      %v3648 = vadd.f32 0.0, %v3647
      %v3649 = vpop.f32.mrb[0].mxu0
      %3650 = vmatprep.mubr.bf16.mxu0 0
      %3651 = vmatmul.mubr.bf16.gmra.mrb[0].mxu0 %v3493
      %v3652 = vpop.f32.mrb[0].mxu0
      %v3653 = vadd.f32 0.0, %v3652
      %v3654 = vpop.f32.mrb[0].mxu0
      %v3655 = vpop.f32.mrb[0].mxu0
      %v3656 = vadd.f32 0.0, %v3655
      %v3657 = vpop.f32.mrb[0].mxu0
      %3658 = vdwg.mxu0
      %v3659 = vld [vmem:[%s6] sm:$0x1]
      %v3660 = vlaneseq
      %v3661 = vshrl.u32 %v3660, 7
      %v3662 = vsub.s32 0, %v3661
      %v3663 = vrot.slane %v3659, %v3662
      %v3664 = vmul.f32 %v3533, %v3663
      %v3665 = vmul.f32 %v3536, %v3663
      %v3666 = vmul.f32 %v3541, %v3663
      %v3667 = vmul.f32 %v3544, %v3663
      %v3668 = vmul.f32 %v3549, %v3663
      %v3669 = vmul.f32 %v3552, %v3663
      %v3670 = vmul.f32 %v3557, %v3663
      %v3671 = vmul.f32 %v3560, %v3663
      %v3672 = vmul.f32 %v3565, %v3663
      %v3673 = vmul.f32 %v3568, %v3663
      %v3674 = vmul.f32 %v3573, %v3663
      %v3675 = vmul.f32 %v3576, %v3663
      %v3676 = vmul.f32 %v3581, %v3663
      %v3677 = vmul.f32 %v3584, %v3663
      %v3678 = vmul.f32 %v3589, %v3663
      %v3679 = vmul.f32 %v3592, %v3663
      %v3680 = vmul.f32 %v3597, %v3663
      %v3681 = vmul.f32 %v3600, %v3663
      %v3682 = vmul.f32 %v3605, %v3663
      %v3683 = vmul.f32 %v3608, %v3663
      %v3684 = vmul.f32 %v3613, %v3663
      %v3685 = vmul.f32 %v3616, %v3663
      %v3686 = vmul.f32 %v3621, %v3663
      %v3687 = vmul.f32 %v3624, %v3663
      %v3688 = vmul.f32 %v3629, %v3663
      %v3689 = vmul.f32 %v3632, %v3663
      %v3690 = vmul.f32 %v3637, %v3663
      %v3691 = vmul.f32 %v3640, %v3663
      %v3692 = vmul.f32 %v3645, %v3663
      %v3693 = vmul.f32 %v3648, %v3663
      %v3694 = vmul.f32 %v3653, %v3663
      %v3695 = vmul.f32 %v3656, %v3663
      %v3696 = vld [vmem:[%s6 + $0x1] sm:$0x1]
      %v3697 = vlaneseq
      %v3698 = vshrl.u32 %v3697, 7
      %v3699 = vsub.s32 0, %v3698
      %v3700 = vrot.slane %v3696, %v3699
      %v3701 = vadd.f32 %v3664, %v3700
      %v3702 = vadd.f32 %v3665, %v3700
      %v3703 = vadd.f32 %v3666, %v3700
      %v3704 = vadd.f32 %v3667, %v3700
      %v3705 = vadd.f32 %v3668, %v3700
      %v3706 = vadd.f32 %v3669, %v3700
      %v3707 = vadd.f32 %v3670, %v3700
      %v3708 = vadd.f32 %v3671, %v3700
      %v3709 = vadd.f32 %v3672, %v3700
      %v3710 = vadd.f32 %v3673, %v3700
      %v3711 = vadd.f32 %v3674, %v3700
      %v3712 = vadd.f32 %v3675, %v3700
      %v3713 = vadd.f32 %v3676, %v3700
      %v3714 = vadd.f32 %v3677, %v3700
      %v3715 = vadd.f32 %v3678, %v3700
      %v3716 = vadd.f32 %v3679, %v3700
      %v3717 = vadd.f32 %v3680, %v3700
      %v3718 = vadd.f32 %v3681, %v3700
      %v3719 = vadd.f32 %v3682, %v3700
      %v3720 = vadd.f32 %v3683, %v3700
      %v3721 = vadd.f32 %v3684, %v3700
      %v3722 = vadd.f32 %v3685, %v3700
      %v3723 = vadd.f32 %v3686, %v3700
      %v3724 = vadd.f32 %v3687, %v3700
      %v3725 = vadd.f32 %v3688, %v3700
      %v3726 = vadd.f32 %v3689, %v3700
      %v3727 = vadd.f32 %v3690, %v3700
      %v3728 = vadd.f32 %v3691, %v3700
      %v3729 = vadd.f32 %v3692, %v3700
      %v3730 = vadd.f32 %v3693, %v3700
      %v3731 = vadd.f32 %v3694, %v3700
      %v3732 = vadd.f32 %v3695, %v3700
      %v3733 = vadd.f32 %v3701, %v280
      %v3734 = vadd.f32 %v3702, %v281
      %v3735 = vadd.f32 %v3703, %v282
      %v3736 = vadd.f32 %v3704, %v283
      %v3737 = vadd.f32 %v3705, %v284
      %v3738 = vadd.f32 %v3706, %v285
      %v3739 = vadd.f32 %v3707, %v286
      %v3740 = vadd.f32 %v3708, %v287
      %v3741 = vadd.f32 %v3709, %v288
      %v3742 = vadd.f32 %v3710, %v289
      %v3743 = vadd.f32 %v3711, %v290
      %v3744 = vadd.f32 %v3712, %v291
      %v3745 = vadd.f32 %v3713, %v292
      %v3746 = vadd.f32 %v3714, %v293
      %v3747 = vadd.f32 %v3715, %v294
      %v3748 = vadd.f32 %v3716, %v295
      %v3749 = vadd.f32 %v3717, %v296
      %v3750 = vadd.f32 %v3718, %v297
      %v3751 = vadd.f32 %v3719, %v298
      %v3752 = vadd.f32 %v3720, %v299
      %v3753 = vadd.f32 %v3721, %v300
      %v3754 = vadd.f32 %v3722, %v301
      %v3755 = vadd.f32 %v3723, %v302
      %v3756 = vadd.f32 %v3724, %v303
      %v3757 = vadd.f32 %v3725, %v304
      %v3758 = vadd.f32 %v3726, %v305
      %v3759 = vadd.f32 %v3727, %v306
      %v3760 = vadd.f32 %v3728, %v307
      %v3761 = vadd.f32 %v3729, %v308
      %v3762 = vadd.f32 %v3730, %v309
      %v3763 = vadd.f32 %v3731, %v310
      %v3764 = vadd.f32 %v3732, %v311
      %v3765 = vmax.f32 %v3733, 0.0
      %v3766 = vmax.f32 %v3734, 0.0
      %v3767 = vmax.f32 %v3735, 0.0
      %v3768 = vmax.f32 %v3736, 0.0
      %v3769 = vmax.f32 %v3737, 0.0
      %v3770 = vmax.f32 %v3738, 0.0
      %v3771 = vmax.f32 %v3739, 0.0
      %v3772 = vmax.f32 %v3740, 0.0
      %v3773 = vmax.f32 %v3741, 0.0
      %v3774 = vmax.f32 %v3742, 0.0
      %v3775 = vmax.f32 %v3743, 0.0
      %v3776 = vmax.f32 %v3744, 0.0
      %v3777 = vmax.f32 %v3745, 0.0
      %v3778 = vmax.f32 %v3746, 0.0
      %v3779 = vmax.f32 %v3747, 0.0
      %v3780 = vmax.f32 %v3748, 0.0
      %v3781 = vmax.f32 %v3749, 0.0
      %v3782 = vmax.f32 %v3750, 0.0
      %v3783 = vmax.f32 %v3751, 0.0
      %v3784 = vmax.f32 %v3752, 0.0
      %v3785 = vmax.f32 %v3753, 0.0
      %v3786 = vmax.f32 %v3754, 0.0
      %v3787 = vmax.f32 %v3755, 0.0
      %v3788 = vmax.f32 %v3756, 0.0
      %v3789 = vmax.f32 %v3757, 0.0
      %v3790 = vmax.f32 %v3758, 0.0
      %v3791 = vmax.f32 %v3759, 0.0
      %v3792 = vmax.f32 %v3760, 0.0
      %v3793 = vmax.f32 %v3761, 0.0
      %v3794 = vmax.f32 %v3762, 0.0
      %v3795 = vmax.f32 %v3763, 0.0
      %v3796 = vmax.f32 %v3764, 0.0
      %3797 = vst.msk [vmem:[%s278] sm:$0xff] %vm336, %v3765
      %3798 = vst.msk [vmem:[%s278 + $0x8] sm:$0xff] %vm336, %v3766
      %3799 = vst.msk [vmem:[%s278 + $0x10] sm:$0xff] %vm336, %v3767
      %3800 = vst.msk [vmem:[%s278 + $0x18] sm:$0xff] %vm336, %v3768
      %3801 = vst.msk [vmem:[%s278 + $0x20] sm:$0xff] %vm336, %v3769
      %3802 = vst.msk [vmem:[%s278 + $0x28] sm:$0xff] %vm336, %v3770
      %3803 = vst.msk [vmem:[%s278 + $0x30] sm:$0xff] %vm336, %v3771
      %3804 = vst.msk [vmem:[%s278 + $0x38] sm:$0xff] %vm336, %v3772
      %3805 = vst.msk [vmem:[%s278 + $0x40] sm:$0xff] %vm336, %v3773
      %3806 = vst.msk [vmem:[%s278 + $0x48] sm:$0xff] %vm336, %v3774
      %3807 = vst.msk [vmem:[%s278 + $0x50] sm:$0xff] %vm336, %v3775
      %3808 = vst.msk [vmem:[%s278 + $0x58] sm:$0xff] %vm336, %v3776
      %3809 = vst.msk [vmem:[%s278 + $0x60] sm:$0xff] %vm336, %v3777
      %3810 = vst.msk [vmem:[%s278 + $0x68] sm:$0xff] %vm336, %v3778
      %3811 = vst.msk [vmem:[%s278 + $0x70] sm:$0xff] %vm336, %v3779
      %3812 = vst.msk [vmem:[%s278 + $0x78] sm:$0xff] %vm336, %v3780
      %3813 = vst.msk [vmem:[%s278 + $0x80] sm:$0xff] %vm336, %v3781
      %3814 = vst.msk [vmem:[%s278 + $0x88] sm:$0xff] %vm336, %v3782
      %3815 = vst.msk [vmem:[%s278 + $0x90] sm:$0xff] %vm336, %v3783
      %3816 = vst.msk [vmem:[%s278 + $0x98] sm:$0xff] %vm336, %v3784
      %3817 = vst.msk [vmem:[%s278 + $0xa0] sm:$0xff] %vm336, %v3785
      %3818 = vst.msk [vmem:[%s278 + $0xa8] sm:$0xff] %vm336, %v3786
      %3819 = vst.msk [vmem:[%s278 + $0xb0] sm:$0xff] %vm336, %v3787
      %3820 = vst.msk [vmem:[%s278 + $0xb8] sm:$0xff] %vm336, %v3788
      %3821 = vst.msk [vmem:[%s278 + $0xc0] sm:$0xff] %vm336, %v3789
      %3822 = vst.msk [vmem:[%s278 + $0xc8] sm:$0xff] %vm336, %v3790
      %3823 = vst.msk [vmem:[%s278 + $0xd0] sm:$0xff] %vm336, %v3791
      %3824 = vst.msk [vmem:[%s278 + $0xd8] sm:$0xff] %vm336, %v3792
      %3825 = vst.msk [vmem:[%s278 + $0xe0] sm:$0xff] %vm336, %v3793
      %3826 = vst.msk [vmem:[%s278 + $0xe8] sm:$0xff] %vm336, %v3794
      %3827 = vst.msk [vmem:[%s278 + $0xf0] sm:$0xff] %vm336, %v3795
      %3828 = vst.msk [vmem:[%s278 + $0xf8] sm:$0xff] %vm336, %v3796
      %p3829 = scmp.lt.s32.totalorder %s18, 1
      %s3830 = scalar_select %p3829, %s18, 1
      %s3831 = smul.addr %s3830, 32
      %s3832 = smul.addr %s3831, 8
      %s3833 = scalar_lea.vmem %s7, %s3832
      // Predicated region
      $region49: #{bottleneck_forward.1} parent=47 // pred_check
        %p3834 = pneg %p188
      $region50: #{bottleneck_forward.1} parent=47 // pred_check_branch
        %3836 = sbr.rel (%p3834) target = $region52
      $region51: #{bottleneck_forward.1} parent=47 // pred_region
        _
      $region52: #{bottleneck_forward.1} parent=47 // pred_fallthru
        _
    $region48: #{bottleneck_forward.1} parent=5 // pred_fallthru
      _
    %p3837 = scmp.le.s32.totalorder 2, %s13
    // Predicated region
    $region53: #{bottleneck_forward.1} parent=5 // pred_check
      %p3838 = pneg %p3837
    $region54: #{bottleneck_forward.1} parent=5 // pred_check_branch
      %3840 = sbr.rel (%p3838) target = $region56
    $region55: #{bottleneck_forward.1} parent=5 // pred_region
      %s3841 = ssub.s32 %s13, 2
      // Predicated region
      $region57: #{bottleneck_forward.1} parent=55 // pred_check
        %p3842 = pneg %p194
      $region58: #{bottleneck_forward.1} parent=55 // pred_check_branch
        %3844 = sbr.rel (%p3842) target = $region60
      $region59: #{bottleneck_forward.1} parent=55 // pred_region
        %p3845 = scmp.lt.s32.totalorder %s19, 1
        %s3846 = scalar_select %p3845, %s19, 1
        %s3847 = smul.addr %s3846, 32
        %s3848 = smul.addr %s3847, 8
        %s3849 = scalar_lea.vmem %s7, %s3848
      $region60: #{bottleneck_forward.1} parent=55 // pred_fallthru
        _
    $region56: #{bottleneck_forward.1} parent=5 // pred_fallthru
      _
  $region6: #{bottleneck_forward.1} parent=0 // loop_footer
    %s17 = sadd.s32 1, %s13
  $region7: #{bottleneck_forward.1} parent=0 // loop_footer_branch
    %12 = sbr.rel target = $region3
  $region8: #{bottleneck_forward.1} parent=0 // loop_exit
    _

</llo_original>
